<compile_context>
chip_gen: v5e
topology: v5e:2x2
jax: 0.10.0
libtpu: 0.0.40
codegen_flags: <defaults>
</compile_context>

<pallas_src>
import math
import functools

import jax
import jax.numpy as jnp
from jax.experimental import pallas as pl
from jax.experimental.pallas import tpu as pltpu


# ---------------------------------------------------------------------------
# In-kernel helpers (traced inside the Pallas kernel body)
# ---------------------------------------------------------------------------
def _layernorm(v, g, b, eps=1e-5):
    """f32 LayerNorm over the last dim (biased variance -- matches torch)."""
    mu = jnp.mean(v, axis=-1, keepdims=True)
    var = jnp.mean((v - mu) ** 2, axis=-1, keepdims=True)
    return (v - mu) * jax.lax.rsqrt(var + eps) * g + b


def _mha(q2, k2, v2, mask, w_out_t, b_out, *, G, Lq, Lk, n_head):
    """Multi-head attention core for one batch block.

    q2: (G*Lq, d) f32, k2/v2: (G*Lk, d) f32 (bias already added),
    mask: (G, Lq, Lk) f32 additive mask or None,
    w_out_t: (d, d) bf16 pre-transposed out_proj.weight, b_out: (1, d) f32.
    Returns (G*Lq, d) f32 (out-projected, bias added).
    """
    d = q2.shape[-1]
    hd = d // n_head
    scale = 1.0 / math.sqrt(hd)

    q3 = (q2 * scale).astype(jnp.bfloat16).reshape(G, Lq, d)
    k3 = k2.astype(jnp.bfloat16).reshape(G, Lk, d)
    v3 = v2.astype(jnp.bfloat16).reshape(G, Lk, d)

    heads = []
    for h in range(n_head):                       # static unroll; n_head is small
        lo, hi = h * hd, (h + 1) * hd
        # scores (G, Lq, Lk): batched over the block's batch rows
        s = jax.lax.dot_general(q3[:, :, lo:hi], k3[:, :, lo:hi],
                                (((2,), (2,)), ((0,), (0,))),
                                preferred_element_type=jnp.float32)
        if mask is not None:
            s = s + mask
        m = jnp.max(s, axis=-1, keepdims=True)
        e = jnp.exp(s - m)                         # f32 softmax
        p = e * pl.reciprocal(jnp.sum(e, axis=-1, keepdims=True), approx=True)
        oh = jax.lax.dot_general(p.astype(jnp.bfloat16), v3[:, :, lo:hi],
                                 (((2,), (1,)), ((0,), (0,))),
                                 preferred_element_type=jnp.float32)   # (G, Lq, hd)
        heads.append(oh.astype(jnp.bfloat16))

    # single K=d out-projection (fills the MXU contraction dim) instead of n_head K=hd dots
    o = jnp.concatenate(heads, axis=-1).reshape(G * Lq, d)             # (G*Lq, d) bf16
    return jnp.dot(o, w_out_t, preferred_element_type=jnp.float32) + b_out


# ---------------------------------------------------------------------------
# Pallas kernel: full block forward for one batch block of G rows
# ---------------------------------------------------------------------------
def _rcab_kernel(*refs, n_head, has_self_mask, has_cross_mask):
    it = 2
    x_ref, y_ref = refs[0], refs[1]
    ms_ref = mc_ref = None
    if has_self_mask:
        ms_ref = refs[it]
        it += 1
    if has_cross_mask:
        mc_ref = refs[it]
        it += 1
    (g0_ref, be0_ref, wqkv_s_ref, bqkv_s_ref, wo_s_ref, bo_s_ref,
     g1_ref, be1_ref, wq_c_ref, wkv_c_ref, bq_c_ref, bkv_c_ref,
     wo_c_ref, bo_c_ref,
     g2_ref, be2_ref, wfc_ref, bfc_ref, wpr_ref, bpr_ref,
     o_ref) = refs[it:]

    G, Lx, d = x_ref.shape
    Ly = y_ref.shape[1]

    xf = x_ref[...].astype(jnp.float32).reshape(G * Lx, d)   # f32 residual stream
    y_b = y_ref[...].reshape(G * Ly, d)                      # stays bf16 (K/V matmul operand)
    ms = ms_ref[...].astype(jnp.float32) if has_self_mask else None
    mc = mc_ref[...].astype(jnp.float32) if has_cross_mask else None

    # ---- 1) self-attention residual branch: x = x + self_attn(ln_0(x)) ----
    x0 = _layernorm(xf, g0_ref[...], be0_ref[...])
    qkv = jnp.dot(x0.astype(jnp.bfloat16), wqkv_s_ref[...],
                  preferred_element_type=jnp.float32)         # (G*Lx, 3d)
    bqkv = bqkv_s_ref[...]
    q2 = qkv[:, 0 * d:1 * d] + bqkv[:, 0 * d:1 * d]
    k2 = qkv[:, 1 * d:2 * d] + bqkv[:, 1 * d:2 * d]
    v2 = qkv[:, 2 * d:3 * d] + bqkv[:, 2 * d:3 * d]
    xf = xf + _mha(q2, k2, v2, ms, wo_s_ref[...], bo_s_ref[...],
                   G=G, Lq=Lx, Lk=Lx, n_head=n_head)

    # ---- 2) cross-attention residual branch: x = x + attn(ln_1(x), y, y) --
    x1 = _layernorm(xf, g1_ref[...], be1_ref[...])
    qc = jnp.dot(x1.astype(jnp.bfloat16), wq_c_ref[...],
                 preferred_element_type=jnp.float32) + bq_c_ref[...]   # (G*Lx, d)
    kv = jnp.dot(y_b, wkv_c_ref[...],
                 preferred_element_type=jnp.float32)                   # (G*Ly, 2d)
    bkv = bkv_c_ref[...]
    kc = kv[:, 0 * d:1 * d] + bkv[:, 0 * d:1 * d]
    vc = kv[:, 1 * d:2 * d] + bkv[:, 1 * d:2 * d]
    xf = xf + _mha(qc, kc, vc, mc, wo_c_ref[...], bo_c_ref[...],
                   G=G, Lq=Lx, Lk=Ly, n_head=n_head)

    # ---- 3) MLP residual branch (QuickGELU): x = x + c_proj(gelu(c_fc(ln_2(x)))) ----
    x2 = _layernorm(xf, g2_ref[...], be2_ref[...])
    h = jnp.dot(x2.astype(jnp.bfloat16), wfc_ref[...],
                preferred_element_type=jnp.float32) + bfc_ref[...]     # (G*Lx, 4d)
    h = h * jax.nn.sigmoid(1.702 * h)                                  # QuickGELU in f32
    mlp = jnp.dot(h.astype(jnp.bfloat16), wpr_ref[...],
                  preferred_element_type=jnp.float32) + bpr_ref[...]
    xf = xf + mlp
    # TODO(synk): for very large d on v7x, stream wfc_ref / wpr_ref along the 4d axis with an
    # inner pltpu.emit_pipeline instead of keeping both MLP weights fully resident.

    o_ref[...] = xf.reshape(G, Lx, d).astype(o_ref.dtype)


# ---------------------------------------------------------------------------
# One-time parameter packing: pre-transpose / reshape / bf16-cast matmul weights
# ---------------------------------------------------------------------------
def pack_params(params):
    p = params
    d = p['ln0_g'].shape[0]
    bf16, f32 = jnp.bfloat16, jnp.float32
    return {
        'ln0_g': p['ln0_g'].reshape(1, d).astype(f32),
        'ln0_b': p['ln0_b'].reshape(1, d).astype(f32),
        'w_qkv_s': p['self_w_in'].T.astype(bf16),                  # (d, 3d) fused QKV
        'b_qkv_s': p['self_b_in'].reshape(1, 3 * d).astype(f32),
        'w_o_s': p['self_w_out'].T.astype(bf16),                   # (d, d)
        'b_o_s': p['self_b_out'].reshape(1, d).astype(f32),
        'ln1_g': p['ln1_g'].reshape(1, d).astype(f32),
        'ln1_b': p['ln1_b'].reshape(1, d).astype(f32),
        'w_q_c': p['cross_w_in'][:d].T.astype(bf16),               # (d, d)
        'w_kv_c': p['cross_w_in'][d:].T.astype(bf16),              # (d, 2d) fused KV
        'b_q_c': p['cross_b_in'][:d].reshape(1, d).astype(f32),
        'b_kv_c': p['cross_b_in'][d:].reshape(1, 2 * d).astype(f32),
        'w_o_c': p['cross_w_out'].T.astype(bf16),
        'b_o_c': p['cross_b_out'].reshape(1, d).astype(f32),
        'ln2_g': p['ln2_g'].reshape(1, d).astype(f32),
        'ln2_b': p['ln2_b'].reshape(1, d).astype(f32),
        'w_fc': p['fc_w'].T.astype(bf16),                          # (d, 4d)
        'b_fc': p['fc_b'].reshape(1, 4 * d).astype(f32),
        'w_pr': p['proj_w'].T.astype(bf16),                        # (4d, d)
        'b_pr': p['proj_b'].reshape(1, d).astype(f32),
    }


# ---------------------------------------------------------------------------
# Wrapper: layout conversion, batch blocking, pallas_call
# ---------------------------------------------------------------------------
def _default_block_b(B, Lx, Ly, d, n_head):
    # target M = block_b * Lx ~ 256 rows so the big (M, d) x (d, .) matmuls fill the MXU
    bb = max(1, -(-256 // Lx))
    # VMEM-aware cap: f32 score tensors are (bb, n_head, Lx, Lk); keep each under ~8 MiB
    score_bytes = 4 * n_head * Lx * max(Lx, Ly)
    bb = min(bb, max(1, (8 * 1024 * 1024) // score_bytes))
    return min(bb, B)


def _vmem_limit_bytes():
    # Generation-aware scoped-VMEM limit: ~0.8 x physical capacity (128 MiB on v5e/v6e,
    # 64 MiB per TC on v7x) so Mosaic keeps headroom for internal scratch / output buffers.
    try:
        cap = int(pltpu.get_tpu_info().vmem_capacity_bytes)
    except Exception:
        cap = 64 * 1024 * 1024
    return int(0.8 * cap)


def residual_cross_attention_block(x, y, packed, n_head,
                                   attn_mask_self=None, attn_mask_cross=None,
                                   block_b=None):
    """x: (Lx, B, d), y: (Ly, B, d) -- same seq-major convention as the PyTorch module."""
    Lx, B, d = x.shape
    Ly = y.shape[0]
    out_dtype = x.dtype

    # seq-major -> batch-major, fused with the bf16 downcast (halves the write traffic).
    xb = jnp.transpose(x, (1, 0, 2)).astype(jnp.bfloat16)    # (B, Lx, d)
    yb = jnp.transpose(y, (1, 0, 2)).astype(jnp.bfloat16)    # (B, Ly, d)

    has_self = attn_mask_self is not None
    has_cross = attn_mask_cross is not None
    ms = attn_mask_self.astype(jnp.bfloat16) if has_self else None
    mc = attn_mask_cross.astype(jnp.bfloat16) if has_cross else None
    # TODO(synk): accept broadcast (1, Lq, Lk) masks with a constant-index BlockSpec to avoid
    # re-DMAing a shared mask every grid step.

    if block_b is None:
        block_b = _default_block_b(B, Lx, Ly, d, n_head)
    n_blocks = pl.cdiv(B, block_b)
    Bp = n_blocks * block_b
    if Bp != B:                                   # pad batch to a block multiple
        pad = Bp - B
        xb = jnp.pad(xb, ((0, pad), (0, 0), (0, 0)))
        yb = jnp.pad(yb, ((0, pad), (0, 0), (0, 0)))
        if has_self:
            ms = jnp.pad(ms, ((0, pad), (0, 0), (0, 0)))
        if has_cross:
            mc = jnp.pad(mc, ((0, pad), (0, 0), (0, 0)))

    data_args = [xb, yb]
    data_specs = [pl.BlockSpec((block_b, Lx, d), lambda b: (b, 0, 0)),
                  pl.BlockSpec((block_b, Ly, d), lambda b: (b, 0, 0))]
    if has_self:
        data_args.append(ms)
        data_specs.append(pl.BlockSpec((block_b, Lx, Lx), lambda b: (b, 0, 0)))
    if has_cross:
        data_args.append(mc)
        data_specs.append(pl.BlockSpec((block_b, Lx, Ly), lambda b: (b, 0, 0)))

    p = packed
    weight_args = [
        p['ln0_g'], p['ln0_b'], p['w_qkv_s'], p['b_qkv_s'], p['w_o_s'], p['b_o_s'],
        p['ln1_g'], p['ln1_b'], p['w_q_c'], p['w_kv_c'], p['b_q_c'], p['b_kv_c'],
        p['w_o_c'], p['b_o_c'],
        p['ln2_g'], p['ln2_b'], p['w_fc'], p['b_fc'], p['w_pr'], p['b_pr'],
    ]

    vmem_limit = _vmem_limit_bytes()
    kernel = functools.partial(_rcab_kernel, n_head=n_head,
                               has_self_mask=has_self, has_cross_mask=has_cross)

    def call(single_buffer_weights):
        if single_buffer_weights:
            # constant block index -> single-buffer the resident weights (halves weight VMEM)
            wspec = lambda a: pl.BlockSpec(a.shape, lambda b: (0, 0),
                                           pipeline_mode=pl.Buffered(1))
        else:
            wspec = lambda a: pl.BlockSpec(a.shape, lambda b: (0, 0))
        weight_specs = [wspec(a) for a in weight_args]
        return pl.pallas_call(
            kernel,
            out_shape=jax.ShapeDtypeStruct((Bp, Lx, d), out_dtype),
            grid=(n_blocks,),
            in_specs=data_specs + weight_specs,
            out_specs=pl.BlockSpec((block_b, Lx, d), lambda b: (b, 0, 0)),
            compiler_params=pltpu.CompilerParams(
                dimension_semantics=("parallel",),
                vmem_limit_bytes=vmem_limit),
        )(*data_args, *weight_args)

    try:
        out = call(True)
    except Exception:
        # this jax build rejected pipeline_mode=pl.Buffered(1); fall back to default buffering
        out = call(False)

    out = out[:B]
    return jnp.transpose(out, (1, 0, 2))


# ---------------------------------------------------------------------------
# Deterministic parameter init (shapes from the module's __init__)
# ---------------------------------------------------------------------------
def init_params(key, d):
    ks = jax.random.split(key, 18)
    s = 0.02
    n = jax.random.normal
    return {
        'ln0_g': 1.0 + 0.1 * n(ks[0], (d,), jnp.float32),
        'ln0_b': 0.1 * n(ks[1], (d,), jnp.float32),
        'self_w_in': s * n(ks[2], (3 * d, d), jnp.float32),
        'self_b_in': s * n(ks[3], (3 * d,), jnp.float32),
        'self_w_out': s * n(ks[4], (d, d), jnp.float32),
        'self_b_out': s * n(ks[5], (d,), jnp.float32),
        'ln1_g': 1.0 + 0.1 * n(ks[6], (d,), jnp.float32),
        'ln1_b': 0.1 * n(ks[7], (d,), jnp.float32),
        'cross_w_in': s * n(ks[8], (3 * d, d), jnp.float32),
        'cross_b_in': s * n(ks[9], (3 * d,), jnp.float32),
        'cross_w_out': s * n(ks[10], (d, d), jnp.float32),
        'cross_b_out': s * n(ks[11], (d,), jnp.float32),
        'ln2_g': 1.0 + 0.1 * n(ks[12], (d,), jnp.float32),
        'ln2_b': 0.1 * n(ks[13], (d,), jnp.float32),
        'fc_w': s * n(ks[14], (4 * d, d), jnp.float32),
        'fc_b': s * n(ks[15], (4 * d,), jnp.float32),
        'proj_w': s * n(ks[16], (d, 4 * d), jnp.float32),
        'proj_b': s * n(ks[17], (d,), jnp.float32),
    }


# ---------------------------------------------------------------------------
# Pure-JAX f32 reference (mirrors the PyTorch forward exactly) for validation
# ---------------------------------------------------------------------------
def reference(x, y, params, n_head, mask_self, mask_cross):
    Lx, B, d = x.shape
    hd = d // n_head
    xb = jnp.transpose(x, (1, 0, 2)).astype(jnp.float32)
    yb = jnp.transpose(y, (1, 0, 2)).astype(jnp.float32)

    def ln(v, g, b):
        mu = v.mean(-1, keepdims=True)
        var = ((v - mu) ** 2).mean(-1, keepdims=True)
        return (v - mu) / jnp.sqrt(var + 1e-5) * g + b

    def mha(qin, kvin, w_in, b_in, w_out, b_out, mask):
        q = qin @ w_in[:d].T + b_in[:d]
        k = kvin @ w_in[d:2 * d].T + b_in[d:2 * d]
        v = kvin @ w_in[2 * d:].T + b_in[2 * d:]

        def split(t):
            return t.reshape(t.shape[0], t.shape[1], n_head, hd).transpose(0, 2, 1, 3)

        qh, kh, vh = split(q), split(k), split(v)
        s = jnp.einsum('bhqe,bhke->bhqk', qh, kh) / math.sqrt(hd)
        s = s + mask[:, None, :, :]
        pr = jax.nn.softmax(s, axis=-1)
        o = jnp.einsum('bhqk,bhke->bhqe', pr, vh)
        o = o.transpose(0, 2, 1, 3).reshape(o.shape[0], -1, d)
        return o @ w_out.T + b_out

    p = params
    x0 = ln(xb, p['ln0_g'], p['ln0_b'])
    xb = xb + mha(x0, x0, p['self_w_in'], p['self_b_in'],
                  p['self_w_out'], p['self_b_out'], mask_self)
    x1 = ln(xb, p['ln1_g'], p['ln1_b'])
    xb = xb + mha(x1, yb, p['cross_w_in'], p['cross_b_in'],
                  p['cross_w_out'], p['cross_b_out'], mask_cross)
    x2 = ln(xb, p['ln2_g'], p['ln2_b'])
    h = x2 @ p['fc_w'].T + p['fc_b']
    h = h * jax.nn.sigmoid(1.702 * h)
    xb = xb + h @ p['proj_w'].T + p['proj_b']
    return jnp.transpose(xb, (1, 0, 2))


if __name__ == "__main__":
    d_model, n_head = 32, 4
    Lx, Ly, B = 8, 16, 2

    key = jax.random.PRNGKey(0)
    k_x, k_y, k_ms, k_mc, k_p = jax.random.split(key, 5)

    x = jax.random.normal(k_x, (Lx, B, d_model), jnp.float32)
    y = jax.random.normal(k_y, (Ly, B, d_model), jnp.float32)
    attn_mask_self = 0.5 * jax.random.normal(k_ms, (B, Lx, Lx), jnp.float32)
    attn_mask_cross = 0.5 * jax.random.normal(k_mc, (B, Lx, Ly), jnp.float32)
    params = init_params(k_p, d_model)
    packed = pack_params(params)        # packed once, reused across calls

    # masked path
    out = residual_cross_attention_block(
        x, y, packed, n_head, attn_mask_self, attn_mask_cross)
    out = jax.block_until_ready(out)
    ref = reference(x, y, params, n_head, attn_mask_self, attn_mask_cross)
    assert out.shape == (Lx, B, d_model)
    err = float(jnp.max(jnp.abs(out - ref)))
    # bf16 activations/masks/MXU-operands (f32 accumulation & f32 LN/softmax/GELU math):
    # tolerance loosened vs pure-f32
    assert err < 5e-2, f"masked path max abs err {err}"

    # mask-free specialized path (no mask DMA, no mask add)
    out_nm = residual_cross_attention_block(x, y, packed, n_head)
    out_nm = jax.block_until_ready(out_nm)
    ref_nm = reference(x, y, params, n_head,
                       jnp.zeros((B, Lx, Lx), jnp.float32),
                       jnp.zeros((B, Lx, Ly), jnp.float32))
    err_nm = float(jnp.max(jnp.abs(out_nm - ref_nm)))
    assert err_nm < 5e-2, f"no-mask path max abs err {err_nm}"

    print("KERNEL_OK")
</pallas_src>

<mosaic_0001>
module attributes {stable_mosaic.version = 11 : i64} {
  func.func @_rcab_kernel(%arg0: i32, %arg1: memref<2x8x32xbf16, #tpu.memory_space<vmem>>, %arg2: memref<2x16x32xbf16, #tpu.memory_space<vmem>>, %arg3: memref<2x8x8xbf16, #tpu.memory_space<vmem>>, %arg4: memref<2x8x16xbf16, #tpu.memory_space<vmem>>, %arg5: memref<1x32xf32, #tpu.memory_space<vmem>>, %arg6: memref<1x32xf32, #tpu.memory_space<vmem>>, %arg7: memref<32x96xbf16, #tpu.memory_space<vmem>>, %arg8: memref<1x96xf32, #tpu.memory_space<vmem>>, %arg9: memref<32x32xbf16, #tpu.memory_space<vmem>>, %arg10: memref<1x32xf32, #tpu.memory_space<vmem>>, %arg11: memref<1x32xf32, #tpu.memory_space<vmem>>, %arg12: memref<1x32xf32, #tpu.memory_space<vmem>>, %arg13: memref<32x32xbf16, #tpu.memory_space<vmem>>, %arg14: memref<32x64xbf16, #tpu.memory_space<vmem>>, %arg15: memref<1x32xf32, #tpu.memory_space<vmem>>, %arg16: memref<1x64xf32, #tpu.memory_space<vmem>>, %arg17: memref<32x32xbf16, #tpu.memory_space<vmem>>, %arg18: memref<1x32xf32, #tpu.memory_space<vmem>>, %arg19: memref<1x32xf32, #tpu.memory_space<vmem>>, %arg20: memref<1x32xf32, #tpu.memory_space<vmem>>, %arg21: memref<32x128xbf16, #tpu.memory_space<vmem>>, %arg22: memref<1x128xf32, #tpu.memory_space<vmem>>, %arg23: memref<128x32xbf16, #tpu.memory_space<vmem>>, %arg24: memref<1x32xf32, #tpu.memory_space<vmem>>, %arg25: memref<2x8x32xf32, #tpu.memory_space<vmem>>) attributes {dimension_semantics = [#tpu.dimension_semantics<parallel>], iteration_bounds = array<i64: 1>, scalar_prefetch = 0 : i64, scratch_operands = 0 : i64, tpu.core_type = #tpu.core_type<tc>, window_params = [{transform_indices = @transform_0, window_bounds = array<i64: 2, 8, 32>}, {transform_indices = @transform_1, window_bounds = array<i64: 2, 16, 32>}, {transform_indices = @transform_2, window_bounds = array<i64: 2, 8, 8>}, {transform_indices = @transform_3, window_bounds = array<i64: 2, 8, 16>}, {pipeline_mode = #tpu.pipeline_mode<synchronous>, transform_indices = @transform_4, window_bounds = array<i64: 1, 32>}, {pipeline_mode = #tpu.pipeline_mode<synchronous>, transform_indices = @transform_5, window_bounds = array<i64: 1, 32>}, {pipeline_mode = #tpu.pipeline_mode<synchronous>, transform_indices = @transform_6, window_bounds = array<i64: 32, 96>}, {pipeline_mode = #tpu.pipeline_mode<synchronous>, transform_indices = @transform_7, window_bounds = array<i64: 1, 96>}, {pipeline_mode = #tpu.pipeline_mode<synchronous>, transform_indices = @transform_8, window_bounds = array<i64: 32, 32>}, {pipeline_mode = #tpu.pipeline_mode<synchronous>, transform_indices = @transform_9, window_bounds = array<i64: 1, 32>}, {pipeline_mode = #tpu.pipeline_mode<synchronous>, transform_indices = @transform_10, window_bounds = array<i64: 1, 32>}, {pipeline_mode = #tpu.pipeline_mode<synchronous>, transform_indices = @transform_11, window_bounds = array<i64: 1, 32>}, {pipeline_mode = #tpu.pipeline_mode<synchronous>, transform_indices = @transform_12, window_bounds = array<i64: 32, 32>}, {pipeline_mode = #tpu.pipeline_mode<synchronous>, transform_indices = @transform_13, window_bounds = array<i64: 32, 64>}, {pipeline_mode = #tpu.pipeline_mode<synchronous>, transform_indices = @transform_14, window_bounds = array<i64: 1, 32>}, {pipeline_mode = #tpu.pipeline_mode<synchronous>, transform_indices = @transform_15, window_bounds = array<i64: 1, 64>}, {pipeline_mode = #tpu.pipeline_mode<synchronous>, transform_indices = @transform_16, window_bounds = array<i64: 32, 32>}, {pipeline_mode = #tpu.pipeline_mode<synchronous>, transform_indices = @transform_17, window_bounds = array<i64: 1, 32>}, {pipeline_mode = #tpu.pipeline_mode<synchronous>, transform_indices = @transform_18, window_bounds = array<i64: 1, 32>}, {pipeline_mode = #tpu.pipeline_mode<synchronous>, transform_indices = @transform_19, window_bounds = array<i64: 1, 32>}, {pipeline_mode = #tpu.pipeline_mode<synchronous>, transform_indices = @transform_20, window_bounds = array<i64: 32, 128>}, {pipeline_mode = #tpu.pipeline_mode<synchronous>, transform_indices = @transform_21, window_bounds = array<i64: 1, 128>}, {pipeline_mode = #tpu.pipeline_mode<synchronous>, transform_indices = @transform_22, window_bounds = array<i64: 128, 32>}, {pipeline_mode = #tpu.pipeline_mode<synchronous>, transform_indices = @transform_23, window_bounds = array<i64: 1, 32>}, {transform_indices = @transform_24, window_bounds = array<i64: 2, 8, 32>}]} {
    %c0 = arith.constant 0 : index
    %c0_0 = arith.constant 0 : index
    %c0_1 = arith.constant 0 : index
    %0 = vector.load %arg1[%c0, %c0_0, %c0_1] : memref<2x8x32xbf16, #tpu.memory_space<vmem>>, vector<2x8x32xbf16>
    %1 = arith.extf %0 : vector<2x8x32xbf16> to vector<2x8x32xf32>
    %2 = vector.shape_cast %1 : vector<2x8x32xf32> to vector<16x32xf32>
    %c0_2 = arith.constant 0 : index
    %c0_3 = arith.constant 0 : index
    %c0_4 = arith.constant 0 : index
    %3 = vector.load %arg2[%c0_2, %c0_3, %c0_4] : memref<2x16x32xbf16, #tpu.memory_space<vmem>>, vector<2x16x32xbf16>
    %4 = vector.shape_cast %3 : vector<2x16x32xbf16> to vector<32x32xbf16>
    %c0_5 = arith.constant 0 : index
    %c0_6 = arith.constant 0 : index
    %c0_7 = arith.constant 0 : index
    %5 = vector.load %arg3[%c0_5, %c0_6, %c0_7] : memref<2x8x8xbf16, #tpu.memory_space<vmem>>, vector<2x8x8xbf16>
    %6 = arith.extf %5 : vector<2x8x8xbf16> to vector<2x8x8xf32>
    %c0_8 = arith.constant 0 : index
    %c0_9 = arith.constant 0 : index
    %c0_10 = arith.constant 0 : index
    %7 = vector.load %arg4[%c0_8, %c0_9, %c0_10] : memref<2x8x16xbf16, #tpu.memory_space<vmem>>, vector<2x8x16xbf16>
    %8 = arith.extf %7 : vector<2x8x16xbf16> to vector<2x8x16xf32>
    %c0_11 = arith.constant 0 : index
    %c0_12 = arith.constant 0 : index
    %9 = vector.load %arg5[%c0_11, %c0_12] : memref<1x32xf32, #tpu.memory_space<vmem>>, vector<1x32xf32>
    %c0_13 = arith.constant 0 : index
    %c0_14 = arith.constant 0 : index
    %10 = vector.load %arg6[%c0_13, %c0_14] : memref<1x32xf32, #tpu.memory_space<vmem>>, vector<1x32xf32>
    %cst = arith.constant dense<0.000000e+00> : vector<16xf32>
    %11 = vector.multi_reduction <add>, %2, %cst [1] : vector<16x32xf32> to vector<16xf32>
    %12 = vector.shape_cast %11 : vector<16xf32> to vector<16x1xf32>
    %cst_15 = arith.constant 3.200000e+01 : f32
    %13 = vector.broadcast %cst_15 : f32 to vector<16x1xf32>
    %14 = arith.divf %12, %13 : vector<16x1xf32>
    %15 = vector.broadcast %14 : vector<16x1xf32> to vector<16x32xf32>
    %16 = arith.subf %2, %15 : vector<16x32xf32>
    %17 = arith.mulf %16, %16 : vector<16x32xf32>
    %cst_16 = arith.constant dense<0.000000e+00> : vector<16xf32>
    %18 = vector.multi_reduction <add>, %17, %cst_16 [1] : vector<16x32xf32> to vector<16xf32>
    %19 = vector.shape_cast %18 : vector<16xf32> to vector<16x1xf32>
    %cst_17 = arith.constant 3.200000e+01 : f32
    %20 = vector.broadcast %cst_17 : f32 to vector<16x1xf32>
    %21 = arith.divf %19, %20 : vector<16x1xf32>
    %22 = vector.broadcast %14 : vector<16x1xf32> to vector<16x32xf32>
    %23 = arith.subf %2, %22 : vector<16x32xf32>
    %cst_18 = arith.constant 9.99999974E-6 : f32
    %24 = vector.broadcast %cst_18 : f32 to vector<16x1xf32>
    %25 = arith.addf %21, %24 : vector<16x1xf32>
    %26 = math.rsqrt %25 : vector<16x1xf32>
    %27 = vector.broadcast %26 : vector<16x1xf32> to vector<16x32xf32>
    %28 = arith.mulf %23, %27 : vector<16x32xf32>
    %29 = vector.broadcast %9 : vector<1x32xf32> to vector<16x32xf32>
    %30 = arith.mulf %28, %29 : vector<16x32xf32>
    %31 = vector.broadcast %10 : vector<1x32xf32> to vector<16x32xf32>
    %32 = arith.addf %30, %31 : vector<16x32xf32>
    %33 = arith.truncf %32 : vector<16x32xf32> to vector<16x32xbf16>
    %c0_19 = arith.constant 0 : index
    %c0_20 = arith.constant 0 : index
    %34 = vector.load %arg7[%c0_19, %c0_20] : memref<32x96xbf16, #tpu.memory_space<vmem>>, vector<32x96xbf16>
    %cst_21 = arith.constant dense<0.000000e+00> : vector<16x96xf32>
    %35 = tpu.matmul %33, %34, %cst_21 {dimension_numbers = #tpu.dot_dimension_numbers<[1], [0], [0], [1], [0, 0, 1, 1], [], []>} : vector<16x32xbf16>, vector<32x96xbf16>, vector<16x96xf32> -> vector<16x96xf32>
    %c0_22 = arith.constant 0 : index
    %c0_23 = arith.constant 0 : index
    %36 = vector.load %arg8[%c0_22, %c0_23] : memref<1x96xf32, #tpu.memory_space<vmem>>, vector<1x96xf32>
    %37 = vector.extract_strided_slice %35 {offsets = [0, 0], sizes = [16, 32], strides = [1, 1]} : vector<16x96xf32> to vector<16x32xf32>
    %38 = vector.extract_strided_slice %36 {offsets = [0, 0], sizes = [1, 32], strides = [1, 1]} : vector<1x96xf32> to vector<1x32xf32>
    %39 = vector.broadcast %38 : vector<1x32xf32> to vector<16x32xf32>
    %40 = arith.addf %37, %39 : vector<16x32xf32>
    %41 = vector.extract_strided_slice %35 {offsets = [0, 32], sizes = [16, 32], strides = [1, 1]} : vector<16x96xf32> to vector<16x32xf32>
    %42 = vector.extract_strided_slice %36 {offsets = [0, 32], sizes = [1, 32], strides = [1, 1]} : vector<1x96xf32> to vector<1x32xf32>
    %43 = vector.broadcast %42 : vector<1x32xf32> to vector<16x32xf32>
    %44 = arith.addf %41, %43 : vector<16x32xf32>
    %45 = vector.extract_strided_slice %35 {offsets = [0, 64], sizes = [16, 32], strides = [1, 1]} : vector<16x96xf32> to vector<16x32xf32>
    %46 = vector.extract_strided_slice %36 {offsets = [0, 64], sizes = [1, 32], strides = [1, 1]} : vector<1x96xf32> to vector<1x32xf32>
    %47 = vector.broadcast %46 : vector<1x32xf32> to vector<16x32xf32>
    %48 = arith.addf %45, %47 : vector<16x32xf32>
    %c0_24 = arith.constant 0 : index
    %c0_25 = arith.constant 0 : index
    %49 = vector.load %arg9[%c0_24, %c0_25] : memref<32x32xbf16, #tpu.memory_space<vmem>>, vector<32x32xbf16>
    %c0_26 = arith.constant 0 : index
    %c0_27 = arith.constant 0 : index
    %50 = vector.load %arg10[%c0_26, %c0_27] : memref<1x32xf32, #tpu.memory_space<vmem>>, vector<1x32xf32>
    %cst_28 = arith.constant 0.353553385 : f32
    %51 = vector.broadcast %cst_28 : f32 to vector<16x32xf32>
    %52 = arith.mulf %40, %51 : vector<16x32xf32>
    %53 = arith.truncf %52 : vector<16x32xf32> to vector<16x32xbf16>
    %54 = vector.shape_cast %53 : vector<16x32xbf16> to vector<2x8x32xbf16>
    %55 = arith.truncf %44 : vector<16x32xf32> to vector<16x32xbf16>
    %56 = vector.shape_cast %55 : vector<16x32xbf16> to vector<2x8x32xbf16>
    %57 = arith.truncf %48 : vector<16x32xf32> to vector<16x32xbf16>
    %58 = vector.shape_cast %57 : vector<16x32xbf16> to vector<2x8x32xbf16>
    %59 = vector.extract_strided_slice %54 {offsets = [0, 0, 0], sizes = [2, 8, 8], strides = [1, 1, 1]} : vector<2x8x32xbf16> to vector<2x8x8xbf16>
    %60 = vector.extract_strided_slice %56 {offsets = [0, 0, 0], sizes = [2, 8, 8], strides = [1, 1, 1]} : vector<2x8x32xbf16> to vector<2x8x8xbf16>
    %cst_29 = arith.constant dense<0.000000e+00> : vector<2x8x8xf32>
    %61 = tpu.matmul %59, %60, %cst_29 {dimension_numbers = #tpu.dot_dimension_numbers<[2], [2], [1], [1], [0, 0, 0, 1, 1, 1], [0], [0]>} : vector<2x8x8xbf16>, vector<2x8x8xbf16>, vector<2x8x8xf32> -> vector<2x8x8xf32>
    %62 = arith.addf %61, %6 : vector<2x8x8xf32>
    %cst_30 = arith.constant dense<0xFF800000> : vector<2x8xf32>
    %63 = vector.multi_reduction <maximumf>, %62, %cst_30 [2] : vector<2x8x8xf32> to vector<2x8xf32>
    %64 = vector.shape_cast %63 : vector<2x8xf32> to vector<2x8x1xf32>
    %65 = vector.broadcast %64 : vector<2x8x1xf32> to vector<2x8x8xf32>
    %66 = arith.subf %62, %65 : vector<2x8x8xf32>
    %67 = math.exp %66 : vector<2x8x8xf32>
    %cst_31 = arith.constant dense<0.000000e+00> : vector<2x8xf32>
    %68 = vector.multi_reduction <add>, %67, %cst_31 [2] : vector<2x8x8xf32> to vector<2x8xf32>
    %69 = vector.shape_cast %68 : vector<2x8xf32> to vector<2x8x1xf32>
    %70 = tpu.reciprocal %69 {approx = true} : vector<2x8x1xf32> -> vector<2x8x1xf32>
    %71 = vector.broadcast %70 : vector<2x8x1xf32> to vector<2x8x8xf32>
    %72 = arith.mulf %67, %71 : vector<2x8x8xf32>
    %73 = arith.truncf %72 : vector<2x8x8xf32> to vector<2x8x8xbf16>
    %74 = vector.extract_strided_slice %58 {offsets = [0, 0, 0], sizes = [2, 8, 8], strides = [1, 1, 1]} : vector<2x8x32xbf16> to vector<2x8x8xbf16>
    %cst_32 = arith.constant dense<0.000000e+00> : vector<2x8x8xf32>
    %75 = tpu.matmul %73, %74, %cst_32 {dimension_numbers = #tpu.dot_dimension_numbers<[2], [1], [1], [2], [0, 0, 0, 1, 1, 2], [0], [0]>} : vector<2x8x8xbf16>, vector<2x8x8xbf16>, vector<2x8x8xf32> -> vector<2x8x8xf32>
    %76 = arith.truncf %75 : vector<2x8x8xf32> to vector<2x8x8xbf16>
    %77 = vector.extract_strided_slice %54 {offsets = [0, 0, 8], sizes = [2, 8, 8], strides = [1, 1, 1]} : vector<2x8x32xbf16> to vector<2x8x8xbf16>
    %78 = vector.extract_strided_slice %56 {offsets = [0, 0, 8], sizes = [2, 8, 8], strides = [1, 1, 1]} : vector<2x8x32xbf16> to vector<2x8x8xbf16>
    %cst_33 = arith.constant dense<0.000000e+00> : vector<2x8x8xf32>
    %79 = tpu.matmul %77, %78, %cst_33 {dimension_numbers = #tpu.dot_dimension_numbers<[2], [2], [1], [1], [0, 0, 0, 1, 1, 1], [0], [0]>} : vector<2x8x8xbf16>, vector<2x8x8xbf16>, vector<2x8x8xf32> -> vector<2x8x8xf32>
    %80 = arith.addf %79, %6 : vector<2x8x8xf32>
    %cst_34 = arith.constant dense<0xFF800000> : vector<2x8xf32>
    %81 = vector.multi_reduction <maximumf>, %80, %cst_34 [2] : vector<2x8x8xf32> to vector<2x8xf32>
    %82 = vector.shape_cast %81 : vector<2x8xf32> to vector<2x8x1xf32>
    %83 = vector.broadcast %82 : vector<2x8x1xf32> to vector<2x8x8xf32>
    %84 = arith.subf %80, %83 : vector<2x8x8xf32>
    %85 = math.exp %84 : vector<2x8x8xf32>
    %cst_35 = arith.constant dense<0.000000e+00> : vector<2x8xf32>
    %86 = vector.multi_reduction <add>, %85, %cst_35 [2] : vector<2x8x8xf32> to vector<2x8xf32>
    %87 = vector.shape_cast %86 : vector<2x8xf32> to vector<2x8x1xf32>
    %88 = tpu.reciprocal %87 {approx = true} : vector<2x8x1xf32> -> vector<2x8x1xf32>
    %89 = vector.broadcast %88 : vector<2x8x1xf32> to vector<2x8x8xf32>
    %90 = arith.mulf %85, %89 : vector<2x8x8xf32>
    %91 = arith.truncf %90 : vector<2x8x8xf32> to vector<2x8x8xbf16>
    %92 = vector.extract_strided_slice %58 {offsets = [0, 0, 8], sizes = [2, 8, 8], strides = [1, 1, 1]} : vector<2x8x32xbf16> to vector<2x8x8xbf16>
    %cst_36 = arith.constant dense<0.000000e+00> : vector<2x8x8xf32>
    %93 = tpu.matmul %91, %92, %cst_36 {dimension_numbers = #tpu.dot_dimension_numbers<[2], [1], [1], [2], [0, 0, 0, 1, 1, 2], [0], [0]>} : vector<2x8x8xbf16>, vector<2x8x8xbf16>, vector<2x8x8xf32> -> vector<2x8x8xf32>
    %94 = arith.truncf %93 : vector<2x8x8xf32> to vector<2x8x8xbf16>
    %95 = vector.extract_strided_slice %54 {offsets = [0, 0, 16], sizes = [2, 8, 8], strides = [1, 1, 1]} : vector<2x8x32xbf16> to vector<2x8x8xbf16>
    %96 = vector.extract_strided_slice %56 {offsets = [0, 0, 16], sizes = [2, 8, 8], strides = [1, 1, 1]} : vector<2x8x32xbf16> to vector<2x8x8xbf16>
    %cst_37 = arith.constant dense<0.000000e+00> : vector<2x8x8xf32>
    %97 = tpu.matmul %95, %96, %cst_37 {dimension_numbers = #tpu.dot_dimension_numbers<[2], [2], [1], [1], [0, 0, 0, 1, 1, 1], [0], [0]>} : vector<2x8x8xbf16>, vector<2x8x8xbf16>, vector<2x8x8xf32> -> vector<2x8x8xf32>
    %98 = arith.addf %97, %6 : vector<2x8x8xf32>
    %cst_38 = arith.constant dense<0xFF800000> : vector<2x8xf32>
    %99 = vector.multi_reduction <maximumf>, %98, %cst_38 [2] : vector<2x8x8xf32> to vector<2x8xf32>
    %100 = vector.shape_cast %99 : vector<2x8xf32> to vector<2x8x1xf32>
    %101 = vector.broadcast %100 : vector<2x8x1xf32> to vector<2x8x8xf32>
    %102 = arith.subf %98, %101 : vector<2x8x8xf32>
    %103 = math.exp %102 : vector<2x8x8xf32>
    %cst_39 = arith.constant dense<0.000000e+00> : vector<2x8xf32>
    %104 = vector.multi_reduction <add>, %103, %cst_39 [2] : vector<2x8x8xf32> to vector<2x8xf32>
    %105 = vector.shape_cast %104 : vector<2x8xf32> to vector<2x8x1xf32>
    %106 = tpu.reciprocal %105 {approx = true} : vector<2x8x1xf32> -> vector<2x8x1xf32>
    %107 = vector.broadcast %106 : vector<2x8x1xf32> to vector<2x8x8xf32>
    %108 = arith.mulf %103, %107 : vector<2x8x8xf32>
    %109 = arith.truncf %108 : vector<2x8x8xf32> to vector<2x8x8xbf16>
    %110 = vector.extract_strided_slice %58 {offsets = [0, 0, 16], sizes = [2, 8, 8], strides = [1, 1, 1]} : vector<2x8x32xbf16> to vector<2x8x8xbf16>
    %cst_40 = arith.constant dense<0.000000e+00> : vector<2x8x8xf32>
    %111 = tpu.matmul %109, %110, %cst_40 {dimension_numbers = #tpu.dot_dimension_numbers<[2], [1], [1], [2], [0, 0, 0, 1, 1, 2], [0], [0]>} : vector<2x8x8xbf16>, vector<2x8x8xbf16>, vector<2x8x8xf32> -> vector<2x8x8xf32>
    %112 = arith.truncf %111 : vector<2x8x8xf32> to vector<2x8x8xbf16>
    %113 = vector.extract_strided_slice %54 {offsets = [0, 0, 24], sizes = [2, 8, 8], strides = [1, 1, 1]} : vector<2x8x32xbf16> to vector<2x8x8xbf16>
    %114 = vector.extract_strided_slice %56 {offsets = [0, 0, 24], sizes = [2, 8, 8], strides = [1, 1, 1]} : vector<2x8x32xbf16> to vector<2x8x8xbf16>
    %cst_41 = arith.constant dense<0.000000e+00> : vector<2x8x8xf32>
    %115 = tpu.matmul %113, %114, %cst_41 {dimension_numbers = #tpu.dot_dimension_numbers<[2], [2], [1], [1], [0, 0, 0, 1, 1, 1], [0], [0]>} : vector<2x8x8xbf16>, vector<2x8x8xbf16>, vector<2x8x8xf32> -> vector<2x8x8xf32>
    %116 = arith.addf %115, %6 : vector<2x8x8xf32>
    %cst_42 = arith.constant dense<0xFF800000> : vector<2x8xf32>
    %117 = vector.multi_reduction <maximumf>, %116, %cst_42 [2] : vector<2x8x8xf32> to vector<2x8xf32>
    %118 = vector.shape_cast %117 : vector<2x8xf32> to vector<2x8x1xf32>
    %119 = vector.broadcast %118 : vector<2x8x1xf32> to vector<2x8x8xf32>
    %120 = arith.subf %116, %119 : vector<2x8x8xf32>
    %121 = math.exp %120 : vector<2x8x8xf32>
    %cst_43 = arith.constant dense<0.000000e+00> : vector<2x8xf32>
    %122 = vector.multi_reduction <add>, %121, %cst_43 [2] : vector<2x8x8xf32> to vector<2x8xf32>
    %123 = vector.shape_cast %122 : vector<2x8xf32> to vector<2x8x1xf32>
    %124 = tpu.reciprocal %123 {approx = true} : vector<2x8x1xf32> -> vector<2x8x1xf32>
    %125 = vector.broadcast %124 : vector<2x8x1xf32> to vector<2x8x8xf32>
    %126 = arith.mulf %121, %125 : vector<2x8x8xf32>
    %127 = arith.truncf %126 : vector<2x8x8xf32> to vector<2x8x8xbf16>
    %128 = vector.extract_strided_slice %58 {offsets = [0, 0, 24], sizes = [2, 8, 8], strides = [1, 1, 1]} : vector<2x8x32xbf16> to vector<2x8x8xbf16>
    %cst_44 = arith.constant dense<0.000000e+00> : vector<2x8x8xf32>
    %129 = tpu.matmul %127, %128, %cst_44 {dimension_numbers = #tpu.dot_dimension_numbers<[2], [1], [1], [2], [0, 0, 0, 1, 1, 2], [0], [0]>} : vector<2x8x8xbf16>, vector<2x8x8xbf16>, vector<2x8x8xf32> -> vector<2x8x8xf32>
    %130 = arith.truncf %129 : vector<2x8x8xf32> to vector<2x8x8xbf16>
    %131 = tpu.concatenate %76, %94, %112, %130 in 2 : vector<2x8x8xbf16>, vector<2x8x8xbf16>, vector<2x8x8xbf16>, vector<2x8x8xbf16> -> vector<2x8x32xbf16>
    %132 = vector.shape_cast %131 : vector<2x8x32xbf16> to vector<16x32xbf16>
    %cst_45 = arith.constant dense<0.000000e+00> : vector<16x32xf32>
    %133 = tpu.matmul %132, %49, %cst_45 {dimension_numbers = #tpu.dot_dimension_numbers<[1], [0], [0], [1], [0, 0, 1, 1], [], []>} : vector<16x32xbf16>, vector<32x32xbf16>, vector<16x32xf32> -> vector<16x32xf32>
    %134 = vector.broadcast %50 : vector<1x32xf32> to vector<16x32xf32>
    %135 = arith.addf %133, %134 : vector<16x32xf32>
    %136 = arith.addf %2, %135 : vector<16x32xf32>
    %c0_46 = arith.constant 0 : index
    %c0_47 = arith.constant 0 : index
    %137 = vector.load %arg11[%c0_46, %c0_47] : memref<1x32xf32, #tpu.memory_space<vmem>>, vector<1x32xf32>
    %c0_48 = arith.constant 0 : index
    %c0_49 = arith.constant 0 : index
    %138 = vector.load %arg12[%c0_48, %c0_49] : memref<1x32xf32, #tpu.memory_space<vmem>>, vector<1x32xf32>
    %cst_50 = arith.constant dense<0.000000e+00> : vector<16xf32>
    %139 = vector.multi_reduction <add>, %136, %cst_50 [1] : vector<16x32xf32> to vector<16xf32>
    %140 = vector.shape_cast %139 : vector<16xf32> to vector<16x1xf32>
    %cst_51 = arith.constant 3.200000e+01 : f32
    %141 = vector.broadcast %cst_51 : f32 to vector<16x1xf32>
    %142 = arith.divf %140, %141 : vector<16x1xf32>
    %143 = vector.broadcast %142 : vector<16x1xf32> to vector<16x32xf32>
    %144 = arith.subf %136, %143 : vector<16x32xf32>
    %145 = arith.mulf %144, %144 : vector<16x32xf32>
    %cst_52 = arith.constant dense<0.000000e+00> : vector<16xf32>
    %146 = vector.multi_reduction <add>, %145, %cst_52 [1] : vector<16x32xf32> to vector<16xf32>
    %147 = vector.shape_cast %146 : vector<16xf32> to vector<16x1xf32>
    %cst_53 = arith.constant 3.200000e+01 : f32
    %148 = vector.broadcast %cst_53 : f32 to vector<16x1xf32>
    %149 = arith.divf %147, %148 : vector<16x1xf32>
    %150 = vector.broadcast %142 : vector<16x1xf32> to vector<16x32xf32>
    %151 = arith.subf %136, %150 : vector<16x32xf32>
    %cst_54 = arith.constant 9.99999974E-6 : f32
    %152 = vector.broadcast %cst_54 : f32 to vector<16x1xf32>
    %153 = arith.addf %149, %152 : vector<16x1xf32>
    %154 = math.rsqrt %153 : vector<16x1xf32>
    %155 = vector.broadcast %154 : vector<16x1xf32> to vector<16x32xf32>
    %156 = arith.mulf %151, %155 : vector<16x32xf32>
    %157 = vector.broadcast %137 : vector<1x32xf32> to vector<16x32xf32>
    %158 = arith.mulf %156, %157 : vector<16x32xf32>
    %159 = vector.broadcast %138 : vector<1x32xf32> to vector<16x32xf32>
    %160 = arith.addf %158, %159 : vector<16x32xf32>
    %161 = arith.truncf %160 : vector<16x32xf32> to vector<16x32xbf16>
    %c0_55 = arith.constant 0 : index
    %c0_56 = arith.constant 0 : index
    %162 = vector.load %arg13[%c0_55, %c0_56] : memref<32x32xbf16, #tpu.memory_space<vmem>>, vector<32x32xbf16>
    %cst_57 = arith.constant dense<0.000000e+00> : vector<16x32xf32>
    %163 = tpu.matmul %161, %162, %cst_57 {dimension_numbers = #tpu.dot_dimension_numbers<[1], [0], [0], [1], [0, 0, 1, 1], [], []>} : vector<16x32xbf16>, vector<32x32xbf16>, vector<16x32xf32> -> vector<16x32xf32>
    %c0_58 = arith.constant 0 : index
    %c0_59 = arith.constant 0 : index
    %164 = vector.load %arg15[%c0_58, %c0_59] : memref<1x32xf32, #tpu.memory_space<vmem>>, vector<1x32xf32>
    %165 = vector.broadcast %164 : vector<1x32xf32> to vector<16x32xf32>
    %166 = arith.addf %163, %165 : vector<16x32xf32>
    %c0_60 = arith.constant 0 : index
    %c0_61 = arith.constant 0 : index
    %167 = vector.load %arg14[%c0_60, %c0_61] : memref<32x64xbf16, #tpu.memory_space<vmem>>, vector<32x64xbf16>
    %cst_62 = arith.constant dense<0.000000e+00> : vector<32x64xf32>
    %168 = tpu.matmul %4, %167, %cst_62 {dimension_numbers = #tpu.dot_dimension_numbers<[1], [0], [0], [1], [0, 0, 1, 1], [], []>} : vector<32x32xbf16>, vector<32x64xbf16>, vector<32x64xf32> -> vector<32x64xf32>
    %c0_63 = arith.constant 0 : index
    %c0_64 = arith.constant 0 : index
    %169 = vector.load %arg16[%c0_63, %c0_64] : memref<1x64xf32, #tpu.memory_space<vmem>>, vector<1x64xf32>
    %170 = vector.extract_strided_slice %168 {offsets = [0, 0], sizes = [32, 32], strides = [1, 1]} : vector<32x64xf32> to vector<32x32xf32>
    %171 = vector.extract_strided_slice %169 {offsets = [0, 0], sizes = [1, 32], strides = [1, 1]} : vector<1x64xf32> to vector<1x32xf32>
    %172 = vector.broadcast %171 : vector<1x32xf32> to vector<32x32xf32>
    %173 = arith.addf %170, %172 : vector<32x32xf32>
    %174 = vector.extract_strided_slice %168 {offsets = [0, 32], sizes = [32, 32], strides = [1, 1]} : vector<32x64xf32> to vector<32x32xf32>
    %175 = vector.extract_strided_slice %169 {offsets = [0, 32], sizes = [1, 32], strides = [1, 1]} : vector<1x64xf32> to vector<1x32xf32>
    %176 = vector.broadcast %175 : vector<1x32xf32> to vector<32x32xf32>
    %177 = arith.addf %174, %176 : vector<32x32xf32>
    %c0_65 = arith.constant 0 : index
    %c0_66 = arith.constant 0 : index
    %178 = vector.load %arg17[%c0_65, %c0_66] : memref<32x32xbf16, #tpu.memory_space<vmem>>, vector<32x32xbf16>
    %c0_67 = arith.constant 0 : index
    %c0_68 = arith.constant 0 : index
    %179 = vector.load %arg18[%c0_67, %c0_68] : memref<1x32xf32, #tpu.memory_space<vmem>>, vector<1x32xf32>
    %cst_69 = arith.constant 0.353553385 : f32
    %180 = vector.broadcast %cst_69 : f32 to vector<16x32xf32>
    %181 = arith.mulf %166, %180 : vector<16x32xf32>
    %182 = arith.truncf %181 : vector<16x32xf32> to vector<16x32xbf16>
    %183 = vector.shape_cast %182 : vector<16x32xbf16> to vector<2x8x32xbf16>
    %184 = arith.truncf %173 : vector<32x32xf32> to vector<32x32xbf16>
    %185 = vector.shape_cast %184 : vector<32x32xbf16> to vector<2x16x32xbf16>
    %186 = arith.truncf %177 : vector<32x32xf32> to vector<32x32xbf16>
    %187 = vector.shape_cast %186 : vector<32x32xbf16> to vector<2x16x32xbf16>
    %188 = vector.extract_strided_slice %183 {offsets = [0, 0, 0], sizes = [2, 8, 8], strides = [1, 1, 1]} : vector<2x8x32xbf16> to vector<2x8x8xbf16>
    %189 = vector.extract_strided_slice %185 {offsets = [0, 0, 0], sizes = [2, 16, 8], strides = [1, 1, 1]} : vector<2x16x32xbf16> to vector<2x16x8xbf16>
    %cst_70 = arith.constant dense<0.000000e+00> : vector<2x8x16xf32>
    %190 = tpu.matmul %188, %189, %cst_70 {dimension_numbers = #tpu.dot_dimension_numbers<[2], [2], [1], [1], [0, 0, 0, 1, 1, 1], [0], [0]>} : vector<2x8x8xbf16>, vector<2x16x8xbf16>, vector<2x8x16xf32> -> vector<2x8x16xf32>
    %191 = arith.addf %190, %8 : vector<2x8x16xf32>
    %cst_71 = arith.constant dense<0xFF800000> : vector<2x8xf32>
    %192 = vector.multi_reduction <maximumf>, %191, %cst_71 [2] : vector<2x8x16xf32> to vector<2x8xf32>
    %193 = vector.shape_cast %192 : vector<2x8xf32> to vector<2x8x1xf32>
    %194 = vector.broadcast %193 : vector<2x8x1xf32> to vector<2x8x16xf32>
    %195 = arith.subf %191, %194 : vector<2x8x16xf32>
    %196 = math.exp %195 : vector<2x8x16xf32>
    %cst_72 = arith.constant dense<0.000000e+00> : vector<2x8xf32>
    %197 = vector.multi_reduction <add>, %196, %cst_72 [2] : vector<2x8x16xf32> to vector<2x8xf32>
    %198 = vector.shape_cast %197 : vector<2x8xf32> to vector<2x8x1xf32>
    %199 = tpu.reciprocal %198 {approx = true} : vector<2x8x1xf32> -> vector<2x8x1xf32>
    %200 = vector.broadcast %199 : vector<2x8x1xf32> to vector<2x8x16xf32>
    %201 = arith.mulf %196, %200 : vector<2x8x16xf32>
    %202 = arith.truncf %201 : vector<2x8x16xf32> to vector<2x8x16xbf16>
    %203 = vector.extract_strided_slice %187 {offsets = [0, 0, 0], sizes = [2, 16, 8], strides = [1, 1, 1]} : vector<2x16x32xbf16> to vector<2x16x8xbf16>
    %cst_73 = arith.constant dense<0.000000e+00> : vector<2x8x8xf32>
    %204 = tpu.matmul %202, %203, %cst_73 {dimension_numbers = #tpu.dot_dimension_numbers<[2], [1], [1], [2], [0, 0, 0, 1, 1, 2], [0], [0]>} : vector<2x8x16xbf16>, vector<2x16x8xbf16>, vector<2x8x8xf32> -> vector<2x8x8xf32>
    %205 = arith.truncf %204 : vector<2x8x8xf32> to vector<2x8x8xbf16>
    %206 = vector.extract_strided_slice %183 {offsets = [0, 0, 8], sizes = [2, 8, 8], strides = [1, 1, 1]} : vector<2x8x32xbf16> to vector<2x8x8xbf16>
    %207 = vector.extract_strided_slice %185 {offsets = [0, 0, 8], sizes = [2, 16, 8], strides = [1, 1, 1]} : vector<2x16x32xbf16> to vector<2x16x8xbf16>
    %cst_74 = arith.constant dense<0.000000e+00> : vector<2x8x16xf32>
    %208 = tpu.matmul %206, %207, %cst_74 {dimension_numbers = #tpu.dot_dimension_numbers<[2], [2], [1], [1], [0, 0, 0, 1, 1, 1], [0], [0]>} : vector<2x8x8xbf16>, vector<2x16x8xbf16>, vector<2x8x16xf32> -> vector<2x8x16xf32>
    %209 = arith.addf %208, %8 : vector<2x8x16xf32>
    %cst_75 = arith.constant dense<0xFF800000> : vector<2x8xf32>
    %210 = vector.multi_reduction <maximumf>, %209, %cst_75 [2] : vector<2x8x16xf32> to vector<2x8xf32>
    %211 = vector.shape_cast %210 : vector<2x8xf32> to vector<2x8x1xf32>
    %212 = vector.broadcast %211 : vector<2x8x1xf32> to vector<2x8x16xf32>
    %213 = arith.subf %209, %212 : vector<2x8x16xf32>
    %214 = math.exp %213 : vector<2x8x16xf32>
    %cst_76 = arith.constant dense<0.000000e+00> : vector<2x8xf32>
    %215 = vector.multi_reduction <add>, %214, %cst_76 [2] : vector<2x8x16xf32> to vector<2x8xf32>
    %216 = vector.shape_cast %215 : vector<2x8xf32> to vector<2x8x1xf32>
    %217 = tpu.reciprocal %216 {approx = true} : vector<2x8x1xf32> -> vector<2x8x1xf32>
    %218 = vector.broadcast %217 : vector<2x8x1xf32> to vector<2x8x16xf32>
    %219 = arith.mulf %214, %218 : vector<2x8x16xf32>
    %220 = arith.truncf %219 : vector<2x8x16xf32> to vector<2x8x16xbf16>
    %221 = vector.extract_strided_slice %187 {offsets = [0, 0, 8], sizes = [2, 16, 8], strides = [1, 1, 1]} : vector<2x16x32xbf16> to vector<2x16x8xbf16>
    %cst_77 = arith.constant dense<0.000000e+00> : vector<2x8x8xf32>
    %222 = tpu.matmul %220, %221, %cst_77 {dimension_numbers = #tpu.dot_dimension_numbers<[2], [1], [1], [2], [0, 0, 0, 1, 1, 2], [0], [0]>} : vector<2x8x16xbf16>, vector<2x16x8xbf16>, vector<2x8x8xf32> -> vector<2x8x8xf32>
    %223 = arith.truncf %222 : vector<2x8x8xf32> to vector<2x8x8xbf16>
    %224 = vector.extract_strided_slice %183 {offsets = [0, 0, 16], sizes = [2, 8, 8], strides = [1, 1, 1]} : vector<2x8x32xbf16> to vector<2x8x8xbf16>
    %225 = vector.extract_strided_slice %185 {offsets = [0, 0, 16], sizes = [2, 16, 8], strides = [1, 1, 1]} : vector<2x16x32xbf16> to vector<2x16x8xbf16>
    %cst_78 = arith.constant dense<0.000000e+00> : vector<2x8x16xf32>
    %226 = tpu.matmul %224, %225, %cst_78 {dimension_numbers = #tpu.dot_dimension_numbers<[2], [2], [1], [1], [0, 0, 0, 1, 1, 1], [0], [0]>} : vector<2x8x8xbf16>, vector<2x16x8xbf16>, vector<2x8x16xf32> -> vector<2x8x16xf32>
    %227 = arith.addf %226, %8 : vector<2x8x16xf32>
    %cst_79 = arith.constant dense<0xFF800000> : vector<2x8xf32>
    %228 = vector.multi_reduction <maximumf>, %227, %cst_79 [2] : vector<2x8x16xf32> to vector<2x8xf32>
    %229 = vector.shape_cast %228 : vector<2x8xf32> to vector<2x8x1xf32>
    %230 = vector.broadcast %229 : vector<2x8x1xf32> to vector<2x8x16xf32>
    %231 = arith.subf %227, %230 : vector<2x8x16xf32>
    %232 = math.exp %231 : vector<2x8x16xf32>
    %cst_80 = arith.constant dense<0.000000e+00> : vector<2x8xf32>
    %233 = vector.multi_reduction <add>, %232, %cst_80 [2] : vector<2x8x16xf32> to vector<2x8xf32>
    %234 = vector.shape_cast %233 : vector<2x8xf32> to vector<2x8x1xf32>
    %235 = tpu.reciprocal %234 {approx = true} : vector<2x8x1xf32> -> vector<2x8x1xf32>
    %236 = vector.broadcast %235 : vector<2x8x1xf32> to vector<2x8x16xf32>
    %237 = arith.mulf %232, %236 : vector<2x8x16xf32>
    %238 = arith.truncf %237 : vector<2x8x16xf32> to vector<2x8x16xbf16>
    %239 = vector.extract_strided_slice %187 {offsets = [0, 0, 16], sizes = [2, 16, 8], strides = [1, 1, 1]} : vector<2x16x32xbf16> to vector<2x16x8xbf16>
    %cst_81 = arith.constant dense<0.000000e+00> : vector<2x8x8xf32>
    %240 = tpu.matmul %238, %239, %cst_81 {dimension_numbers = #tpu.dot_dimension_numbers<[2], [1], [1], [2], [0, 0, 0, 1, 1, 2], [0], [0]>} : vector<2x8x16xbf16>, vector<2x16x8xbf16>, vector<2x8x8xf32> -> vector<2x8x8xf32>
    %241 = arith.truncf %240 : vector<2x8x8xf32> to vector<2x8x8xbf16>
    %242 = vector.extract_strided_slice %183 {offsets = [0, 0, 24], sizes = [2, 8, 8], strides = [1, 1, 1]} : vector<2x8x32xbf16> to vector<2x8x8xbf16>
    %243 = vector.extract_strided_slice %185 {offsets = [0, 0, 24], sizes = [2, 16, 8], strides = [1, 1, 1]} : vector<2x16x32xbf16> to vector<2x16x8xbf16>
    %cst_82 = arith.constant dense<0.000000e+00> : vector<2x8x16xf32>
    %244 = tpu.matmul %242, %243, %cst_82 {dimension_numbers = #tpu.dot_dimension_numbers<[2], [2], [1], [1], [0, 0, 0, 1, 1, 1], [0], [0]>} : vector<2x8x8xbf16>, vector<2x16x8xbf16>, vector<2x8x16xf32> -> vector<2x8x16xf32>
    %245 = arith.addf %244, %8 : vector<2x8x16xf32>
    %cst_83 = arith.constant dense<0xFF800000> : vector<2x8xf32>
    %246 = vector.multi_reduction <maximumf>, %245, %cst_83 [2] : vector<2x8x16xf32> to vector<2x8xf32>
    %247 = vector.shape_cast %246 : vector<2x8xf32> to vector<2x8x1xf32>
    %248 = vector.broadcast %247 : vector<2x8x1xf32> to vector<2x8x16xf32>
    %249 = arith.subf %245, %248 : vector<2x8x16xf32>
    %250 = math.exp %249 : vector<2x8x16xf32>
    %cst_84 = arith.constant dense<0.000000e+00> : vector<2x8xf32>
    %251 = vector.multi_reduction <add>, %250, %cst_84 [2] : vector<2x8x16xf32> to vector<2x8xf32>
    %252 = vector.shape_cast %251 : vector<2x8xf32> to vector<2x8x1xf32>
    %253 = tpu.reciprocal %252 {approx = true} : vector<2x8x1xf32> -> vector<2x8x1xf32>
    %254 = vector.broadcast %253 : vector<2x8x1xf32> to vector<2x8x16xf32>
    %255 = arith.mulf %250, %254 : vector<2x8x16xf32>
    %256 = arith.truncf %255 : vector<2x8x16xf32> to vector<2x8x16xbf16>
    %257 = vector.extract_strided_slice %187 {offsets = [0, 0, 24], sizes = [2, 16, 8], strides = [1, 1, 1]} : vector<2x16x32xbf16> to vector<2x16x8xbf16>
    %cst_85 = arith.constant dense<0.000000e+00> : vector<2x8x8xf32>
    %258 = tpu.matmul %256, %257, %cst_85 {dimension_numbers = #tpu.dot_dimension_numbers<[2], [1], [1], [2], [0, 0, 0, 1, 1, 2], [0], [0]>} : vector<2x8x16xbf16>, vector<2x16x8xbf16>, vector<2x8x8xf32> -> vector<2x8x8xf32>
    %259 = arith.truncf %258 : vector<2x8x8xf32> to vector<2x8x8xbf16>
    %260 = tpu.concatenate %205, %223, %241, %259 in 2 : vector<2x8x8xbf16>, vector<2x8x8xbf16>, vector<2x8x8xbf16>, vector<2x8x8xbf16> -> vector<2x8x32xbf16>
    %261 = vector.shape_cast %260 : vector<2x8x32xbf16> to vector<16x32xbf16>
    %cst_86 = arith.constant dense<0.000000e+00> : vector<16x32xf32>
    %262 = tpu.matmul %261, %178, %cst_86 {dimension_numbers = #tpu.dot_dimension_numbers<[1], [0], [0], [1], [0, 0, 1, 1], [], []>} : vector<16x32xbf16>, vector<32x32xbf16>, vector<16x32xf32> -> vector<16x32xf32>
    %263 = vector.broadcast %179 : vector<1x32xf32> to vector<16x32xf32>
    %264 = arith.addf %262, %263 : vector<16x32xf32>
    %265 = arith.addf %136, %264 : vector<16x32xf32>
    %c0_87 = arith.constant 0 : index
    %c0_88 = arith.constant 0 : index
    %266 = vector.load %arg19[%c0_87, %c0_88] : memref<1x32xf32, #tpu.memory_space<vmem>>, vector<1x32xf32>
    %c0_89 = arith.constant 0 : index
    %c0_90 = arith.constant 0 : index
    %267 = vector.load %arg20[%c0_89, %c0_90] : memref<1x32xf32, #tpu.memory_space<vmem>>, vector<1x32xf32>
    %cst_91 = arith.constant dense<0.000000e+00> : vector<16xf32>
    %268 = vector.multi_reduction <add>, %265, %cst_91 [1] : vector<16x32xf32> to vector<16xf32>
    %269 = vector.shape_cast %268 : vector<16xf32> to vector<16x1xf32>
    %cst_92 = arith.constant 3.200000e+01 : f32
    %270 = vector.broadcast %cst_92 : f32 to vector<16x1xf32>
    %271 = arith.divf %269, %270 : vector<16x1xf32>
    %272 = vector.broadcast %271 : vector<16x1xf32> to vector<16x32xf32>
    %273 = arith.subf %265, %272 : vector<16x32xf32>
    %274 = arith.mulf %273, %273 : vector<16x32xf32>
    %cst_93 = arith.constant dense<0.000000e+00> : vector<16xf32>
    %275 = vector.multi_reduction <add>, %274, %cst_93 [1] : vector<16x32xf32> to vector<16xf32>
    %276 = vector.shape_cast %275 : vector<16xf32> to vector<16x1xf32>
    %cst_94 = arith.constant 3.200000e+01 : f32
    %277 = vector.broadcast %cst_94 : f32 to vector<16x1xf32>
    %278 = arith.divf %276, %277 : vector<16x1xf32>
    %279 = vector.broadcast %271 : vector<16x1xf32> to vector<16x32xf32>
    %280 = arith.subf %265, %279 : vector<16x32xf32>
    %cst_95 = arith.constant 9.99999974E-6 : f32
    %281 = vector.broadcast %cst_95 : f32 to vector<16x1xf32>
    %282 = arith.addf %278, %281 : vector<16x1xf32>
    %283 = math.rsqrt %282 : vector<16x1xf32>
    %284 = vector.broadcast %283 : vector<16x1xf32> to vector<16x32xf32>
    %285 = arith.mulf %280, %284 : vector<16x32xf32>
    %286 = vector.broadcast %266 : vector<1x32xf32> to vector<16x32xf32>
    %287 = arith.mulf %285, %286 : vector<16x32xf32>
    %288 = vector.broadcast %267 : vector<1x32xf32> to vector<16x32xf32>
    %289 = arith.addf %287, %288 : vector<16x32xf32>
    %290 = arith.truncf %289 : vector<16x32xf32> to vector<16x32xbf16>
    %c0_96 = arith.constant 0 : index
    %c0_97 = arith.constant 0 : index
    %291 = vector.load %arg21[%c0_96, %c0_97] : memref<32x128xbf16, #tpu.memory_space<vmem>>, vector<32x128xbf16>
    %cst_98 = arith.constant dense<0.000000e+00> : vector<16x128xf32>
    %292 = tpu.matmul %290, %291, %cst_98 {dimension_numbers = #tpu.dot_dimension_numbers<[1], [0], [0], [1], [0, 0, 1, 1], [], []>} : vector<16x32xbf16>, vector<32x128xbf16>, vector<16x128xf32> -> vector<16x128xf32>
    %c0_99 = arith.constant 0 : index
    %c0_100 = arith.constant 0 : index
    %293 = vector.load %arg22[%c0_99, %c0_100] : memref<1x128xf32, #tpu.memory_space<vmem>>, vector<1x128xf32>
    %294 = vector.broadcast %293 : vector<1x128xf32> to vector<16x128xf32>
    %295 = arith.addf %292, %294 : vector<16x128xf32>
    %cst_101 = arith.constant 1.702000e+00 : f32
    %296 = vector.broadcast %cst_101 : f32 to vector<16x128xf32>
    %297 = arith.mulf %296, %295 : vector<16x128xf32>
    %298 = arith.negf %297 : vector<16x128xf32>
    %299 = math.exp %298 : vector<16x128xf32>
    %cst_102 = arith.constant 1.000000e+00 : f32
    %300 = vector.broadcast %cst_102 : f32 to vector<16x128xf32>
    %301 = arith.addf %300, %299 : vector<16x128xf32>
    %302 = arith.divf %300, %301 : vector<16x128xf32>
    %303 = arith.mulf %295, %302 : vector<16x128xf32>
    %304 = arith.truncf %303 : vector<16x128xf32> to vector<16x128xbf16>
    %c0_103 = arith.constant 0 : index
    %c0_104 = arith.constant 0 : index
    %305 = vector.load %arg23[%c0_103, %c0_104] : memref<128x32xbf16, #tpu.memory_space<vmem>>, vector<128x32xbf16>
    %cst_105 = arith.constant dense<0.000000e+00> : vector<16x32xf32>
    %306 = tpu.matmul %304, %305, %cst_105 {dimension_numbers = #tpu.dot_dimension_numbers<[1], [0], [0], [1], [0, 0, 1, 1], [], []>} : vector<16x128xbf16>, vector<128x32xbf16>, vector<16x32xf32> -> vector<16x32xf32>
    %c0_106 = arith.constant 0 : index
    %c0_107 = arith.constant 0 : index
    %307 = vector.load %arg24[%c0_106, %c0_107] : memref<1x32xf32, #tpu.memory_space<vmem>>, vector<1x32xf32>
    %308 = vector.broadcast %307 : vector<1x32xf32> to vector<16x32xf32>
    %309 = arith.addf %306, %308 : vector<16x32xf32>
    %310 = arith.addf %265, %309 : vector<16x32xf32>
    %311 = vector.shape_cast %310 : vector<16x32xf32> to vector<2x8x32xf32>
    %c0_108 = arith.constant 0 : index
    %c0_109 = arith.constant 0 : index
    %c0_110 = arith.constant 0 : index
    %312 = vector.load %arg25[%c0_108, %c0_109, %c0_110] : memref<2x8x32xf32, #tpu.memory_space<vmem>>, vector<2x8x32xf32>
    tpu.vector_store %arg25[%c0_108, %c0_109, %c0_110], %311 {strides = array<i32>} : memref<2x8x32xf32, #tpu.memory_space<vmem>>, vector<2x8x32xf32>,
    return
  }
  func.func @transform_0(%arg0: i32) -> (i32, i32, i32) {
    %c0_i32 = arith.constant 0 : i32
    %c0_i32_0 = arith.constant 0 : i32
    %c0_i32_1 = arith.constant 0 : i32
    return %arg0, %c0_i32, %c0_i32_0 : i32, i32, i32
  }
  func.func @transform_1(%arg0: i32) -> (i32, i32, i32) {
    %c0_i32 = arith.constant 0 : i32
    %c0_i32_0 = arith.constant 0 : i32
    %c0_i32_1 = arith.constant 0 : i32
    return %arg0, %c0_i32, %c0_i32_0 : i32, i32, i32
  }
  func.func @transform_2(%arg0: i32) -> (i32, i32, i32) {
    %c0_i32 = arith.constant 0 : i32
    %c0_i32_0 = arith.constant 0 : i32
    %c0_i32_1 = arith.constant 0 : i32
    return %arg0, %c0_i32, %c0_i32_0 : i32, i32, i32
  }
  func.func @transform_3(%arg0: i32) -> (i32, i32, i32) {
    %c0_i32 = arith.constant 0 : i32
    %c0_i32_0 = arith.constant 0 : i32
    %c0_i32_1 = arith.constant 0 : i32
    return %arg0, %c0_i32, %c0_i32_0 : i32, i32, i32
  }
  func.func @transform_4(%arg0: i32) -> (i32, i32) {
    %c0_i32 = arith.constant 0 : i32
    %c0_i32_0 = arith.constant 0 : i32
    %c0_i32_1 = arith.constant 0 : i32
    return %c0_i32, %c0_i32_0 : i32, i32
  }
  func.func @transform_5(%arg0: i32) -> (i32, i32) {
    %c0_i32 = arith.constant 0 : i32
    %c0_i32_0 = arith.constant 0 : i32
    %c0_i32_1 = arith.constant 0 : i32
    return %c0_i32, %c0_i32_0 : i32, i32
  }
  func.func @transform_6(%arg0: i32) -> (i32, i32) {
    %c0_i32 = arith.constant 0 : i32
    %c0_i32_0 = arith.constant 0 : i32
    %c0_i32_1 = arith.constant 0 : i32
    return %c0_i32, %c0_i32_0 : i32, i32
  }
  func.func @transform_7(%arg0: i32) -> (i32, i32) {
    %c0_i32 = arith.constant 0 : i32
    %c0_i32_0 = arith.constant 0 : i32
    %c0_i32_1 = arith.constant 0 : i32
    return %c0_i32, %c0_i32_0 : i32, i32
  }
  func.func @transform_8(%arg0: i32) -> (i32, i32) {
    %c0_i32 = arith.constant 0 : i32
    %c0_i32_0 = arith.constant 0 : i32
    %c0_i32_1 = arith.constant 0 : i32
    return %c0_i32, %c0_i32_0 : i32, i32
  }
  func.func @transform_9(%arg0: i32) -> (i32, i32) {
    %c0_i32 = arith.constant 0 : i32
    %c0_i32_0 = arith.constant 0 : i32
    %c0_i32_1 = arith.constant 0 : i32
    return %c0_i32, %c0_i32_0 : i32, i32
  }
  func.func @transform_10(%arg0: i32) -> (i32, i32) {
    %c0_i32 = arith.constant 0 : i32
    %c0_i32_0 = arith.constant 0 : i32
    %c0_i32_1 = arith.constant 0 : i32
    return %c0_i32, %c0_i32_0 : i32, i32
  }
  func.func @transform_11(%arg0: i32) -> (i32, i32) {
    %c0_i32 = arith.constant 0 : i32
    %c0_i32_0 = arith.constant 0 : i32
    %c0_i32_1 = arith.constant 0 : i32
    return %c0_i32, %c0_i32_0 : i32, i32
  }
  func.func @transform_12(%arg0: i32) -> (i32, i32) {
    %c0_i32 = arith.constant 0 : i32
    %c0_i32_0 = arith.constant 0 : i32
    %c0_i32_1 = arith.constant 0 : i32
    return %c0_i32, %c0_i32_0 : i32, i32
  }
  func.func @transform_13(%arg0: i32) -> (i32, i32) {
    %c0_i32 = arith.constant 0 : i32
    %c0_i32_0 = arith.constant 0 : i32
    %c0_i32_1 = arith.constant 0 : i32
    return %c0_i32, %c0_i32_0 : i32, i32
  }
  func.func @transform_14(%arg0: i32) -> (i32, i32) {
    %c0_i32 = arith.constant 0 : i32
    %c0_i32_0 = arith.constant 0 : i32
    %c0_i32_1 = arith.constant 0 : i32
    return %c0_i32, %c0_i32_0 : i32, i32
  }
  func.func @transform_15(%arg0: i32) -> (i32, i32) {
    %c0_i32 = arith.constant 0 : i32
    %c0_i32_0 = arith.constant 0 : i32
    %c0_i32_1 = arith.constant 0 : i32
    return %c0_i32, %c0_i32_0 : i32, i32
  }
  func.func @transform_16(%arg0: i32) -> (i32, i32) {
    %c0_i32 = arith.constant 0 : i32
    %c0_i32_0 = arith.constant 0 : i32
    %c0_i32_1 = arith.constant 0 : i32
    return %c0_i32, %c0_i32_0 : i32, i32
  }
  func.func @transform_17(%arg0: i32) -> (i32, i32) {
    %c0_i32 = arith.constant 0 : i32
    %c0_i32_0 = arith.constant 0 : i32
    %c0_i32_1 = arith.constant 0 : i32
    return %c0_i32, %c0_i32_0 : i32, i32
  }
  func.func @transform_18(%arg0: i32) -> (i32, i32) {
    %c0_i32 = arith.constant 0 : i32
    %c0_i32_0 = arith.constant 0 : i32
    %c0_i32_1 = arith.constant 0 : i32
    return %c0_i32, %c0_i32_0 : i32, i32
  }
  func.func @transform_19(%arg0: i32) -> (i32, i32) {
    %c0_i32 = arith.constant 0 : i32
    %c0_i32_0 = arith.constant 0 : i32
    %c0_i32_1 = arith.constant 0 : i32
    return %c0_i32, %c0_i32_0 : i32, i32
  }
  func.func @transform_20(%arg0: i32) -> (i32, i32) {
    %c0_i32 = arith.constant 0 : i32
    %c0_i32_0 = arith.constant 0 : i32
    %c0_i32_1 = arith.constant 0 : i32
    return %c0_i32, %c0_i32_0 : i32, i32
  }
  func.func @transform_21(%arg0: i32) -> (i32, i32) {
    %c0_i32 = arith.constant 0 : i32
    %c0_i32_0 = arith.constant 0 : i32
    %c0_i32_1 = arith.constant 0 : i32
    return %c0_i32, %c0_i32_0 : i32, i32
  }
  func.func @transform_22(%arg0: i32) -> (i32, i32) {
    %c0_i32 = arith.constant 0 : i32
    %c0_i32_0 = arith.constant 0 : i32
    %c0_i32_1 = arith.constant 0 : i32
    return %c0_i32, %c0_i32_0 : i32, i32
  }
  func.func @transform_23(%arg0: i32) -> (i32, i32) {
    %c0_i32 = arith.constant 0 : i32
    %c0_i32_0 = arith.constant 0 : i32
    %c0_i32_1 = arith.constant 0 : i32
    return %c0_i32, %c0_i32_0 : i32, i32
  }
  func.func @transform_24(%arg0: i32) -> (i32, i32, i32) {
    %c0_i32 = arith.constant 0 : i32
    %c0_i32_0 = arith.constant 0 : i32
    %c0_i32_1 = arith.constant 0 : i32
    return %arg0, %c0_i32, %c0_i32_0 : i32, i32, i32
  }
}

module attributes {stable_mosaic.version = 11 : i64} {
  func.func @_rcab_kernel(%arg0: i32, %arg1: memref<2x8x32xbf16, #tpu.memory_space<vmem>>, %arg2: memref<2x16x32xbf16, #tpu.memory_space<vmem>>, %arg3: memref<2x8x8xbf16, #tpu.memory_space<vmem>>, %arg4: memref<2x8x16xbf16, #tpu.memory_space<vmem>>, %arg5: memref<1x32xf32, #tpu.memory_space<vmem>>, %arg6: memref<1x32xf32, #tpu.memory_space<vmem>>, %arg7: memref<32x96xbf16, #tpu.memory_space<vmem>>, %arg8: memref<1x96xf32, #tpu.memory_space<vmem>>, %arg9: memref<32x32xbf16, #tpu.memory_space<vmem>>, %arg10: memref<1x32xf32, #tpu.memory_space<vmem>>, %arg11: memref<1x32xf32, #tpu.memory_space<vmem>>, %arg12: memref<1x32xf32, #tpu.memory_space<vmem>>, %arg13: memref<32x32xbf16, #tpu.memory_space<vmem>>, %arg14: memref<32x64xbf16, #tpu.memory_space<vmem>>, %arg15: memref<1x32xf32, #tpu.memory_space<vmem>>, %arg16: memref<1x64xf32, #tpu.memory_space<vmem>>, %arg17: memref<32x32xbf16, #tpu.memory_space<vmem>>, %arg18: memref<1x32xf32, #tpu.memory_space<vmem>>, %arg19: memref<1x32xf32, #tpu.memory_space<vmem>>, %arg20: memref<1x32xf32, #tpu.memory_space<vmem>>, %arg21: memref<32x128xbf16, #tpu.memory_space<vmem>>, %arg22: memref<1x128xf32, #tpu.memory_space<vmem>>, %arg23: memref<128x32xbf16, #tpu.memory_space<vmem>>, %arg24: memref<1x32xf32, #tpu.memory_space<vmem>>, %arg25: memref<2x8x32xf32, #tpu.memory_space<vmem>>) attributes {dimension_semantics = [#tpu.dimension_semantics<parallel>], iteration_bounds = array<i64: 1>, scalar_prefetch = 0 : i64, scratch_operands = 0 : i64, tpu.core_type = #tpu.core_type<tc>, window_params = [{transform_indices = @transform_0, window_bounds = array<i64: 2, 8, 32>}, {transform_indices = @transform_1, window_bounds = array<i64: 2, 16, 32>}, {transform_indices = @transform_2, window_bounds = array<i64: 2, 8, 8>}, {transform_indices = @transform_3, window_bounds = array<i64: 2, 8, 16>}, {pipeline_mode = #tpu.pipeline_mode<synchronous>, transform_indices = @transform_4, window_bounds = array<i64: 1, 32>}, {pipeline_mode = #tpu.pipeline_mode<synchronous>, transform_indices = @transform_5, window_bounds = array<i64: 1, 32>}, {pipeline_mode = #tpu.pipeline_mode<synchronous>, transform_indices = @transform_6, window_bounds = array<i64: 32, 96>}, {pipeline_mode = #tpu.pipeline_mode<synchronous>, transform_indices = @transform_7, window_bounds = array<i64: 1, 96>}, {pipeline_mode = #tpu.pipeline_mode<synchronous>, transform_indices = @transform_8, window_bounds = array<i64: 32, 32>}, {pipeline_mode = #tpu.pipeline_mode<synchronous>, transform_indices = @transform_9, window_bounds = array<i64: 1, 32>}, {pipeline_mode = #tpu.pipeline_mode<synchronous>, transform_indices = @transform_10, window_bounds = array<i64: 1, 32>}, {pipeline_mode = #tpu.pipeline_mode<synchronous>, transform_indices = @transform_11, window_bounds = array<i64: 1, 32>}, {pipeline_mode = #tpu.pipeline_mode<synchronous>, transform_indices = @transform_12, window_bounds = array<i64: 32, 32>}, {pipeline_mode = #tpu.pipeline_mode<synchronous>, transform_indices = @transform_13, window_bounds = array<i64: 32, 64>}, {pipeline_mode = #tpu.pipeline_mode<synchronous>, transform_indices = @transform_14, window_bounds = array<i64: 1, 32>}, {pipeline_mode = #tpu.pipeline_mode<synchronous>, transform_indices = @transform_15, window_bounds = array<i64: 1, 64>}, {pipeline_mode = #tpu.pipeline_mode<synchronous>, transform_indices = @transform_16, window_bounds = array<i64: 32, 32>}, {pipeline_mode = #tpu.pipeline_mode<synchronous>, transform_indices = @transform_17, window_bounds = array<i64: 1, 32>}, {pipeline_mode = #tpu.pipeline_mode<synchronous>, transform_indices = @transform_18, window_bounds = array<i64: 1, 32>}, {pipeline_mode = #tpu.pipeline_mode<synchronous>, transform_indices = @transform_19, window_bounds = array<i64: 1, 32>}, {pipeline_mode = #tpu.pipeline_mode<synchronous>, transform_indices = @transform_20, window_bounds = array<i64: 32, 128>}, {pipeline_mode = #tpu.pipeline_mode<synchronous>, transform_indices = @transform_21, window_bounds = array<i64: 1, 128>}, {pipeline_mode = #tpu.pipeline_mode<synchronous>, transform_indices = @transform_22, window_bounds = array<i64: 128, 32>}, {pipeline_mode = #tpu.pipeline_mode<synchronous>, transform_indices = @transform_23, window_bounds = array<i64: 1, 32>}, {transform_indices = @transform_24, window_bounds = array<i64: 2, 8, 32>}]} {
    %c0 = arith.constant 0 : index
    %c0_0 = arith.constant 0 : index
    %c0_1 = arith.constant 0 : index
    %0 = vector.load %arg1[%c0, %c0_0, %c0_1] : memref<2x8x32xbf16, #tpu.memory_space<vmem>>, vector<2x8x32xbf16>
    %1 = arith.extf %0 : vector<2x8x32xbf16> to vector<2x8x32xf32>
    %2 = vector.shape_cast %1 : vector<2x8x32xf32> to vector<16x32xf32>
    %c0_2 = arith.constant 0 : index
    %c0_3 = arith.constant 0 : index
    %c0_4 = arith.constant 0 : index
    %3 = vector.load %arg2[%c0_2, %c0_3, %c0_4] : memref<2x16x32xbf16, #tpu.memory_space<vmem>>, vector<2x16x32xbf16>
    %4 = vector.shape_cast %3 : vector<2x16x32xbf16> to vector<32x32xbf16>
    %c0_5 = arith.constant 0 : index
    %c0_6 = arith.constant 0 : index
    %c0_7 = arith.constant 0 : index
    %5 = vector.load %arg3[%c0_5, %c0_6, %c0_7] : memref<2x8x8xbf16, #tpu.memory_space<vmem>>, vector<2x8x8xbf16>
    %6 = arith.extf %5 : vector<2x8x8xbf16> to vector<2x8x8xf32>
    %c0_8 = arith.constant 0 : index
    %c0_9 = arith.constant 0 : index
    %c0_10 = arith.constant 0 : index
    %7 = vector.load %arg4[%c0_8, %c0_9, %c0_10] : memref<2x8x16xbf16, #tpu.memory_space<vmem>>, vector<2x8x16xbf16>
    %8 = arith.extf %7 : vector<2x8x16xbf16> to vector<2x8x16xf32>
    %c0_11 = arith.constant 0 : index
    %c0_12 = arith.constant 0 : index
    %9 = vector.load %arg5[%c0_11, %c0_12] : memref<1x32xf32, #tpu.memory_space<vmem>>, vector<1x32xf32>
    %c0_13 = arith.constant 0 : index
    %c0_14 = arith.constant 0 : index
    %10 = vector.load %arg6[%c0_13, %c0_14] : memref<1x32xf32, #tpu.memory_space<vmem>>, vector<1x32xf32>
    %cst = arith.constant dense<0.000000e+00> : vector<16xf32>
    %11 = vector.multi_reduction <add>, %2, %cst [1] : vector<16x32xf32> to vector<16xf32>
    %12 = vector.shape_cast %11 : vector<16xf32> to vector<16x1xf32>
    %cst_15 = arith.constant 3.200000e+01 : f32
    %13 = vector.broadcast %cst_15 : f32 to vector<16x1xf32>
    %14 = arith.divf %12, %13 : vector<16x1xf32>
    %15 = vector.broadcast %14 : vector<16x1xf32> to vector<16x32xf32>
    %16 = arith.subf %2, %15 : vector<16x32xf32>
    %17 = arith.mulf %16, %16 : vector<16x32xf32>
    %cst_16 = arith.constant dense<0.000000e+00> : vector<16xf32>
    %18 = vector.multi_reduction <add>, %17, %cst_16 [1] : vector<16x32xf32> to vector<16xf32>
    %19 = vector.shape_cast %18 : vector<16xf32> to vector<16x1xf32>
    %cst_17 = arith.constant 3.200000e+01 : f32
    %20 = vector.broadcast %cst_17 : f32 to vector<16x1xf32>
    %21 = arith.divf %19, %20 : vector<16x1xf32>
    %22 = vector.broadcast %14 : vector<16x1xf32> to vector<16x32xf32>
    %23 = arith.subf %2, %22 : vector<16x32xf32>
    %cst_18 = arith.constant 9.99999974E-6 : f32
    %24 = vector.broadcast %cst_18 : f32 to vector<16x1xf32>
    %25 = arith.addf %21, %24 : vector<16x1xf32>
    %26 = math.rsqrt %25 : vector<16x1xf32>
    %27 = vector.broadcast %26 : vector<16x1xf32> to vector<16x32xf32>
    %28 = arith.mulf %23, %27 : vector<16x32xf32>
    %29 = vector.broadcast %9 : vector<1x32xf32> to vector<16x32xf32>
    %30 = arith.mulf %28, %29 : vector<16x32xf32>
    %31 = vector.broadcast %10 : vector<1x32xf32> to vector<16x32xf32>
    %32 = arith.addf %30, %31 : vector<16x32xf32>
    %33 = arith.truncf %32 : vector<16x32xf32> to vector<16x32xbf16>
    %c0_19 = arith.constant 0 : index
    %c0_20 = arith.constant 0 : index
    %34 = vector.load %arg7[%c0_19, %c0_20] : memref<32x96xbf16, #tpu.memory_space<vmem>>, vector<32x96xbf16>
    %cst_21 = arith.constant dense<0.000000e+00> : vector<16x96xf32>
    %35 = tpu.matmul %33, %34, %cst_21 {dimension_numbers = #tpu.dot_dimension_numbers<[1], [0], [0], [1], [0, 0, 1, 1], [], []>} : vector<16x32xbf16>, vector<32x96xbf16>, vector<16x96xf32> -> vector<16x96xf32>
    %c0_22 = arith.constant 0 : index
    %c0_23 = arith.constant 0 : index
    %36 = vector.load %arg8[%c0_22, %c0_23] : memref<1x96xf32, #tpu.memory_space<vmem>>, vector<1x96xf32>
    %37 = vector.extract_strided_slice %35 {offsets = [0, 0], sizes = [16, 32], strides = [1, 1]} : vector<16x96xf32> to vector<16x32xf32>
    %38 = vector.extract_strided_slice %36 {offsets = [0, 0], sizes = [1, 32], strides = [1, 1]} : vector<1x96xf32> to vector<1x32xf32>
    %39 = vector.broadcast %38 : vector<1x32xf32> to vector<16x32xf32>
    %40 = arith.addf %37, %39 : vector<16x32xf32>
    %41 = vector.extract_strided_slice %35 {offsets = [0, 32], sizes = [16, 32], strides = [1, 1]} : vector<16x96xf32> to vector<16x32xf32>
    %42 = vector.extract_strided_slice %36 {offsets = [0, 32], sizes = [1, 32], strides = [1, 1]} : vector<1x96xf32> to vector<1x32xf32>
    %43 = vector.broadcast %42 : vector<1x32xf32> to vector<16x32xf32>
    %44 = arith.addf %41, %43 : vector<16x32xf32>
    %45 = vector.extract_strided_slice %35 {offsets = [0, 64], sizes = [16, 32], strides = [1, 1]} : vector<16x96xf32> to vector<16x32xf32>
    %46 = vector.extract_strided_slice %36 {offsets = [0, 64], sizes = [1, 32], strides = [1, 1]} : vector<1x96xf32> to vector<1x32xf32>
    %47 = vector.broadcast %46 : vector<1x32xf32> to vector<16x32xf32>
    %48 = arith.addf %45, %47 : vector<16x32xf32>
    %c0_24 = arith.constant 0 : index
    %c0_25 = arith.constant 0 : index
    %49 = vector.load %arg9[%c0_24, %c0_25] : memref<32x32xbf16, #tpu.memory_space<vmem>>, vector<32x32xbf16>
    %c0_26 = arith.constant 0 : index
    %c0_27 = arith.constant 0 : index
    %50 = vector.load %arg10[%c0_26, %c0_27] : memref<1x32xf32, #tpu.memory_space<vmem>>, vector<1x32xf32>
    %cst_28 = arith.constant 0.353553385 : f32
    %51 = vector.broadcast %cst_28 : f32 to vector<16x32xf32>
    %52 = arith.mulf %40, %51 : vector<16x32xf32>
    %53 = arith.truncf %52 : vector<16x32xf32> to vector<16x32xbf16>
    %54 = vector.shape_cast %53 : vector<16x32xbf16> to vector<2x8x32xbf16>
    %55 = arith.truncf %44 : vector<16x32xf32> to vector<16x32xbf16>
    %56 = vector.shape_cast %55 : vector<16x32xbf16> to vector<2x8x32xbf16>
    %57 = arith.truncf %48 : vector<16x32xf32> to vector<16x32xbf16>
    %58 = vector.shape_cast %57 : vector<16x32xbf16> to vector<2x8x32xbf16>
    %59 = vector.extract_strided_slice %54 {offsets = [0, 0, 0], sizes = [2, 8, 8], strides = [1, 1, 1]} : vector<2x8x32xbf16> to vector<2x8x8xbf16>
    %60 = vector.extract_strided_slice %56 {offsets = [0, 0, 0], sizes = [2, 8, 8], strides = [1, 1, 1]} : vector<2x8x32xbf16> to vector<2x8x8xbf16>
    %cst_29 = arith.constant dense<0.000000e+00> : vector<2x8x8xf32>
    %61 = tpu.matmul %59, %60, %cst_29 {dimension_numbers = #tpu.dot_dimension_numbers<[2], [2], [1], [1], [0, 0, 0, 1, 1, 1], [0], [0]>} : vector<2x8x8xbf16>, vector<2x8x8xbf16>, vector<2x8x8xf32> -> vector<2x8x8xf32>
    %62 = arith.addf %61, %6 : vector<2x8x8xf32>
    %cst_30 = arith.constant dense<0xFF800000> : vector<2x8xf32>
    %63 = vector.multi_reduction <maximumf>, %62, %cst_30 [2] : vector<2x8x8xf32> to vector<2x8xf32>
    %64 = vector.shape_cast %63 : vector<2x8xf32> to vector<2x8x1xf32>
    %65 = vector.broadcast %64 : vector<2x8x1xf32> to vector<2x8x8xf32>
    %66 = arith.subf %62, %65 : vector<2x8x8xf32>
    %67 = math.exp %66 : vector<2x8x8xf32>
    %cst_31 = arith.constant dense<0.000000e+00> : vector<2x8xf32>
    %68 = vector.multi_reduction <add>, %67, %cst_31 [2] : vector<2x8x8xf32> to vector<2x8xf32>
    %69 = vector.shape_cast %68 : vector<2x8xf32> to vector<2x8x1xf32>
    %70 = tpu.reciprocal %69 {approx = true} : vector<2x8x1xf32> -> vector<2x8x1xf32>
    %71 = vector.broadcast %70 : vector<2x8x1xf32> to vector<2x8x8xf32>
    %72 = arith.mulf %67, %71 : vector<2x8x8xf32>
    %73 = arith.truncf %72 : vector<2x8x8xf32> to vector<2x8x8xbf16>
    %74 = vector.extract_strided_slice %58 {offsets = [0, 0, 0], sizes = [2, 8, 8], strides = [1, 1, 1]} : vector<2x8x32xbf16> to vector<2x8x8xbf16>
    %cst_32 = arith.constant dense<0.000000e+00> : vector<2x8x8xf32>
    %75 = tpu.matmul %73, %74, %cst_32 {dimension_numbers = #tpu.dot_dimension_numbers<[2], [1], [1], [2], [0, 0, 0, 1, 1, 2], [0], [0]>} : vector<2x8x8xbf16>, vector<2x8x8xbf16>, vector<2x8x8xf32> -> vector<2x8x8xf32>
    %76 = arith.truncf %75 : vector<2x8x8xf32> to vector<2x8x8xbf16>
    %77 = vector.extract_strided_slice %54 {offsets = [0, 0, 8], sizes = [2, 8, 8], strides = [1, 1, 1]} : vector<2x8x32xbf16> to vector<2x8x8xbf16>
    %78 = vector.extract_strided_slice %56 {offsets = [0, 0, 8], sizes = [2, 8, 8], strides = [1, 1, 1]} : vector<2x8x32xbf16> to vector<2x8x8xbf16>
    %cst_33 = arith.constant dense<0.000000e+00> : vector<2x8x8xf32>
    %79 = tpu.matmul %77, %78, %cst_33 {dimension_numbers = #tpu.dot_dimension_numbers<[2], [2], [1], [1], [0, 0, 0, 1, 1, 1], [0], [0]>} : vector<2x8x8xbf16>, vector<2x8x8xbf16>, vector<2x8x8xf32> -> vector<2x8x8xf32>
    %80 = arith.addf %79, %6 : vector<2x8x8xf32>
    %cst_34 = arith.constant dense<0xFF800000> : vector<2x8xf32>
    %81 = vector.multi_reduction <maximumf>, %80, %cst_34 [2] : vector<2x8x8xf32> to vector<2x8xf32>
    %82 = vector.shape_cast %81 : vector<2x8xf32> to vector<2x8x1xf32>
    %83 = vector.broadcast %82 : vector<2x8x1xf32> to vector<2x8x8xf32>
    %84 = arith.subf %80, %83 : vector<2x8x8xf32>
    %85 = math.exp %84 : vector<2x8x8xf32>
    %cst_35 = arith.constant dense<0.000000e+00> : vector<2x8xf32>
    %86 = vector.multi_reduction <add>, %85, %cst_35 [2] : vector<2x8x8xf32> to vector<2x8xf32>
    %87 = vector.shape_cast %86 : vector<2x8xf32> to vector<2x8x1xf32>
    %88 = tpu.reciprocal %87 {approx = true} : vector<2x8x1xf32> -> vector<2x8x1xf32>
    %89 = vector.broadcast %88 : vector<2x8x1xf32> to vector<2x8x8xf32>
    %90 = arith.mulf %85, %89 : vector<2x8x8xf32>
    %91 = arith.truncf %90 : vector<2x8x8xf32> to vector<2x8x8xbf16>
    %92 = vector.extract_strided_slice %58 {offsets = [0, 0, 8], sizes = [2, 8, 8], strides = [1, 1, 1]} : vector<2x8x32xbf16> to vector<2x8x8xbf16>
    %cst_36 = arith.constant dense<0.000000e+00> : vector<2x8x8xf32>
    %93 = tpu.matmul %91, %92, %cst_36 {dimension_numbers = #tpu.dot_dimension_numbers<[2], [1], [1], [2], [0, 0, 0, 1, 1, 2], [0], [0]>} : vector<2x8x8xbf16>, vector<2x8x8xbf16>, vector<2x8x8xf32> -> vector<2x8x8xf32>
    %94 = arith.truncf %93 : vector<2x8x8xf32> to vector<2x8x8xbf16>
    %95 = vector.extract_strided_slice %54 {offsets = [0, 0, 16], sizes = [2, 8, 8], strides = [1, 1, 1]} : vector<2x8x32xbf16> to vector<2x8x8xbf16>
    %96 = vector.extract_strided_slice %56 {offsets = [0, 0, 16], sizes = [2, 8, 8], strides = [1, 1, 1]} : vector<2x8x32xbf16> to vector<2x8x8xbf16>
    %cst_37 = arith.constant dense<0.000000e+00> : vector<2x8x8xf32>
    %97 = tpu.matmul %95, %96, %cst_37 {dimension_numbers = #tpu.dot_dimension_numbers<[2], [2], [1], [1], [0, 0, 0, 1, 1, 1], [0], [0]>} : vector<2x8x8xbf16>, vector<2x8x8xbf16>, vector<2x8x8xf32> -> vector<2x8x8xf32>
    %98 = arith.addf %97, %6 : vector<2x8x8xf32>
    %cst_38 = arith.constant dense<0xFF800000> : vector<2x8xf32>
    %99 = vector.multi_reduction <maximumf>, %98, %cst_38 [2] : vector<2x8x8xf32> to vector<2x8xf32>
    %100 = vector.shape_cast %99 : vector<2x8xf32> to vector<2x8x1xf32>
    %101 = vector.broadcast %100 : vector<2x8x1xf32> to vector<2x8x8xf32>
    %102 = arith.subf %98, %101 : vector<2x8x8xf32>
    %103 = math.exp %102 : vector<2x8x8xf32>
    %cst_39 = arith.constant dense<0.000000e+00> : vector<2x8xf32>
    %104 = vector.multi_reduction <add>, %103, %cst_39 [2] : vector<2x8x8xf32> to vector<2x8xf32>
    %105 = vector.shape_cast %104 : vector<2x8xf32> to vector<2x8x1xf32>
    %106 = tpu.reciprocal %105 {approx = true} : vector<2x8x1xf32> -> vector<2x8x1xf32>
    %107 = vector.broadcast %106 : vector<2x8x1xf32> to vector<2x8x8xf32>
    %108 = arith.mulf %103, %107 : vector<2x8x8xf32>
    %109 = arith.truncf %108 : vector<2x8x8xf32> to vector<2x8x8xbf16>
    %110 = vector.extract_strided_slice %58 {offsets = [0, 0, 16], sizes = [2, 8, 8], strides = [1, 1, 1]} : vector<2x8x32xbf16> to vector<2x8x8xbf16>
    %cst_40 = arith.constant dense<0.000000e+00> : vector<2x8x8xf32>
    %111 = tpu.matmul %109, %110, %cst_40 {dimension_numbers = #tpu.dot_dimension_numbers<[2], [1], [1], [2], [0, 0, 0, 1, 1, 2], [0], [0]>} : vector<2x8x8xbf16>, vector<2x8x8xbf16>, vector<2x8x8xf32> -> vector<2x8x8xf32>
    %112 = arith.truncf %111 : vector<2x8x8xf32> to vector<2x8x8xbf16>
    %113 = vector.extract_strided_slice %54 {offsets = [0, 0, 24], sizes = [2, 8, 8], strides = [1, 1, 1]} : vector<2x8x32xbf16> to vector<2x8x8xbf16>
    %114 = vector.extract_strided_slice %56 {offsets = [0, 0, 24], sizes = [2, 8, 8], strides = [1, 1, 1]} : vector<2x8x32xbf16> to vector<2x8x8xbf16>
    %cst_41 = arith.constant dense<0.000000e+00> : vector<2x8x8xf32>
    %115 = tpu.matmul %113, %114, %cst_41 {dimension_numbers = #tpu.dot_dimension_numbers<[2], [2], [1], [1], [0, 0, 0, 1, 1, 1], [0], [0]>} : vector<2x8x8xbf16>, vector<2x8x8xbf16>, vector<2x8x8xf32> -> vector<2x8x8xf32>
    %116 = arith.addf %115, %6 : vector<2x8x8xf32>
    %cst_42 = arith.constant dense<0xFF800000> : vector<2x8xf32>
    %117 = vector.multi_reduction <maximumf>, %116, %cst_42 [2] : vector<2x8x8xf32> to vector<2x8xf32>
    %118 = vector.shape_cast %117 : vector<2x8xf32> to vector<2x8x1xf32>
    %119 = vector.broadcast %118 : vector<2x8x1xf32> to vector<2x8x8xf32>
    %120 = arith.subf %116, %119 : vector<2x8x8xf32>
    %121 = math.exp %120 : vector<2x8x8xf32>
    %cst_43 = arith.constant dense<0.000000e+00> : vector<2x8xf32>
    %122 = vector.multi_reduction <add>, %121, %cst_43 [2] : vector<2x8x8xf32> to vector<2x8xf32>
    %123 = vector.shape_cast %122 : vector<2x8xf32> to vector<2x8x1xf32>
    %124 = tpu.reciprocal %123 {approx = true} : vector<2x8x1xf32> -> vector<2x8x1xf32>
    %125 = vector.broadcast %124 : vector<2x8x1xf32> to vector<2x8x8xf32>
    %126 = arith.mulf %121, %125 : vector<2x8x8xf32>
    %127 = arith.truncf %126 : vector<2x8x8xf32> to vector<2x8x8xbf16>
    %128 = vector.extract_strided_slice %58 {offsets = [0, 0, 24], sizes = [2, 8, 8], strides = [1, 1, 1]} : vector<2x8x32xbf16> to vector<2x8x8xbf16>
    %cst_44 = arith.constant dense<0.000000e+00> : vector<2x8x8xf32>
    %129 = tpu.matmul %127, %128, %cst_44 {dimension_numbers = #tpu.dot_dimension_numbers<[2], [1], [1], [2], [0, 0, 0, 1, 1, 2], [0], [0]>} : vector<2x8x8xbf16>, vector<2x8x8xbf16>, vector<2x8x8xf32> -> vector<2x8x8xf32>
    %130 = arith.truncf %129 : vector<2x8x8xf32> to vector<2x8x8xbf16>
    %131 = tpu.concatenate %76, %94, %112, %130 in 2 : vector<2x8x8xbf16>, vector<2x8x8xbf16>, vector<2x8x8xbf16>, vector<2x8x8xbf16> -> vector<2x8x32xbf16>
    %132 = vector.shape_cast %131 : vector<2x8x32xbf16> to vector<16x32xbf16>
    %cst_45 = arith.constant dense<0.000000e+00> : vector<16x32xf32>
    %133 = tpu.matmul %132, %49, %cst_45 {dimension_numbers = #tpu.dot_dimension_numbers<[1], [0], [0], [1], [0, 0, 1, 1], [], []>} : vector<16x32xbf16>, vector<32x32xbf16>, vector<16x32xf32> -> vector<16x32xf32>
    %134 = vector.broadcast %50 : vector<1x32xf32> to vector<16x32xf32>
    %135 = arith.addf %133, %134 : vector<16x32xf32>
    %136 = arith.addf %2, %135 : vector<16x32xf32>
    %c0_46 = arith.constant 0 : index
    %c0_47 = arith.constant 0 : index
    %137 = vector.load %arg11[%c0_46, %c0_47] : memref<1x32xf32, #tpu.memory_space<vmem>>, vector<1x32xf32>
    %c0_48 = arith.constant 0 : index
    %c0_49 = arith.constant 0 : index
    %138 = vector.load %arg12[%c0_48, %c0_49] : memref<1x32xf32, #tpu.memory_space<vmem>>, vector<1x32xf32>
    %cst_50 = arith.constant dense<0.000000e+00> : vector<16xf32>
    %139 = vector.multi_reduction <add>, %136, %cst_50 [1] : vector<16x32xf32> to vector<16xf32>
    %140 = vector.shape_cast %139 : vector<16xf32> to vector<16x1xf32>
    %cst_51 = arith.constant 3.200000e+01 : f32
    %141 = vector.broadcast %cst_51 : f32 to vector<16x1xf32>
    %142 = arith.divf %140, %141 : vector<16x1xf32>
    %143 = vector.broadcast %142 : vector<16x1xf32> to vector<16x32xf32>
    %144 = arith.subf %136, %143 : vector<16x32xf32>
    %145 = arith.mulf %144, %144 : vector<16x32xf32>
    %cst_52 = arith.constant dense<0.000000e+00> : vector<16xf32>
    %146 = vector.multi_reduction <add>, %145, %cst_52 [1] : vector<16x32xf32> to vector<16xf32>
    %147 = vector.shape_cast %146 : vector<16xf32> to vector<16x1xf32>
    %cst_53 = arith.constant 3.200000e+01 : f32
    %148 = vector.broadcast %cst_53 : f32 to vector<16x1xf32>
    %149 = arith.divf %147, %148 : vector<16x1xf32>
    %150 = vector.broadcast %142 : vector<16x1xf32> to vector<16x32xf32>
    %151 = arith.subf %136, %150 : vector<16x32xf32>
    %cst_54 = arith.constant 9.99999974E-6 : f32
    %152 = vector.broadcast %cst_54 : f32 to vector<16x1xf32>
    %153 = arith.addf %149, %152 : vector<16x1xf32>
    %154 = math.rsqrt %153 : vector<16x1xf32>
    %155 = vector.broadcast %154 : vector<16x1xf32> to vector<16x32xf32>
    %156 = arith.mulf %151, %155 : vector<16x32xf32>
    %157 = vector.broadcast %137 : vector<1x32xf32> to vector<16x32xf32>
    %158 = arith.mulf %156, %157 : vector<16x32xf32>
    %159 = vector.broadcast %138 : vector<1x32xf32> to vector<16x32xf32>
    %160 = arith.addf %158, %159 : vector<16x32xf32>
    %161 = arith.truncf %160 : vector<16x32xf32> to vector<16x32xbf16>
    %c0_55 = arith.constant 0 : index
    %c0_56 = arith.constant 0 : index
    %162 = vector.load %arg13[%c0_55, %c0_56] : memref<32x32xbf16, #tpu.memory_space<vmem>>, vector<32x32xbf16>
    %cst_57 = arith.constant dense<0.000000e+00> : vector<16x32xf32>
    %163 = tpu.matmul %161, %162, %cst_57 {dimension_numbers = #tpu.dot_dimension_numbers<[1], [0], [0], [1], [0, 0, 1, 1], [], []>} : vector<16x32xbf16>, vector<32x32xbf16>, vector<16x32xf32> -> vector<16x32xf32>
    %c0_58 = arith.constant 0 : index
    %c0_59 = arith.constant 0 : index
    %164 = vector.load %arg15[%c0_58, %c0_59] : memref<1x32xf32, #tpu.memory_space<vmem>>, vector<1x32xf32>
    %165 = vector.broadcast %164 : vector<1x32xf32> to vector<16x32xf32>
    %166 = arith.addf %163, %165 : vector<16x32xf32>
    %c0_60 = arith.constant 0 : index
    %c0_61 = arith.constant 0 : index
    %167 = vector.load %arg14[%c0_60, %c0_61] : memref<32x64xbf16, #tpu.memory_space<vmem>>, vector<32x64xbf16>
    %cst_62 = arith.constant dense<0.000000e+00> : vector<32x64xf32>
    %168 = tpu.matmul %4, %167, %cst_62 {dimension_numbers = #tpu.dot_dimension_numbers<[1], [0], [0], [1], [0, 0, 1, 1], [], []>} : vector<32x32xbf16>, vector<32x64xbf16>, vector<32x64xf32> -> vector<32x64xf32>
    %c0_63 = arith.constant 0 : index
    %c0_64 = arith.constant 0 : index
    %169 = vector.load %arg16[%c0_63, %c0_64] : memref<1x64xf32, #tpu.memory_space<vmem>>, vector<1x64xf32>
    %170 = vector.extract_strided_slice %168 {offsets = [0, 0], sizes = [32, 32], strides = [1, 1]} : vector<32x64xf32> to vector<32x32xf32>
    %171 = vector.extract_strided_slice %169 {offsets = [0, 0], sizes = [1, 32], strides = [1, 1]} : vector<1x64xf32> to vector<1x32xf32>
    %172 = vector.broadcast %171 : vector<1x32xf32> to vector<32x32xf32>
    %173 = arith.addf %170, %172 : vector<32x32xf32>
    %174 = vector.extract_strided_slice %168 {offsets = [0, 32], sizes = [32, 32], strides = [1, 1]} : vector<32x64xf32> to vector<32x32xf32>
    %175 = vector.extract_strided_slice %169 {offsets = [0, 32], sizes = [1, 32], strides = [1, 1]} : vector<1x64xf32> to vector<1x32xf32>
    %176 = vector.broadcast %175 : vector<1x32xf32> to vector<32x32xf32>
    %177 = arith.addf %174, %176 : vector<32x32xf32>
    %c0_65 = arith.constant 0 : index
    %c0_66 = arith.constant 0 : index
    %178 = vector.load %arg17[%c0_65, %c0_66] : memref<32x32xbf16, #tpu.memory_space<vmem>>, vector<32x32xbf16>
    %c0_67 = arith.constant 0 : index
    %c0_68 = arith.constant 0 : index
    %179 = vector.load %arg18[%c0_67, %c0_68] : memref<1x32xf32, #tpu.memory_space<vmem>>, vector<1x32xf32>
    %cst_69 = arith.constant 0.353553385 : f32
    %180 = vector.broadcast %cst_69 : f32 to vector<16x32xf32>
    %181 = arith.mulf %166, %180 : vector<16x32xf32>
    %182 = arith.truncf %181 : vector<16x32xf32> to vector<16x32xbf16>
    %183 = vector.shape_cast %182 : vector<16x32xbf16> to vector<2x8x32xbf16>
    %184 = arith.truncf %173 : vector<32x32xf32> to vector<32x32xbf16>
    %185 = vector.shape_cast %184 : vector<32x32xbf16> to vector<2x16x32xbf16>
    %186 = arith.truncf %177 : vector<32x32xf32> to vector<32x32xbf16>
    %187 = vector.shape_cast %186 : vector<32x32xbf16> to vector<2x16x32xbf16>
    %188 = vector.extract_strided_slice %183 {offsets = [0, 0, 0], sizes = [2, 8, 8], strides = [1, 1, 1]} : vector<2x8x32xbf16> to vector<2x8x8xbf16>
    %189 = vector.extract_strided_slice %185 {offsets = [0, 0, 0], sizes = [2, 16, 8], strides = [1, 1, 1]} : vector<2x16x32xbf16> to vector<2x16x8xbf16>
    %cst_70 = arith.constant dense<0.000000e+00> : vector<2x8x16xf32>
    %190 = tpu.matmul %188, %189, %cst_70 {dimension_numbers = #tpu.dot_dimension_numbers<[2], [2], [1], [1], [0, 0, 0, 1, 1, 1], [0], [0]>} : vector<2x8x8xbf16>, vector<2x16x8xbf16>, vector<2x8x16xf32> -> vector<2x8x16xf32>
    %191 = arith.addf %190, %8 : vector<2x8x16xf32>
    %cst_71 = arith.constant dense<0xFF800000> : vector<2x8xf32>
    %192 = vector.multi_reduction <maximumf>, %191, %cst_71 [2] : vector<2x8x16xf32> to vector<2x8xf32>
    %193 = vector.shape_cast %192 : vector<2x8xf32> to vector<2x8x1xf32>
    %194 = vector.broadcast %193 : vector<2x8x1xf32> to vector<2x8x16xf32>
    %195 = arith.subf %191, %194 : vector<2x8x16xf32>
    %196 = math.exp %195 : vector<2x8x16xf32>
    %cst_72 = arith.constant dense<0.000000e+00> : vector<2x8xf32>
    %197 = vector.multi_reduction <add>, %196, %cst_72 [2] : vector<2x8x16xf32> to vector<2x8xf32>
    %198 = vector.shape_cast %197 : vector<2x8xf32> to vector<2x8x1xf32>
    %199 = tpu.reciprocal %198 {approx = true} : vector<2x8x1xf32> -> vector<2x8x1xf32>
    %200 = vector.broadcast %199 : vector<2x8x1xf32> to vector<2x8x16xf32>
    %201 = arith.mulf %196, %200 : vector<2x8x16xf32>
    %202 = arith.truncf %201 : vector<2x8x16xf32> to vector<2x8x16xbf16>
    %203 = vector.extract_strided_slice %187 {offsets = [0, 0, 0], sizes = [2, 16, 8], strides = [1, 1, 1]} : vector<2x16x32xbf16> to vector<2x16x8xbf16>
    %cst_73 = arith.constant dense<0.000000e+00> : vector<2x8x8xf32>
    %204 = tpu.matmul %202, %203, %cst_73 {dimension_numbers = #tpu.dot_dimension_numbers<[2], [1], [1], [2], [0, 0, 0, 1, 1, 2], [0], [0]>} : vector<2x8x16xbf16>, vector<2x16x8xbf16>, vector<2x8x8xf32> -> vector<2x8x8xf32>
    %205 = arith.truncf %204 : vector<2x8x8xf32> to vector<2x8x8xbf16>
    %206 = vector.extract_strided_slice %183 {offsets = [0, 0, 8], sizes = [2, 8, 8], strides = [1, 1, 1]} : vector<2x8x32xbf16> to vector<2x8x8xbf16>
    %207 = vector.extract_strided_slice %185 {offsets = [0, 0, 8], sizes = [2, 16, 8], strides = [1, 1, 1]} : vector<2x16x32xbf16> to vector<2x16x8xbf16>
    %cst_74 = arith.constant dense<0.000000e+00> : vector<2x8x16xf32>
    %208 = tpu.matmul %206, %207, %cst_74 {dimension_numbers = #tpu.dot_dimension_numbers<[2], [2], [1], [1], [0, 0, 0, 1, 1, 1], [0], [0]>} : vector<2x8x8xbf16>, vector<2x16x8xbf16>, vector<2x8x16xf32> -> vector<2x8x16xf32>
    %209 = arith.addf %208, %8 : vector<2x8x16xf32>
    %cst_75 = arith.constant dense<0xFF800000> : vector<2x8xf32>
    %210 = vector.multi_reduction <maximumf>, %209, %cst_75 [2] : vector<2x8x16xf32> to vector<2x8xf32>
    %211 = vector.shape_cast %210 : vector<2x8xf32> to vector<2x8x1xf32>
    %212 = vector.broadcast %211 : vector<2x8x1xf32> to vector<2x8x16xf32>
    %213 = arith.subf %209, %212 : vector<2x8x16xf32>
    %214 = math.exp %213 : vector<2x8x16xf32>
    %cst_76 = arith.constant dense<0.000000e+00> : vector<2x8xf32>
    %215 = vector.multi_reduction <add>, %214, %cst_76 [2] : vector<2x8x16xf32> to vector<2x8xf32>
    %216 = vector.shape_cast %215 : vector<2x8xf32> to vector<2x8x1xf32>
    %217 = tpu.reciprocal %216 {approx = true} : vector<2x8x1xf32> -> vector<2x8x1xf32>
    %218 = vector.broadcast %217 : vector<2x8x1xf32> to vector<2x8x16xf32>
    %219 = arith.mulf %214, %218 : vector<2x8x16xf32>
    %220 = arith.truncf %219 : vector<2x8x16xf32> to vector<2x8x16xbf16>
    %221 = vector.extract_strided_slice %187 {offsets = [0, 0, 8], sizes = [2, 16, 8], strides = [1, 1, 1]} : vector<2x16x32xbf16> to vector<2x16x8xbf16>
    %cst_77 = arith.constant dense<0.000000e+00> : vector<2x8x8xf32>
    %222 = tpu.matmul %220, %221, %cst_77 {dimension_numbers = #tpu.dot_dimension_numbers<[2], [1], [1], [2], [0, 0, 0, 1, 1, 2], [0], [0]>} : vector<2x8x16xbf16>, vector<2x16x8xbf16>, vector<2x8x8xf32> -> vector<2x8x8xf32>
    %223 = arith.truncf %222 : vector<2x8x8xf32> to vector<2x8x8xbf16>
    %224 = vector.extract_strided_slice %183 {offsets = [0, 0, 16], sizes = [2, 8, 8], strides = [1, 1, 1]} : vector<2x8x32xbf16> to vector<2x8x8xbf16>
    %225 = vector.extract_strided_slice %185 {offsets = [0, 0, 16], sizes = [2, 16, 8], strides = [1, 1, 1]} : vector<2x16x32xbf16> to vector<2x16x8xbf16>
    %cst_78 = arith.constant dense<0.000000e+00> : vector<2x8x16xf32>
    %226 = tpu.matmul %224, %225, %cst_78 {dimension_numbers = #tpu.dot_dimension_numbers<[2], [2], [1], [1], [0, 0, 0, 1, 1, 1], [0], [0]>} : vector<2x8x8xbf16>, vector<2x16x8xbf16>, vector<2x8x16xf32> -> vector<2x8x16xf32>
    %227 = arith.addf %226, %8 : vector<2x8x16xf32>
    %cst_79 = arith.constant dense<0xFF800000> : vector<2x8xf32>
    %228 = vector.multi_reduction <maximumf>, %227, %cst_79 [2] : vector<2x8x16xf32> to vector<2x8xf32>
    %229 = vector.shape_cast %228 : vector<2x8xf32> to vector<2x8x1xf32>
    %230 = vector.broadcast %229 : vector<2x8x1xf32> to vector<2x8x16xf32>
    %231 = arith.subf %227, %230 : vector<2x8x16xf32>
    %232 = math.exp %231 : vector<2x8x16xf32>
    %cst_80 = arith.constant dense<0.000000e+00> : vector<2x8xf32>
    %233 = vector.multi_reduction <add>, %232, %cst_80 [2] : vector<2x8x16xf32> to vector<2x8xf32>
    %234 = vector.shape_cast %233 : vector<2x8xf32> to vector<2x8x1xf32>
    %235 = tpu.reciprocal %234 {approx = true} : vector<2x8x1xf32> -> vector<2x8x1xf32>
    %236 = vector.broadcast %235 : vector<2x8x1xf32> to vector<2x8x16xf32>
    %237 = arith.mulf %232, %236 : vector<2x8x16xf32>
    %238 = arith.truncf %237 : vector<2x8x16xf32> to vector<2x8x16xbf16>
    %239 = vector.extract_strided_slice %187 {offsets = [0, 0, 16], sizes = [2, 16, 8], strides = [1, 1, 1]} : vector<2x16x32xbf16> to vector<2x16x8xbf16>
    %cst_81 = arith.constant dense<0.000000e+00> : vector<2x8x8xf32>
    %240 = tpu.matmul %238, %239, %cst_81 {dimension_numbers = #tpu.dot_dimension_numbers<[2], [1], [1], [2], [0, 0, 0, 1, 1, 2], [0], [0]>} : vector<2x8x16xbf16>, vector<2x16x8xbf16>, vector<2x8x8xf32> -> vector<2x8x8xf32>
    %241 = arith.truncf %240 : vector<2x8x8xf32> to vector<2x8x8xbf16>
    %242 = vector.extract_strided_slice %183 {offsets = [0, 0, 24], sizes = [2, 8, 8], strides = [1, 1, 1]} : vector<2x8x32xbf16> to vector<2x8x8xbf16>
    %243 = vector.extract_strided_slice %185 {offsets = [0, 0, 24], sizes = [2, 16, 8], strides = [1, 1, 1]} : vector<2x16x32xbf16> to vector<2x16x8xbf16>
    %cst_82 = arith.constant dense<0.000000e+00> : vector<2x8x16xf32>
    %244 = tpu.matmul %242, %243, %cst_82 {dimension_numbers = #tpu.dot_dimension_numbers<[2], [2], [1], [1], [0, 0, 0, 1, 1, 1], [0], [0]>} : vector<2x8x8xbf16>, vector<2x16x8xbf16>, vector<2x8x16xf32> -> vector<2x8x16xf32>
    %245 = arith.addf %244, %8 : vector<2x8x16xf32>
    %cst_83 = arith.constant dense<0xFF800000> : vector<2x8xf32>
    %246 = vector.multi_reduction <maximumf>, %245, %cst_83 [2] : vector<2x8x16xf32> to vector<2x8xf32>
    %247 = vector.shape_cast %246 : vector<2x8xf32> to vector<2x8x1xf32>
    %248 = vector.broadcast %247 : vector<2x8x1xf32> to vector<2x8x16xf32>
    %249 = arith.subf %245, %248 : vector<2x8x16xf32>
    %250 = math.exp %249 : vector<2x8x16xf32>
    %cst_84 = arith.constant dense<0.000000e+00> : vector<2x8xf32>
    %251 = vector.multi_reduction <add>, %250, %cst_84 [2] : vector<2x8x16xf32> to vector<2x8xf32>
    %252 = vector.shape_cast %251 : vector<2x8xf32> to vector<2x8x1xf32>
    %253 = tpu.reciprocal %252 {approx = true} : vector<2x8x1xf32> -> vector<2x8x1xf32>
    %254 = vector.broadcast %253 : vector<2x8x1xf32> to vector<2x8x16xf32>
    %255 = arith.mulf %250, %254 : vector<2x8x16xf32>
    %256 = arith.truncf %255 : vector<2x8x16xf32> to vector<2x8x16xbf16>
    %257 = vector.extract_strided_slice %187 {offsets = [0, 0, 24], sizes = [2, 16, 8], strides = [1, 1, 1]} : vector<2x16x32xbf16> to vector<2x16x8xbf16>
    %cst_85 = arith.constant dense<0.000000e+00> : vector<2x8x8xf32>
    %258 = tpu.matmul %256, %257, %cst_85 {dimension_numbers = #tpu.dot_dimension_numbers<[2], [1], [1], [2], [0, 0, 0, 1, 1, 2], [0], [0]>} : vector<2x8x16xbf16>, vector<2x16x8xbf16>, vector<2x8x8xf32> -> vector<2x8x8xf32>
    %259 = arith.truncf %258 : vector<2x8x8xf32> to vector<2x8x8xbf16>
    %260 = tpu.concatenate %205, %223, %241, %259 in 2 : vector<2x8x8xbf16>, vector<2x8x8xbf16>, vector<2x8x8xbf16>, vector<2x8x8xbf16> -> vector<2x8x32xbf16>
    %261 = vector.shape_cast %260 : vector<2x8x32xbf16> to vector<16x32xbf16>
    %cst_86 = arith.constant dense<0.000000e+00> : vector<16x32xf32>
    %262 = tpu.matmul %261, %178, %cst_86 {dimension_numbers = #tpu.dot_dimension_numbers<[1], [0], [0], [1], [0, 0, 1, 1], [], []>} : vector<16x32xbf16>, vector<32x32xbf16>, vector<16x32xf32> -> vector<16x32xf32>
    %263 = vector.broadcast %179 : vector<1x32xf32> to vector<16x32xf32>
    %264 = arith.addf %262, %263 : vector<16x32xf32>
    %265 = arith.addf %136, %264 : vector<16x32xf32>
    %c0_87 = arith.constant 0 : index
    %c0_88 = arith.constant 0 : index
    %266 = vector.load %arg19[%c0_87, %c0_88] : memref<1x32xf32, #tpu.memory_space<vmem>>, vector<1x32xf32>
    %c0_89 = arith.constant 0 : index
    %c0_90 = arith.constant 0 : index
    %267 = vector.load %arg20[%c0_89, %c0_90] : memref<1x32xf32, #tpu.memory_space<vmem>>, vector<1x32xf32>
    %cst_91 = arith.constant dense<0.000000e+00> : vector<16xf32>
    %268 = vector.multi_reduction <add>, %265, %cst_91 [1] : vector<16x32xf32> to vector<16xf32>
    %269 = vector.shape_cast %268 : vector<16xf32> to vector<16x1xf32>
    %cst_92 = arith.constant 3.200000e+01 : f32
    %270 = vector.broadcast %cst_92 : f32 to vector<16x1xf32>
    %271 = arith.divf %269, %270 : vector<16x1xf32>
    %272 = vector.broadcast %271 : vector<16x1xf32> to vector<16x32xf32>
    %273 = arith.subf %265, %272 : vector<16x32xf32>
    %274 = arith.mulf %273, %273 : vector<16x32xf32>
    %cst_93 = arith.constant dense<0.000000e+00> : vector<16xf32>
    %275 = vector.multi_reduction <add>, %274, %cst_93 [1] : vector<16x32xf32> to vector<16xf32>
    %276 = vector.shape_cast %275 : vector<16xf32> to vector<16x1xf32>
    %cst_94 = arith.constant 3.200000e+01 : f32
    %277 = vector.broadcast %cst_94 : f32 to vector<16x1xf32>
    %278 = arith.divf %276, %277 : vector<16x1xf32>
    %279 = vector.broadcast %271 : vector<16x1xf32> to vector<16x32xf32>
    %280 = arith.subf %265, %279 : vector<16x32xf32>
    %cst_95 = arith.constant 9.99999974E-6 : f32
    %281 = vector.broadcast %cst_95 : f32 to vector<16x1xf32>
    %282 = arith.addf %278, %281 : vector<16x1xf32>
    %283 = math.rsqrt %282 : vector<16x1xf32>
    %284 = vector.broadcast %283 : vector<16x1xf32> to vector<16x32xf32>
    %285 = arith.mulf %280, %284 : vector<16x32xf32>
    %286 = vector.broadcast %266 : vector<1x32xf32> to vector<16x32xf32>
    %287 = arith.mulf %285, %286 : vector<16x32xf32>
    %288 = vector.broadcast %267 : vector<1x32xf32> to vector<16x32xf32>
    %289 = arith.addf %287, %288 : vector<16x32xf32>
    %290 = arith.truncf %289 : vector<16x32xf32> to vector<16x32xbf16>
    %c0_96 = arith.constant 0 : index
    %c0_97 = arith.constant 0 : index
    %291 = vector.load %arg21[%c0_96, %c0_97] : memref<32x128xbf16, #tpu.memory_space<vmem>>, vector<32x128xbf16>
    %cst_98 = arith.constant dense<0.000000e+00> : vector<16x128xf32>
    %292 = tpu.matmul %290, %291, %cst_98 {dimension_numbers = #tpu.dot_dimension_numbers<[1], [0], [0], [1], [0, 0, 1, 1], [], []>} : vector<16x32xbf16>, vector<32x128xbf16>, vector<16x128xf32> -> vector<16x128xf32>
    %c0_99 = arith.constant 0 : index
    %c0_100 = arith.constant 0 : index
    %293 = vector.load %arg22[%c0_99, %c0_100] : memref<1x128xf32, #tpu.memory_space<vmem>>, vector<1x128xf32>
    %294 = vector.broadcast %293 : vector<1x128xf32> to vector<16x128xf32>
    %295 = arith.addf %292, %294 : vector<16x128xf32>
    %cst_101 = arith.constant 1.702000e+00 : f32
    %296 = vector.broadcast %cst_101 : f32 to vector<16x128xf32>
    %297 = arith.mulf %296, %295 : vector<16x128xf32>
    %298 = arith.negf %297 : vector<16x128xf32>
    %299 = math.exp %298 : vector<16x128xf32>
    %cst_102 = arith.constant 1.000000e+00 : f32
    %300 = vector.broadcast %cst_102 : f32 to vector<16x128xf32>
    %301 = arith.addf %300, %299 : vector<16x128xf32>
    %302 = arith.divf %300, %301 : vector<16x128xf32>
    %303 = arith.mulf %295, %302 : vector<16x128xf32>
    %304 = arith.truncf %303 : vector<16x128xf32> to vector<16x128xbf16>
    %c0_103 = arith.constant 0 : index
    %c0_104 = arith.constant 0 : index
    %305 = vector.load %arg23[%c0_103, %c0_104] : memref<128x32xbf16, #tpu.memory_space<vmem>>, vector<128x32xbf16>
    %cst_105 = arith.constant dense<0.000000e+00> : vector<16x32xf32>
    %306 = tpu.matmul %304, %305, %cst_105 {dimension_numbers = #tpu.dot_dimension_numbers<[1], [0], [0], [1], [0, 0, 1, 1], [], []>} : vector<16x128xbf16>, vector<128x32xbf16>, vector<16x32xf32> -> vector<16x32xf32>
    %c0_106 = arith.constant 0 : index
    %c0_107 = arith.constant 0 : index
    %307 = vector.load %arg24[%c0_106, %c0_107] : memref<1x32xf32, #tpu.memory_space<vmem>>, vector<1x32xf32>
    %308 = vector.broadcast %307 : vector<1x32xf32> to vector<16x32xf32>
    %309 = arith.addf %306, %308 : vector<16x32xf32>
    %310 = arith.addf %265, %309 : vector<16x32xf32>
    %311 = vector.shape_cast %310 : vector<16x32xf32> to vector<2x8x32xf32>
    %c0_108 = arith.constant 0 : index
    %c0_109 = arith.constant 0 : index
    %c0_110 = arith.constant 0 : index
    %312 = vector.load %arg25[%c0_108, %c0_109, %c0_110] : memref<2x8x32xf32, #tpu.memory_space<vmem>>, vector<2x8x32xf32>
    tpu.vector_store %arg25[%c0_108, %c0_109, %c0_110], %311 {strides = array<i32>} : memref<2x8x32xf32, #tpu.memory_space<vmem>>, vector<2x8x32xf32>,
    return
  }
  func.func @transform_0(%arg0: i32) -> (i32, i32, i32) {
    %c0_i32 = arith.constant 0 : i32
    %c0_i32_0 = arith.constant 0 : i32
    %c0_i32_1 = arith.constant 0 : i32
    return %arg0, %c0_i32, %c0_i32_0 : i32, i32, i32
  }
  func.func @transform_1(%arg0: i32) -> (i32, i32, i32) {
    %c0_i32 = arith.constant 0 : i32
    %c0_i32_0 = arith.constant 0 : i32
    %c0_i32_1 = arith.constant 0 : i32
    return %arg0, %c0_i32, %c0_i32_0 : i32, i32, i32
  }
  func.func @transform_2(%arg0: i32) -> (i32, i32, i32) {
    %c0_i32 = arith.constant 0 : i32
    %c0_i32_0 = arith.constant 0 : i32
    %c0_i32_1 = arith.constant 0 : i32
    return %arg0, %c0_i32, %c0_i32_0 : i32, i32, i32
  }
  func.func @transform_3(%arg0: i32) -> (i32, i32, i32) {
    %c0_i32 = arith.constant 0 : i32
    %c0_i32_0 = arith.constant 0 : i32
    %c0_i32_1 = arith.constant 0 : i32
    return %arg0, %c0_i32, %c0_i32_0 : i32, i32, i32
  }
  func.func @transform_4(%arg0: i32) -> (i32, i32) {
    %c0_i32 = arith.constant 0 : i32
    %c0_i32_0 = arith.constant 0 : i32
    %c0_i32_1 = arith.constant 0 : i32
    return %c0_i32, %c0_i32_0 : i32, i32
  }
  func.func @transform_5(%arg0: i32) -> (i32, i32) {
    %c0_i32 = arith.constant 0 : i32
    %c0_i32_0 = arith.constant 0 : i32
    %c0_i32_1 = arith.constant 0 : i32
    return %c0_i32, %c0_i32_0 : i32, i32
  }
  func.func @transform_6(%arg0: i32) -> (i32, i32) {
    %c0_i32 = arith.constant 0 : i32
    %c0_i32_0 = arith.constant 0 : i32
    %c0_i32_1 = arith.constant 0 : i32
    return %c0_i32, %c0_i32_0 : i32, i32
  }
  func.func @transform_7(%arg0: i32) -> (i32, i32) {
    %c0_i32 = arith.constant 0 : i32
    %c0_i32_0 = arith.constant 0 : i32
    %c0_i32_1 = arith.constant 0 : i32
    return %c0_i32, %c0_i32_0 : i32, i32
  }
  func.func @transform_8(%arg0: i32) -> (i32, i32) {
    %c0_i32 = arith.constant 0 : i32
    %c0_i32_0 = arith.constant 0 : i32
    %c0_i32_1 = arith.constant 0 : i32
    return %c0_i32, %c0_i32_0 : i32, i32
  }
  func.func @transform_9(%arg0: i32) -> (i32, i32) {
    %c0_i32 = arith.constant 0 : i32
    %c0_i32_0 = arith.constant 0 : i32
    %c0_i32_1 = arith.constant 0 : i32
    return %c0_i32, %c0_i32_0 : i32, i32
  }
  func.func @transform_10(%arg0: i32) -> (i32, i32) {
    %c0_i32 = arith.constant 0 : i32
    %c0_i32_0 = arith.constant 0 : i32
    %c0_i32_1 = arith.constant 0 : i32
    return %c0_i32, %c0_i32_0 : i32, i32
  }
  func.func @transform_11(%arg0: i32) -> (i32, i32) {
    %c0_i32 = arith.constant 0 : i32
    %c0_i32_0 = arith.constant 0 : i32
    %c0_i32_1 = arith.constant 0 : i32
    return %c0_i32, %c0_i32_0 : i32, i32
  }
  func.func @transform_12(%arg0: i32) -> (i32, i32) {
    %c0_i32 = arith.constant 0 : i32
    %c0_i32_0 = arith.constant 0 : i32
    %c0_i32_1 = arith.constant 0 : i32
    return %c0_i32, %c0_i32_0 : i32, i32
  }
  func.func @transform_13(%arg0: i32) -> (i32, i32) {
    %c0_i32 = arith.constant 0 : i32
    %c0_i32_0 = arith.constant 0 : i32
    %c0_i32_1 = arith.constant 0 : i32
    return %c0_i32, %c0_i32_0 : i32, i32
  }
  func.func @transform_14(%arg0: i32) -> (i32, i32) {
    %c0_i32 = arith.constant 0 : i32
    %c0_i32_0 = arith.constant 0 : i32
    %c0_i32_1 = arith.constant 0 : i32
    return %c0_i32, %c0_i32_0 : i32, i32
  }
  func.func @transform_15(%arg0: i32) -> (i32, i32) {
    %c0_i32 = arith.constant 0 : i32
    %c0_i32_0 = arith.constant 0 : i32
    %c0_i32_1 = arith.constant 0 : i32
    return %c0_i32, %c0_i32_0 : i32, i32
  }
  func.func @transform_16(%arg0: i32) -> (i32, i32) {
    %c0_i32 = arith.constant 0 : i32
    %c0_i32_0 = arith.constant 0 : i32
    %c0_i32_1 = arith.constant 0 : i32
    return %c0_i32, %c0_i32_0 : i32, i32
  }
  func.func @transform_17(%arg0: i32) -> (i32, i32) {
    %c0_i32 = arith.constant 0 : i32
    %c0_i32_0 = arith.constant 0 : i32
    %c0_i32_1 = arith.constant 0 : i32
    return %c0_i32, %c0_i32_0 : i32, i32
  }
  func.func @transform_18(%arg0: i32) -> (i32, i32) {
    %c0_i32 = arith.constant 0 : i32
    %c0_i32_0 = arith.constant 0 : i32
    %c0_i32_1 = arith.constant 0 : i32
    return %c0_i32, %c0_i32_0 : i32, i32
  }
  func.func @transform_19(%arg0: i32) -> (i32, i32) {
    %c0_i32 = arith.constant 0 : i32
    %c0_i32_0 = arith.constant 0 : i32
    %c0_i32_1 = arith.constant 0 : i32
    return %c0_i32, %c0_i32_0 : i32, i32
  }
  func.func @transform_20(%arg0: i32) -> (i32, i32) {
    %c0_i32 = arith.constant 0 : i32
    %c0_i32_0 = arith.constant 0 : i32
    %c0_i32_1 = arith.constant 0 : i32
    return %c0_i32, %c0_i32_0 : i32, i32
  }
  func.func @transform_21(%arg0: i32) -> (i32, i32) {
    %c0_i32 = arith.constant 0 : i32
    %c0_i32_0 = arith.constant 0 : i32
    %c0_i32_1 = arith.constant 0 : i32
    return %c0_i32, %c0_i32_0 : i32, i32
  }
  func.func @transform_22(%arg0: i32) -> (i32, i32) {
    %c0_i32 = arith.constant 0 : i32
    %c0_i32_0 = arith.constant 0 : i32
    %c0_i32_1 = arith.constant 0 : i32
    return %c0_i32, %c0_i32_0 : i32, i32
  }
  func.func @transform_23(%arg0: i32) -> (i32, i32) {
    %c0_i32 = arith.constant 0 : i32
    %c0_i32_0 = arith.constant 0 : i32
    %c0_i32_1 = arith.constant 0 : i32
    return %c0_i32, %c0_i32_0 : i32, i32
  }
  func.func @transform_24(%arg0: i32) -> (i32, i32, i32) {
    %c0_i32 = arith.constant 0 : i32
    %c0_i32_0 = arith.constant 0 : i32
    %c0_i32_1 = arith.constant 0 : i32
    return %arg0, %c0_i32, %c0_i32_0 : i32, i32, i32
  }
}

</mosaic_0001>

<llo_original>
// kernel: tpu_custom_call.1
$region0: #{tpu_custom_call.1}
  #allocation0 [shape = 'u32[]', space=smem, size = 0x4, offset = 0x4, fixed_abs, tag = 'smem constant byte address 0x4 - core index']
  #allocation1 [shape = 'u32[72,128]{1,0:T(1,128)}', space=vmem, size = 0x9000, scoped, tag = 'internal scratch']
  %s0 = inlined_call_operand.hbm [shape: bf16[2,8,32], index: 0, kind: input, shape index: {}]
  %s1 = inlined_call_operand.vmem [shape: bf16[2,16,32], index: 1, kind: input, shape index: {}]
  %s2 = inlined_call_operand.hbm [shape: bf16[2,8,8], index: 2, kind: input, shape index: {}]
  %s3 = inlined_call_operand.hbm [shape: bf16[2,8,16], index: 3, kind: input, shape index: {}]
  %s4 = inlined_call_operand.vmem [shape: f32[1,32], index: 4, kind: input, shape index: {}]
  %s5 = inlined_call_operand.vmem [shape: f32[1,32], index: 5, kind: input, shape index: {}]
  %s6 = inlined_call_operand.vmem [shape: bf16[32,96], index: 6, kind: input, shape index: {}]
  %s7 = inlined_call_operand.vmem [shape: f32[1,96], index: 7, kind: input, shape index: {}]
  %s8 = inlined_call_operand.vmem [shape: bf16[32,32], index: 8, kind: input, shape index: {}]
  %s9 = inlined_call_operand.vmem [shape: f32[1,32], index: 9, kind: input, shape index: {}]
  %s10 = inlined_call_operand.vmem [shape: f32[1,32], index: 10, kind: input, shape index: {}]
  %s11 = inlined_call_operand.hbm [shape: f32[1,32], index: 11, kind: input, shape index: {}]
  %s12 = inlined_call_operand.vmem [shape: bf16[32,32], index: 12, kind: input, shape index: {}]
  %s13 = inlined_call_operand.vmem [shape: bf16[32,64], index: 13, kind: input, shape index: {}]
  %s14 = inlined_call_operand.hbm [shape: f32[1,32], index: 14, kind: input, shape index: {}]
  %s15 = inlined_call_operand.hbm [shape: f32[1,64], index: 15, kind: input, shape index: {}]
  %s16 = inlined_call_operand.hbm [shape: bf16[32,32], index: 16, kind: input, shape index: {}]
  %s17 = inlined_call_operand.hbm [shape: f32[1,32], index: 17, kind: input, shape index: {}]
  %s18 = inlined_call_operand.hbm [shape: f32[1,32], index: 18, kind: input, shape index: {}]
  %s19 = inlined_call_operand.hbm [shape: f32[1,32], index: 19, kind: input, shape index: {}]
  %s20 = inlined_call_operand.hbm [shape: bf16[32,128], index: 20, kind: input, shape index: {}]
  %s21 = inlined_call_operand.hbm [shape: f32[1,128], index: 21, kind: input, shape index: {}]
  %s22 = inlined_call_operand.vmem [shape: bf16[128,32], index: 22, kind: input, shape index: {}]
  %s23 = inlined_call_operand.hbm [shape: f32[1,32], index: 23, kind: input, shape index: {}]
  %s24 = inlined_call_operand.hbm [shape: f32[2,8,32], index: 24, kind: output, shape index: {}]
  %s25 = sld [smem:[#allocation0]]
  $region158: #{tpu_custom_call.1} parent=0
    _
  %s27 = ssub.s32 1, %s25
  %s28 = scalar_select 0, %s27, %s25
  $region1: #{tpu_custom_call.1} parent=0
    #allocation2 [shape = 'u8[4096]{0}', space=vmem, size = 0x1000, scoped, tag = 'input window, operand 0, single buffered']
    #allocation3 [shape = 's32[1]{0}', space=sflag, size = 0x4, scoped, tag = 'scoped memory for tpu_custom_call.1']
    #allocation4 [shape = 's32[1]{0}', space=sflag, size = 0x4, scoped, tag = 'scoped memory for tpu_custom_call.1']
    #allocation5 [shape = 'u8[4096]{0}', space=vmem, size = 0x1000, scoped, tag = 'input window, operand 2, single buffered']
    #allocation6 [shape = 's32[1]{0}', space=sflag, size = 0x4, scoped, tag = 'scoped memory for tpu_custom_call.1']
    #allocation7 [shape = 'u8[4096]{0}', space=vmem, size = 0x1000, scoped, tag = 'input window, operand 3, single buffered']
    #allocation8 [shape = 'u8[512]{0}', space=vmem, size = 0x400, scoped, tag = 'input window, operand 11, single buffered']
    #allocation9 [shape = 's32[1]{0}', space=sflag, size = 0x4, scoped, tag = 'scoped memory for tpu_custom_call.1']
    #allocation10 [shape = 'u8[512]{0}', space=vmem, size = 0x400, scoped, tag = 'input window, operand 14, single buffered']
    #allocation11 [shape = 'u8[512]{0}', space=vmem, size = 0x400, scoped, tag = 'input window, operand 15, single buffered']
    #allocation12 [shape = 's32[1]{0}', space=sflag, size = 0x4, scoped, tag = 'scoped memory for tpu_custom_call.1']
    #allocation13 [shape = 'u8[8192]{0}', space=vmem, size = 0x2000, scoped, tag = 'input window, operand 16, single buffered']
    #allocation14 [shape = 'u8[512]{0}', space=vmem, size = 0x400, scoped, tag = 'input window, operand 17, single buffered']
    #allocation15 [shape = 's32[1]{0}', space=sflag, size = 0x4, scoped, tag = 'scoped memory for tpu_custom_call.1']
    #allocation16 [shape = 'u8[512]{0}', space=vmem, size = 0x400, scoped, tag = 'input window, operand 18, single buffered']
    #allocation17 [shape = 'u8[512]{0}', space=vmem, size = 0x400, scoped, tag = 'input window, operand 19, single buffered']
    #allocation18 [shape = 's32[1]{0}', space=sflag, size = 0x4, scoped, tag = 'scoped memory for tpu_custom_call.1']
    #allocation19 [shape = 'u8[8192]{0}', space=vmem, size = 0x2000, scoped, tag = 'input window, operand 20, single buffered']
    #allocation20 [shape = 'u8[512]{0}', space=vmem, size = 0x400, scoped, tag = 'input window, operand 21, single buffered']
    #allocation21 [shape = 's32[1]{0}', space=sflag, size = 0x4, scoped, tag = 'scoped memory for tpu_custom_call.1']
    #allocation22 [shape = 'u8[512]{0}', space=vmem, size = 0x400, scoped, tag = 'input window, operand 23, single buffered']
    #allocation23 [shape = 'u8[8192]{0}', space=vmem, size = 0x2000, scoped, tag = 'output window, operand 0, single buffered']
    %29 = vsyncpa [#allocation3], 0
    %30 = vsyncpa [#allocation6], 0
    %31 = vsyncpa [#allocation9], 0
    %32 = vsyncpa [#allocation12], 0
    %33 = vsyncpa [#allocation15], 0
    %34 = vsyncpa [#allocation18], 0
    %35 = vsyncpa [#allocation21], 0
    %36 = vsyncpa [#allocation4], 0
    // Predicated region
    $region2: #{tpu_custom_call.1} parent=1 // pred_check
      _
    $region3: #{tpu_custom_call.1} parent=1 // pred_check_branch
      %38 = sbr.rel (0) target = $region5
    $region4: #{tpu_custom_call.1} parent=1 // pred_region
      %40 = vsyncadd [#allocation3], 0
      %s41 = sshll.u32 %s0, 4
      %s42 = int_to_ptr.hbm [resolvable:$true] %s41
      %s43 = sshll.u32 [#allocation2], 4
      %s44 = int_to_ptr.vmem [resolvable:$true] %s43
      %49 = dma.hbm_to_vmem [thread:$0]  %s42, 128, %s44, [#allocation3], 64, 64, 4
    $region5: #{tpu_custom_call.1} parent=1 // pred_fallthru
      _
    // Predicated region
    $region6: #{tpu_custom_call.1} parent=1 // pred_check
      _
    $region7: #{tpu_custom_call.1} parent=1 // pred_check_branch
      %51 = sbr.rel (0) target = $region9
    $region8: #{tpu_custom_call.1} parent=1 // pred_region
      _
    $region9: #{tpu_custom_call.1} parent=1 // pred_fallthru
      _
    // Predicated region
    $region10: #{tpu_custom_call.1} parent=1 // pred_check
      _
    $region11: #{tpu_custom_call.1} parent=1 // pred_check_branch
      %53 = sbr.rel (0) target = $region13
    $region12: #{tpu_custom_call.1} parent=1 // pred_region
      %55 = vsyncadd [#allocation6], 0
      %s56 = sshll.u32 %s2, 4
      %s57 = int_to_ptr.hbm [resolvable:$true] %s56
      %s58 = sshll.u32 [#allocation5], 4
      %s59 = int_to_ptr.vmem [resolvable:$true] %s58
      %64 = dma.hbm_to_vmem [thread:$0]  %s57, 128, %s59, [#allocation6], 64, 64, 4
    $region13: #{tpu_custom_call.1} parent=1 // pred_fallthru
      _
    // Predicated region
    $region14: #{tpu_custom_call.1} parent=1 // pred_check
      _
    $region15: #{tpu_custom_call.1} parent=1 // pred_check_branch
      %66 = sbr.rel (0) target = $region17
    $region16: #{tpu_custom_call.1} parent=1 // pred_region
      %68 = vsyncadd [#allocation6], 0
      %s69 = sshll.u32 %s3, 4
      %s70 = int_to_ptr.hbm [resolvable:$true] %s69
      %s71 = sshll.u32 [#allocation7], 4
      %s72 = int_to_ptr.vmem [resolvable:$true] %s71
      %77 = dma.hbm_to_vmem [thread:$0]  %s70, 128, %s72, [#allocation6], 64, 64, 4
    $region17: #{tpu_custom_call.1} parent=1 // pred_fallthru
      _
    // Predicated region
    $region18: #{tpu_custom_call.1} parent=1 // pred_check
      _
    $region19: #{tpu_custom_call.1} parent=1 // pred_check_branch
      %79 = sbr.rel (0) target = $region21
    $region20: #{tpu_custom_call.1} parent=1 // pred_region
      _
    $region21: #{tpu_custom_call.1} parent=1 // pred_fallthru
      _
    // Predicated region
    $region22: #{tpu_custom_call.1} parent=1 // pred_check
      _
    $region23: #{tpu_custom_call.1} parent=1 // pred_check_branch
      %81 = sbr.rel (0) target = $region25
    $region24: #{tpu_custom_call.1} parent=1 // pred_region
      _
    $region25: #{tpu_custom_call.1} parent=1 // pred_fallthru
      _
    // Predicated region
    $region26: #{tpu_custom_call.1} parent=1 // pred_check
      _
    $region27: #{tpu_custom_call.1} parent=1 // pred_check_branch
      %83 = sbr.rel (0) target = $region29
    $region28: #{tpu_custom_call.1} parent=1 // pred_region
      _
    $region29: #{tpu_custom_call.1} parent=1 // pred_fallthru
      _
    // Predicated region
    $region30: #{tpu_custom_call.1} parent=1 // pred_check
      _
    $region31: #{tpu_custom_call.1} parent=1 // pred_check_branch
      %85 = sbr.rel (0) target = $region33
    $region32: #{tpu_custom_call.1} parent=1 // pred_region
      _
    $region33: #{tpu_custom_call.1} parent=1 // pred_fallthru
      _
    // Predicated region
    $region34: #{tpu_custom_call.1} parent=1 // pred_check
      _
    $region35: #{tpu_custom_call.1} parent=1 // pred_check_branch
      %87 = sbr.rel (0) target = $region37
    $region36: #{tpu_custom_call.1} parent=1 // pred_region
      _
    $region37: #{tpu_custom_call.1} parent=1 // pred_fallthru
      _
    // Predicated region
    $region38: #{tpu_custom_call.1} parent=1 // pred_check
      _
    $region39: #{tpu_custom_call.1} parent=1 // pred_check_branch
      %89 = sbr.rel (0) target = $region41
    $region40: #{tpu_custom_call.1} parent=1 // pred_region
      _
    $region41: #{tpu_custom_call.1} parent=1 // pred_fallthru
      _
    // Predicated region
    $region42: #{tpu_custom_call.1} parent=1 // pred_check
      _
    $region43: #{tpu_custom_call.1} parent=1 // pred_check_branch
      %91 = sbr.rel (0) target = $region45
    $region44: #{tpu_custom_call.1} parent=1 // pred_region
      _
    $region45: #{tpu_custom_call.1} parent=1 // pred_fallthru
      _
    // Predicated region
    $region46: #{tpu_custom_call.1} parent=1 // pred_check
      _
    $region47: #{tpu_custom_call.1} parent=1 // pred_check_branch
      %93 = sbr.rel (0) target = $region49
    $region48: #{tpu_custom_call.1} parent=1 // pred_region
      %95 = vsyncadd [#allocation9], 0
      %s97 = sshll.u32 %s11, 4
      %s98 = int_to_ptr.hbm [resolvable:$true] %s97
      %s99 = sshll.u32 [#allocation8], 4
      %s100 = int_to_ptr.vmem [resolvable:$true] %s99
      %102 = dma.hbm_to_vmem [thread:$0]  %s98, 16, %s100, [#allocation9]
    $region49: #{tpu_custom_call.1} parent=1 // pred_fallthru
      _
    // Predicated region
    $region50: #{tpu_custom_call.1} parent=1 // pred_check
      _
    $region51: #{tpu_custom_call.1} parent=1 // pred_check_branch
      %104 = sbr.rel (0) target = $region53
    $region52: #{tpu_custom_call.1} parent=1 // pred_region
      _
    $region53: #{tpu_custom_call.1} parent=1 // pred_fallthru
      _
    // Predicated region
    $region54: #{tpu_custom_call.1} parent=1 // pred_check
      _
    $region55: #{tpu_custom_call.1} parent=1 // pred_check_branch
      %106 = sbr.rel (0) target = $region57
    $region56: #{tpu_custom_call.1} parent=1 // pred_region
      _
    $region57: #{tpu_custom_call.1} parent=1 // pred_fallthru
      _
    // Predicated region
    $region58: #{tpu_custom_call.1} parent=1 // pred_check
      _
    $region59: #{tpu_custom_call.1} parent=1 // pred_check_branch
      %108 = sbr.rel (0) target = $region61
    $region60: #{tpu_custom_call.1} parent=1 // pred_region
      %110 = vsyncadd [#allocation9], 0
      %s112 = sshll.u32 %s14, 4
      %s113 = int_to_ptr.hbm [resolvable:$true] %s112
      %s114 = sshll.u32 [#allocation10], 4
      %s115 = int_to_ptr.vmem [resolvable:$true] %s114
      %117 = dma.hbm_to_vmem [thread:$0]  %s113, 16, %s115, [#allocation9]
    $region61: #{tpu_custom_call.1} parent=1 // pred_fallthru
      _
    // Predicated region
    $region62: #{tpu_custom_call.1} parent=1 // pred_check
      _
    $region63: #{tpu_custom_call.1} parent=1 // pred_check_branch
      %119 = sbr.rel (0) target = $region65
    $region64: #{tpu_custom_call.1} parent=1 // pred_region
      %121 = vsyncadd [#allocation12], 0
      %s123 = sshll.u32 %s15, 4
      %s124 = int_to_ptr.hbm [resolvable:$true] %s123
      %s125 = sshll.u32 [#allocation11], 4
      %s126 = int_to_ptr.vmem [resolvable:$true] %s125
      %128 = dma.hbm_to_vmem [thread:$0]  %s124, 16, %s126, [#allocation12]
    $region65: #{tpu_custom_call.1} parent=1 // pred_fallthru
      _
    // Predicated region
    $region66: #{tpu_custom_call.1} parent=1 // pred_check
      _
    $region67: #{tpu_custom_call.1} parent=1 // pred_check_branch
      %130 = sbr.rel (0) target = $region69
    $region68: #{tpu_custom_call.1} parent=1 // pred_region
      %132 = vsyncadd [#allocation12], 0
      %s133 = sshll.u32 %s16, 4
      %s134 = int_to_ptr.hbm [resolvable:$true] %s133
      %s135 = sshll.u32 [#allocation13], 4
      %s136 = int_to_ptr.vmem [resolvable:$true] %s135
      %141 = dma.hbm_to_vmem [thread:$0]  %s134, 256, %s136, [#allocation12], 64, 64, 4
    $region69: #{tpu_custom_call.1} parent=1 // pred_fallthru
      _
    // Predicated region
    $region70: #{tpu_custom_call.1} parent=1 // pred_check
      _
    $region71: #{tpu_custom_call.1} parent=1 // pred_check_branch
      %143 = sbr.rel (0) target = $region73
    $region72: #{tpu_custom_call.1} parent=1 // pred_region
      %145 = vsyncadd [#allocation15], 0
      %s147 = sshll.u32 %s17, 4
      %s148 = int_to_ptr.hbm [resolvable:$true] %s147
      %s149 = sshll.u32 [#allocation14], 4
      %s150 = int_to_ptr.vmem [resolvable:$true] %s149
      %152 = dma.hbm_to_vmem [thread:$0]  %s148, 16, %s150, [#allocation15]
    $region73: #{tpu_custom_call.1} parent=1 // pred_fallthru
      _
    // Predicated region
    $region74: #{tpu_custom_call.1} parent=1 // pred_check
      _
    $region75: #{tpu_custom_call.1} parent=1 // pred_check_branch
      %154 = sbr.rel (0) target = $region77
    $region76: #{tpu_custom_call.1} parent=1 // pred_region
      %156 = vsyncadd [#allocation15], 0
      %s158 = sshll.u32 %s18, 4
      %s159 = int_to_ptr.hbm [resolvable:$true] %s158
      %s160 = sshll.u32 [#allocation16], 4
      %s161 = int_to_ptr.vmem [resolvable:$true] %s160
      %163 = dma.hbm_to_vmem [thread:$0]  %s159, 16, %s161, [#allocation15]
    $region77: #{tpu_custom_call.1} parent=1 // pred_fallthru
      _
    // Predicated region
    $region78: #{tpu_custom_call.1} parent=1 // pred_check
      _
    $region79: #{tpu_custom_call.1} parent=1 // pred_check_branch
      %165 = sbr.rel (0) target = $region81
    $region80: #{tpu_custom_call.1} parent=1 // pred_region
      %167 = vsyncadd [#allocation18], 0
      %s169 = sshll.u32 %s19, 4
      %s170 = int_to_ptr.hbm [resolvable:$true] %s169
      %s171 = sshll.u32 [#allocation17], 4
      %s172 = int_to_ptr.vmem [resolvable:$true] %s171
      %174 = dma.hbm_to_vmem [thread:$0]  %s170, 16, %s172, [#allocation18]
    $region81: #{tpu_custom_call.1} parent=1 // pred_fallthru
      _
    // Predicated region
    $region82: #{tpu_custom_call.1} parent=1 // pred_check
      _
    $region83: #{tpu_custom_call.1} parent=1 // pred_check_branch
      %176 = sbr.rel (0) target = $region85
    $region84: #{tpu_custom_call.1} parent=1 // pred_region
      %178 = vsyncadd [#allocation18], 0
      %s179 = sshll.u32 %s20, 4
      %s180 = int_to_ptr.hbm [resolvable:$true] %s179
      %s181 = sshll.u32 [#allocation19], 4
      %s182 = int_to_ptr.vmem [resolvable:$true] %s181
      %187 = dma.hbm_to_vmem [thread:$0]  %s180, 256, %s182, [#allocation18], 64, 64, 4
    $region85: #{tpu_custom_call.1} parent=1 // pred_fallthru
      _
    // Predicated region
    $region86: #{tpu_custom_call.1} parent=1 // pred_check
      _
    $region87: #{tpu_custom_call.1} parent=1 // pred_check_branch
      %189 = sbr.rel (0) target = $region89
    $region88: #{tpu_custom_call.1} parent=1 // pred_region
      %191 = vsyncadd [#allocation21], 0
      %s193 = sshll.u32 %s21, 4
      %s194 = int_to_ptr.hbm [resolvable:$true] %s193
      %s195 = sshll.u32 [#allocation20], 4
      %s196 = int_to_ptr.vmem [resolvable:$true] %s195
      %198 = dma.hbm_to_vmem [thread:$0]  %s194, 16, %s196, [#allocation21]
    $region89: #{tpu_custom_call.1} parent=1 // pred_fallthru
      _
    // Predicated region
    $region90: #{tpu_custom_call.1} parent=1 // pred_check
      _
    $region91: #{tpu_custom_call.1} parent=1 // pred_check_branch
      %200 = sbr.rel (0) target = $region93
    $region92: #{tpu_custom_call.1} parent=1 // pred_region
      _
    $region93: #{tpu_custom_call.1} parent=1 // pred_fallthru
      _
    // Predicated region
    $region94: #{tpu_custom_call.1} parent=1 // pred_check
      _
    $region95: #{tpu_custom_call.1} parent=1 // pred_check_branch
      %202 = sbr.rel (0) target = $region97
    $region96: #{tpu_custom_call.1} parent=1 // pred_region
      %204 = vsyncadd [#allocation21], 0
      %s206 = sshll.u32 %s23, 4
      %s207 = int_to_ptr.hbm [resolvable:$true] %s206
      %s208 = sshll.u32 [#allocation22], 4
      %s209 = int_to_ptr.vmem [resolvable:$true] %s208
      %211 = dma.hbm_to_vmem [thread:$0]  %s207, 16, %s209, [#allocation21]
    $region97: #{tpu_custom_call.1} parent=1 // pred_fallthru
      _
    // Predicated region
    $region98: #{tpu_custom_call.1} parent=1 // pred_check
      _
    $region99: #{tpu_custom_call.1} parent=1 // pred_check_branch
      %213 = sbr.rel (0) target = $region101
    $region100: #{tpu_custom_call.1} parent=1 // pred_region
      %215 = dma.done [#allocation3], 128
    $region101: #{tpu_custom_call.1} parent=1 // pred_fallthru
      _
    // Predicated region
    $region102: #{tpu_custom_call.1} parent=1 // pred_check
      _
    $region103: #{tpu_custom_call.1} parent=1 // pred_check_branch
      %217 = sbr.rel (0) target = $region105
    $region104: #{tpu_custom_call.1} parent=1 // pred_region
      %219 = dma.done [#allocation6], 128
    $region105: #{tpu_custom_call.1} parent=1 // pred_fallthru
      _
    // Predicated region
    $region106: #{tpu_custom_call.1} parent=1 // pred_check
      _
    $region107: #{tpu_custom_call.1} parent=1 // pred_check_branch
      %221 = sbr.rel (0) target = $region109
    $region108: #{tpu_custom_call.1} parent=1 // pred_region
      %223 = dma.done [#allocation6], 128
    $region109: #{tpu_custom_call.1} parent=1 // pred_fallthru
      _
    // Predicated region
    $region110: #{tpu_custom_call.1} parent=1 // pred_check
      _
    $region111: #{tpu_custom_call.1} parent=1 // pred_check_branch
      %225 = sbr.rel (0) target = $region113
    $region112: #{tpu_custom_call.1} parent=1 // pred_region
      %227 = dma.done [#allocation9], 16
    $region113: #{tpu_custom_call.1} parent=1 // pred_fallthru
      _
    // Predicated region
    $region114: #{tpu_custom_call.1} parent=1 // pred_check
      _
    $region115: #{tpu_custom_call.1} parent=1 // pred_check_branch
      %229 = sbr.rel (0) target = $region117
    $region116: #{tpu_custom_call.1} parent=1 // pred_region
      %231 = dma.done [#allocation9], 16
    $region117: #{tpu_custom_call.1} parent=1 // pred_fallthru
      _
    // Predicated region
    $region118: #{tpu_custom_call.1} parent=1 // pred_check
      _
    $region119: #{tpu_custom_call.1} parent=1 // pred_check_branch
      %233 = sbr.rel (0) target = $region121
    $region120: #{tpu_custom_call.1} parent=1 // pred_region
      %235 = dma.done [#allocation12], 16
    $region121: #{tpu_custom_call.1} parent=1 // pred_fallthru
      _
    // Predicated region
    $region122: #{tpu_custom_call.1} parent=1 // pred_check
      _
    $region123: #{tpu_custom_call.1} parent=1 // pred_check_branch
      %237 = sbr.rel (0) target = $region125
    $region124: #{tpu_custom_call.1} parent=1 // pred_region
      %239 = dma.done [#allocation12], 256
    $region125: #{tpu_custom_call.1} parent=1 // pred_fallthru
      _
    // Predicated region
    $region126: #{tpu_custom_call.1} parent=1 // pred_check
      _
    $region127: #{tpu_custom_call.1} parent=1 // pred_check_branch
      %241 = sbr.rel (0) target = $region129
    $region128: #{tpu_custom_call.1} parent=1 // pred_region
      %243 = dma.done [#allocation15], 16
    $region129: #{tpu_custom_call.1} parent=1 // pred_fallthru
      _
    // Predicated region
    $region130: #{tpu_custom_call.1} parent=1 // pred_check
      _
    $region131: #{tpu_custom_call.1} parent=1 // pred_check_branch
      %245 = sbr.rel (0) target = $region133
    $region132: #{tpu_custom_call.1} parent=1 // pred_region
      %247 = dma.done [#allocation15], 16
    $region133: #{tpu_custom_call.1} parent=1 // pred_fallthru
      _
    // Predicated region
    $region134: #{tpu_custom_call.1} parent=1 // pred_check
      _
    $region135: #{tpu_custom_call.1} parent=1 // pred_check_branch
      %249 = sbr.rel (0) target = $region137
    $region136: #{tpu_custom_call.1} parent=1 // pred_region
      %251 = dma.done [#allocation18], 16
    $region137: #{tpu_custom_call.1} parent=1 // pred_fallthru
      _
    // Predicated region
    $region138: #{tpu_custom_call.1} parent=1 // pred_check
      _
    $region139: #{tpu_custom_call.1} parent=1 // pred_check_branch
      %253 = sbr.rel (0) target = $region141
    $region140: #{tpu_custom_call.1} parent=1 // pred_region
      %255 = dma.done [#allocation18], 256
    $region141: #{tpu_custom_call.1} parent=1 // pred_fallthru
      _
    // Predicated region
    $region142: #{tpu_custom_call.1} parent=1 // pred_check
      _
    $region143: #{tpu_custom_call.1} parent=1 // pred_check_branch
      %257 = sbr.rel (0) target = $region145
    $region144: #{tpu_custom_call.1} parent=1 // pred_region
      %259 = dma.done [#allocation21], 16
    $region145: #{tpu_custom_call.1} parent=1 // pred_fallthru
      _
    // Predicated region
    $region146: #{tpu_custom_call.1} parent=1 // pred_check
      _
    $region147: #{tpu_custom_call.1} parent=1 // pred_check_branch
      %261 = sbr.rel (0) target = $region149
    $region148: #{tpu_custom_call.1} parent=1 // pred_region
      %263 = dma.done [#allocation21], 16
    $region149: #{tpu_custom_call.1} parent=1 // pred_fallthru
      _
    %v265 = vld [vmem:[#allocation2] sm:$0xf]
    %v266 = vld [vmem:[#allocation2 + $0x4] sm:$0xf]
    %v267 = vunpack.c.l.bf16 %v265
    %v268 = vunpack.c.l.bf16 %v266
    %v269 = vld [vmem:[%s1] sm:$0xf]
    %v270 = vld [vmem:[%s1 + $0x4] sm:$0xf]
    %v271 = vld [vmem:[%s1 + $0x8] sm:$0xf]
    %v272 = vld [vmem:[%s1 + $0xc] sm:$0xf]
    %v273 = vld [vmem:[#allocation5] sm:$0xf]
    %v274 = vld [vmem:[#allocation5 + $0x4] sm:$0xf]
    %v275 = vunpack.c.l.bf16 %v273
    %v276 = vunpack.c.l.bf16 %v274
    %v277 = vld [vmem:[#allocation7] sm:$0xf]
    %v278 = vld [vmem:[#allocation7 + $0x4] sm:$0xf]
    %v279 = vunpack.c.l.bf16 %v277
    %v280 = vunpack.c.l.bf16 %v278
    %v281 = vld [vmem:[%s4] sm:$0x1]
    %v282 = vld [vmem:[%s5] sm:$0x1]
    %vm283 = vcmask 261120
    %v284 = vsel %vm283, %v267, 0.0
    %285 = vadd.xlane.f32.xlu0 %v284
    %v286 = vpop.xlane.xlu0 %285
    %v287 = vsel %vm283, %v268, 0.0
    %288 = vadd.xlane.f32.xlu0 %v287
    %v289 = vpop.xlane.xlu0 %288
    %v290 = vrcp.pop 32.0
    %v291 = vmul.f32 32.0, %v290
    %v292 = vsub.f32 1.0, %v291
    %v293 = vmul.f32 %v290, %v292
    %v294 = vadd.f32 %v290, %v293
    %vm295 = vweird.f32 %v290
    %v296 = vsel %vm295, %v290, %v294
    %v297 = vmul.f32 %v286, %v296
    %v298 = vmul.f32 %v289, %v296
    %v299 = vsub.f32 %v267, %v297
    %v300 = vsub.f32 %v268, %v298
    %v301 = vmul.f32 %v299, %v299
    %v302 = vmul.f32 %v300, %v300
    %v303 = vsel %vm283, %v301, 0.0
    %304 = vadd.xlane.f32.xlu0 %v303
    %v305 = vpop.xlane.xlu0 %304
    %v306 = vsel %vm283, %v302, 0.0
    %307 = vadd.xlane.f32.xlu0 %v306
    %v308 = vpop.xlane.xlu0 %307
    %v309 = vmul.f32 %v305, %v296
    %v310 = vmul.f32 %v308, %v296
    %v311 = vadd.f32 %v309, 1e-05
    %v312 = vadd.f32 %v310, 1e-05
    %v313 = vrsqrt.pop %v311
    %v314 = vmul.f32 %v313, %v311
    %v315 = vmul.f32 %v314, %v313
    %v316 = vmul.f32 0.5, %v315
    %v317 = vsub.f32 1.5, %v316
    %v318 = vmul.f32 %v313, %v317
    %vm319 = vweird.f32 %v311
    %vm320 = vweird.f32 %v313
    %vm321 = vmor %vm319, %vm320
    %v322 = vsel %vm321, %v313, %v318
    %v323 = vrsqrt.pop %v312
    %v324 = vmul.f32 %v323, %v312
    %v325 = vmul.f32 %v324, %v323
    %v326 = vmul.f32 0.5, %v325
    %v327 = vsub.f32 1.5, %v326
    %v328 = vmul.f32 %v323, %v327
    %vm329 = vweird.f32 %v312
    %vm330 = vweird.f32 %v323
    %vm331 = vmor %vm329, %vm330
    %v332 = vsel %vm331, %v323, %v328
    %v333 = vmul.f32 %v299, %v322
    %v334 = vmul.f32 %v300, %v332
    %v336 = vperm.slane %v281, 0
    %v338 = vmul.f32 %v333, %v336
    %v339 = vmul.f32 %v334, %v336
    %v341 = vperm.slane %v282, 0
    %v343 = vadd.f32 %v338, %v341
    %v344 = vadd.f32 %v339, %v341
    %v345 = vpack.c.bf16 %v344, %v343
    %v346 = vld [vmem:[%s6] sm:$0xf]
    %v347 = vld [vmem:[%s6 + $0x4] sm:$0xf]
    %v348 = vld [vmem:[%s6 + $0x8] sm:$0xf]
    %v349 = vld [vmem:[%s6 + $0xc] sm:$0xf]
    %v354 = vunpack.c.l.b16 %v346
    %v355 = vunpack.c.l.b16 %v347
    %v356 = vunpack.c.l.b16 %v348
    %v357 = vunpack.c.l.b16 %v349
    %v358 = vpack.c.b16 %v355, %v354
    %v359 = vpack.c.b16 %v357, %v356
    %v363 = vsel %vm283, %v345, 0
    %365 = vmatpush.bf16.msra.mxu0 0
    %366 = vmatpush.bf16.msra.mxu0 0
    %367 = vmatpush.bf16.msra.mxu0 0
    %368 = vmatpush.bf16.msra.mxu0 0
    %369 = vmatpush.bf16.msra.mxu0 0
    %370 = vmatpush.bf16.msra.mxu0 0
    %371 = vmatpush.bf16.msra.mxu0 %v359
    %372 = vmatpush.bf16.msra.mxu0 %v358
    %373 = vmatmul.bf16.gmra.mxu0 %v363
    %v374 = vpop.f32.mrf.mxu0
    %v375 = vadd.f32 0.0, %v374
    %v376 = vpop.f32.mrf.mxu0
    %v377 = vadd.f32 0.0, %v376
    %378 = vdwg.mxu0
    %v379 = vld [vmem:[%s7] sm:$0x1]
    %v381 = vperm.slane %v379, 0
    %v383 = vadd.f32 %v375, %v381
    %v384 = vadd.f32 %v377, %v381
    %v385 = vld [vmem:[%s8] sm:$0xf]
    %v386 = vld [vmem:[%s8 + $0x4] sm:$0xf]
    %v387 = vld [vmem:[%s8 + $0x8] sm:$0xf]
    %v388 = vld [vmem:[%s8 + $0xc] sm:$0xf]
    %v389 = vld [vmem:[%s9] sm:$0x1]
    %v390 = vmul.f32 %v383, 0.35355338
    %v391 = vmul.f32 %v384, 0.35355338
    %v392 = vpack.c.bf16 %v390, %v390
    %v393 = vpack.c.bf16 %v391, %v391
    %v394 = vpack.c.bf16 %v383, %v383
    %v395 = vpack.c.bf16 %v384, %v384
    %v397 = vunpack.c.l.b16 %v394
    %v398 = vpack.c.b16 %v397, %v397
    %399 = vrot.lane.b32.xlu0 %v398, 96
    %v400 = vpop.permute.xlu0 %399
    %vm401 = vcmask 64512
    %v403 = vsel %vm401, %v392, 0
    %v406 = vsel %vm401, %v400, 0
    %408 = vmatpush.bf16.xpose.msra.mxu0 0
    %409 = vmatpush.bf16.xpose.msra.mxu0 0
    %410 = vmatpush.bf16.xpose.msra.mxu0 0
    %411 = vmatpush.bf16.xpose.msra.mxu0 0
    %412 = vmatpush.bf16.xpose.msra.mxu0 0
    %413 = vmatpush.bf16.xpose.msra.mxu0 0
    %414 = vmatpush.bf16.xpose.msra.mxu0 0
    %415 = vmatpush.bf16.xpose.msra.mxu0 %v406
    %416 = vmatmul.bf16.gmra.mxu0 %v403
    %v417 = vpop.f32.mrf.mxu0
    %v418 = vadd.f32 %v275, %v417
    %v419 = vpop.f32.mrf.mxu0
    %420 = vdwg.mxu0
    %v422 = vunpack.c.l.b16 %v395
    %v423 = vpack.c.b16 %v422, %v422
    %424 = vrot.lane.b32.xlu0 %v423, 96
    %v425 = vpop.permute.xlu0 %424
    %v427 = vsel %vm401, %v393, 0
    %v430 = vsel %vm401, %v425, 0
    %432 = vmatpush.bf16.xpose.msra.mxu0 0
    %433 = vmatpush.bf16.xpose.msra.mxu0 0
    %434 = vmatpush.bf16.xpose.msra.mxu0 0
    %435 = vmatpush.bf16.xpose.msra.mxu0 0
    %436 = vmatpush.bf16.xpose.msra.mxu0 0
    %437 = vmatpush.bf16.xpose.msra.mxu0 0
    %438 = vmatpush.bf16.xpose.msra.mxu0 0
    %439 = vmatpush.bf16.xpose.msra.mxu0 %v430
    %440 = vmatmul.bf16.gmra.mxu0 %v427
    %v441 = vpop.f32.mrf.mxu0
    %v442 = vadd.f32 %v276, %v441
    %v443 = vpop.f32.mrf.mxu0
    %444 = vdwg.mxu0
    %v445 = vsel %vm401, %v418, -inf
    %446 = vmax.xlane.f32.xlu0 %v445
    %v447 = vpop.xlane.xlu0 %446
    %v448 = vsel %vm401, %v442, -inf
    %449 = vmax.xlane.f32.xlu0 %v448
    %v450 = vpop.xlane.xlu0 %449
    %v451 = vsub.f32 %v418, %v447
    %v452 = vsub.f32 %v442, %v450
    %v453 = vmul.f32 %v451, 1.442695
    %v454 = vpow.pop %v453
    %v455 = vmul.f32 %v452, 1.442695
    %v456 = vpow.pop %v455
    %v457 = vsel %vm401, %v454, 0.0
    %458 = vadd.xlane.f32.xlu0 %v457
    %v459 = vpop.xlane.xlu0 %458
    %v460 = vsel %vm401, %v456, 0.0
    %461 = vadd.xlane.f32.xlu0 %v460
    %v462 = vpop.xlane.xlu0 %461
    %v463 = vrcp.pop %v459
    %v464 = vrcp.pop %v462
    %v465 = vmul.f32 %v454, %v463
    %v466 = vmul.f32 %v456, %v464
    %v467 = vpack.c.bf16 %v465, %v465
    %v468 = vpack.c.bf16 %v466, %v466
    %469 = vrot.lane.b32.xlu0 %v398, 64
    %v470 = vpop.permute.xlu0 %469
    %v472 = vsel %vm401, %v467, 0
    %vm474 = vcmask 1043456
    %v476 = vsel %vm474, %v470, 0
    %478 = vmatpush.bf16.msra.mxu0 0
    %479 = vmatpush.bf16.msra.mxu0 0
    %480 = vmatpush.bf16.msra.mxu0 0
    %481 = vmatpush.bf16.msra.mxu0 0
    %482 = vmatpush.bf16.msra.mxu0 0
    %483 = vmatpush.bf16.msra.mxu0 0
    %484 = vmatpush.bf16.msra.mxu0 0
    %485 = vmatpush.bf16.msra.mxu0 %v476
    %486 = vmatmul.bf16.gmra.mxu0 %v472
    %v487 = vpop.f32.mrf.mxu0
    %v488 = vadd.f32 0.0, %v487
    %v489 = vpop.f32.mrf.mxu0
    %490 = vdwg.mxu0
    %491 = vrot.lane.b32.xlu0 %v423, 64
    %v492 = vpop.permute.xlu0 %491
    %v494 = vsel %vm401, %v468, 0
    %v497 = vsel %vm474, %v492, 0
    %499 = vmatpush.bf16.msra.mxu0 0
    %500 = vmatpush.bf16.msra.mxu0 0
    %501 = vmatpush.bf16.msra.mxu0 0
    %502 = vmatpush.bf16.msra.mxu0 0
    %503 = vmatpush.bf16.msra.mxu0 0
    %504 = vmatpush.bf16.msra.mxu0 0
    %505 = vmatpush.bf16.msra.mxu0 0
    %506 = vmatpush.bf16.msra.mxu0 %v497
    %507 = vmatmul.bf16.gmra.mxu0 %v494
    %v508 = vpop.f32.mrf.mxu0
    %v509 = vadd.f32 0.0, %v508
    %v510 = vpop.f32.mrf.mxu0
    %511 = vdwg.mxu0
    %v512 = vpack.c.bf16 %v488, %v488
    %v513 = vpack.c.bf16 %v509, %v509
    %v515 = vunpack.c.l.b16 %v392
    %v516 = vpack.c.b16 %v515, %v515
    %517 = vrot.lane.b32.xlu0 %v516, 120
    %v518 = vpop.permute.xlu0 %517
    %519 = vrot.lane.b32.xlu0 %v398, 88
    %v520 = vpop.permute.xlu0 %519
    %v522 = vsel %vm401, %v518, 0
    %v525 = vsel %vm401, %v520, 0
    %527 = vmatpush.bf16.xpose.msra.mxu0 0
    %528 = vmatpush.bf16.xpose.msra.mxu0 0
    %529 = vmatpush.bf16.xpose.msra.mxu0 0
    %530 = vmatpush.bf16.xpose.msra.mxu0 0
    %531 = vmatpush.bf16.xpose.msra.mxu0 0
    %532 = vmatpush.bf16.xpose.msra.mxu0 0
    %533 = vmatpush.bf16.xpose.msra.mxu0 0
    %534 = vmatpush.bf16.xpose.msra.mxu0 %v525
    %535 = vmatmul.bf16.gmra.mxu0 %v522
    %v536 = vpop.f32.mrf.mxu0
    %v537 = vadd.f32 %v275, %v536
    %v538 = vpop.f32.mrf.mxu0
    %539 = vdwg.mxu0
    %v541 = vunpack.c.l.b16 %v393
    %v542 = vpack.c.b16 %v541, %v541
    %543 = vrot.lane.b32.xlu0 %v542, 120
    %v544 = vpop.permute.xlu0 %543
    %545 = vrot.lane.b32.xlu0 %v423, 88
    %v546 = vpop.permute.xlu0 %545
    %v548 = vsel %vm401, %v544, 0
    %v551 = vsel %vm401, %v546, 0
    %553 = vmatpush.bf16.xpose.msra.mxu0 0
    %554 = vmatpush.bf16.xpose.msra.mxu0 0
    %555 = vmatpush.bf16.xpose.msra.mxu0 0
    %556 = vmatpush.bf16.xpose.msra.mxu0 0
    %557 = vmatpush.bf16.xpose.msra.mxu0 0
    %558 = vmatpush.bf16.xpose.msra.mxu0 0
    %559 = vmatpush.bf16.xpose.msra.mxu0 0
    %560 = vmatpush.bf16.xpose.msra.mxu0 %v551
    %561 = vmatmul.bf16.gmra.mxu0 %v548
    %v562 = vpop.f32.mrf.mxu0
    %v563 = vadd.f32 %v276, %v562
    %v564 = vpop.f32.mrf.mxu0
    %565 = vdwg.mxu0
    %v566 = vsel %vm401, %v537, -inf
    %567 = vmax.xlane.f32.xlu0 %v566
    %v568 = vpop.xlane.xlu0 %567
    %v569 = vsel %vm401, %v563, -inf
    %570 = vmax.xlane.f32.xlu0 %v569
    %v571 = vpop.xlane.xlu0 %570
    %v572 = vsub.f32 %v537, %v568
    %v573 = vsub.f32 %v563, %v571
    %v574 = vmul.f32 %v572, 1.442695
    %v575 = vpow.pop %v574
    %v576 = vmul.f32 %v573, 1.442695
    %v577 = vpow.pop %v576
    %v578 = vsel %vm401, %v575, 0.0
    %579 = vadd.xlane.f32.xlu0 %v578
    %v580 = vpop.xlane.xlu0 %579
    %v581 = vsel %vm401, %v577, 0.0
    %582 = vadd.xlane.f32.xlu0 %v581
    %v583 = vpop.xlane.xlu0 %582
    %v584 = vrcp.pop %v580
    %v585 = vrcp.pop %v583
    %v586 = vmul.f32 %v575, %v584
    %v587 = vmul.f32 %v577, %v585
    %v588 = vpack.c.bf16 %v586, %v586
    %v589 = vpack.c.bf16 %v587, %v587
    %590 = vrot.lane.b32.xlu0 %v398, 56
    %v591 = vpop.permute.xlu0 %590
    %v593 = vsel %vm401, %v588, 0
    %v596 = vsel %vm474, %v591, 0
    %598 = vmatpush.bf16.msra.mxu0 0
    %599 = vmatpush.bf16.msra.mxu0 0
    %600 = vmatpush.bf16.msra.mxu0 0
    %601 = vmatpush.bf16.msra.mxu0 0
    %602 = vmatpush.bf16.msra.mxu0 0
    %603 = vmatpush.bf16.msra.mxu0 0
    %604 = vmatpush.bf16.msra.mxu0 0
    %605 = vmatpush.bf16.msra.mxu0 %v596
    %606 = vmatmul.bf16.gmra.mxu0 %v593
    %v607 = vpop.f32.mrf.mxu0
    %v608 = vadd.f32 0.0, %v607
    %v609 = vpop.f32.mrf.mxu0
    %610 = vdwg.mxu0
    %611 = vrot.lane.b32.xlu0 %v423, 56
    %v612 = vpop.permute.xlu0 %611
    %v614 = vsel %vm401, %v589, 0
    %v617 = vsel %vm474, %v612, 0
    %619 = vmatpush.bf16.msra.mxu0 0
    %620 = vmatpush.bf16.msra.mxu0 0
    %621 = vmatpush.bf16.msra.mxu0 0
    %622 = vmatpush.bf16.msra.mxu0 0
    %623 = vmatpush.bf16.msra.mxu0 0
    %624 = vmatpush.bf16.msra.mxu0 0
    %625 = vmatpush.bf16.msra.mxu0 0
    %626 = vmatpush.bf16.msra.mxu0 %v617
    %627 = vmatmul.bf16.gmra.mxu0 %v614
    %v628 = vpop.f32.mrf.mxu0
    %v629 = vadd.f32 0.0, %v628
    %v630 = vpop.f32.mrf.mxu0
    %631 = vdwg.mxu0
    %v632 = vpack.c.bf16 %v608, %v608
    %v633 = vpack.c.bf16 %v629, %v629
    %634 = vrot.lane.b32.xlu0 %v516, 112
    %v635 = vpop.permute.xlu0 %634
    %636 = vrot.lane.b32.xlu0 %v398, 80
    %v637 = vpop.permute.xlu0 %636
    %v639 = vsel %vm401, %v635, 0
    %v642 = vsel %vm401, %v637, 0
    %644 = vmatpush.bf16.xpose.msra.mxu0 0
    %645 = vmatpush.bf16.xpose.msra.mxu0 0
    %646 = vmatpush.bf16.xpose.msra.mxu0 0
    %647 = vmatpush.bf16.xpose.msra.mxu0 0
    %648 = vmatpush.bf16.xpose.msra.mxu0 0
    %649 = vmatpush.bf16.xpose.msra.mxu0 0
    %650 = vmatpush.bf16.xpose.msra.mxu0 0
    %651 = vmatpush.bf16.xpose.msra.mxu0 %v642
    %652 = vmatmul.bf16.gmra.mxu0 %v639
    %v653 = vpop.f32.mrf.mxu0
    %v654 = vadd.f32 %v275, %v653
    %v655 = vpop.f32.mrf.mxu0
    %656 = vdwg.mxu0
    %657 = vrot.lane.b32.xlu0 %v542, 112
    %v658 = vpop.permute.xlu0 %657
    %659 = vrot.lane.b32.xlu0 %v423, 80
    %v660 = vpop.permute.xlu0 %659
    %v662 = vsel %vm401, %v658, 0
    %v665 = vsel %vm401, %v660, 0
    %667 = vmatpush.bf16.xpose.msra.mxu0 0
    %668 = vmatpush.bf16.xpose.msra.mxu0 0
    %669 = vmatpush.bf16.xpose.msra.mxu0 0
    %670 = vmatpush.bf16.xpose.msra.mxu0 0
    %671 = vmatpush.bf16.xpose.msra.mxu0 0
    %672 = vmatpush.bf16.xpose.msra.mxu0 0
    %673 = vmatpush.bf16.xpose.msra.mxu0 0
    %674 = vmatpush.bf16.xpose.msra.mxu0 %v665
    %675 = vmatmul.bf16.gmra.mxu0 %v662
    %v676 = vpop.f32.mrf.mxu0
    %v677 = vadd.f32 %v276, %v676
    %v678 = vpop.f32.mrf.mxu0
    %679 = vdwg.mxu0
    %v680 = vsel %vm401, %v654, -inf
    %681 = vmax.xlane.f32.xlu0 %v680
    %v682 = vpop.xlane.xlu0 %681
    %v683 = vsel %vm401, %v677, -inf
    %684 = vmax.xlane.f32.xlu0 %v683
    %v685 = vpop.xlane.xlu0 %684
    %v686 = vsub.f32 %v654, %v682
    %v687 = vsub.f32 %v677, %v685
    %v688 = vmul.f32 %v686, 1.442695
    %v689 = vpow.pop %v688
    %v690 = vmul.f32 %v687, 1.442695
    %v691 = vpow.pop %v690
    %v692 = vsel %vm401, %v689, 0.0
    %693 = vadd.xlane.f32.xlu0 %v692
    %v694 = vpop.xlane.xlu0 %693
    %v695 = vsel %vm401, %v691, 0.0
    %696 = vadd.xlane.f32.xlu0 %v695
    %v697 = vpop.xlane.xlu0 %696
    %v698 = vrcp.pop %v694
    %v699 = vrcp.pop %v697
    %v700 = vmul.f32 %v689, %v698
    %v701 = vmul.f32 %v691, %v699
    %v702 = vpack.c.bf16 %v700, %v700
    %v703 = vpack.c.bf16 %v701, %v701
    %704 = vrot.lane.b32.xlu0 %v398, 48
    %v705 = vpop.permute.xlu0 %704
    %v707 = vsel %vm401, %v702, 0
    %v710 = vsel %vm474, %v705, 0
    %712 = vmatpush.bf16.msra.mxu0 0
    %713 = vmatpush.bf16.msra.mxu0 0
    %714 = vmatpush.bf16.msra.mxu0 0
    %715 = vmatpush.bf16.msra.mxu0 0
    %716 = vmatpush.bf16.msra.mxu0 0
    %717 = vmatpush.bf16.msra.mxu0 0
    %718 = vmatpush.bf16.msra.mxu0 0
    %719 = vmatpush.bf16.msra.mxu0 %v710
    %720 = vmatmul.bf16.gmra.mxu0 %v707
    %v721 = vpop.f32.mrf.mxu0
    %v722 = vadd.f32 0.0, %v721
    %v723 = vpop.f32.mrf.mxu0
    %724 = vdwg.mxu0
    %725 = vrot.lane.b32.xlu0 %v423, 48
    %v726 = vpop.permute.xlu0 %725
    %v728 = vsel %vm401, %v703, 0
    %v731 = vsel %vm474, %v726, 0
    %733 = vmatpush.bf16.msra.mxu0 0
    %734 = vmatpush.bf16.msra.mxu0 0
    %735 = vmatpush.bf16.msra.mxu0 0
    %736 = vmatpush.bf16.msra.mxu0 0
    %737 = vmatpush.bf16.msra.mxu0 0
    %738 = vmatpush.bf16.msra.mxu0 0
    %739 = vmatpush.bf16.msra.mxu0 0
    %740 = vmatpush.bf16.msra.mxu0 %v731
    %741 = vmatmul.bf16.gmra.mxu0 %v728
    %v742 = vpop.f32.mrf.mxu0
    %v743 = vadd.f32 0.0, %v742
    %v744 = vpop.f32.mrf.mxu0
    %745 = vdwg.mxu0
    %v746 = vpack.c.bf16 %v722, %v722
    %v747 = vpack.c.bf16 %v743, %v743
    %748 = vrot.lane.b32.xlu0 %v516, 104
    %v749 = vpop.permute.xlu0 %748
    %750 = vrot.lane.b32.xlu0 %v398, 72
    %v751 = vpop.permute.xlu0 %750
    %v753 = vsel %vm401, %v749, 0
    %v756 = vsel %vm401, %v751, 0
    %758 = vmatpush.bf16.xpose.msra.mxu0 0
    %759 = vmatpush.bf16.xpose.msra.mxu0 0
    %760 = vmatpush.bf16.xpose.msra.mxu0 0
    %761 = vmatpush.bf16.xpose.msra.mxu0 0
    %762 = vmatpush.bf16.xpose.msra.mxu0 0
    %763 = vmatpush.bf16.xpose.msra.mxu0 0
    %764 = vmatpush.bf16.xpose.msra.mxu0 0
    %765 = vmatpush.bf16.xpose.msra.mxu0 %v756
    %766 = vmatmul.bf16.gmra.mxu0 %v753
    %v767 = vpop.f32.mrf.mxu0
    %v768 = vadd.f32 %v275, %v767
    %v769 = vpop.f32.mrf.mxu0
    %770 = vdwg.mxu0
    %771 = vrot.lane.b32.xlu0 %v542, 104
    %v772 = vpop.permute.xlu0 %771
    %773 = vrot.lane.b32.xlu0 %v423, 72
    %v774 = vpop.permute.xlu0 %773
    %v776 = vsel %vm401, %v772, 0
    %v779 = vsel %vm401, %v774, 0
    %781 = vmatpush.bf16.xpose.msra.mxu0 0
    %782 = vmatpush.bf16.xpose.msra.mxu0 0
    %783 = vmatpush.bf16.xpose.msra.mxu0 0
    %784 = vmatpush.bf16.xpose.msra.mxu0 0
    %785 = vmatpush.bf16.xpose.msra.mxu0 0
    %786 = vmatpush.bf16.xpose.msra.mxu0 0
    %787 = vmatpush.bf16.xpose.msra.mxu0 0
    %788 = vmatpush.bf16.xpose.msra.mxu0 %v779
    %789 = vmatmul.bf16.gmra.mxu0 %v776
    %v790 = vpop.f32.mrf.mxu0
    %v791 = vadd.f32 %v276, %v790
    %v792 = vpop.f32.mrf.mxu0
    %793 = vdwg.mxu0
    %v794 = vsel %vm401, %v768, -inf
    %795 = vmax.xlane.f32.xlu0 %v794
    %v796 = vpop.xlane.xlu0 %795
    %v797 = vsel %vm401, %v791, -inf
    %798 = vmax.xlane.f32.xlu0 %v797
    %v799 = vpop.xlane.xlu0 %798
    %v800 = vsub.f32 %v768, %v796
    %v801 = vsub.f32 %v791, %v799
    %v802 = vmul.f32 %v800, 1.442695
    %v803 = vpow.pop %v802
    %v804 = vmul.f32 %v801, 1.442695
    %v805 = vpow.pop %v804
    %v806 = vsel %vm401, %v803, 0.0
    %807 = vadd.xlane.f32.xlu0 %v806
    %v808 = vpop.xlane.xlu0 %807
    %v809 = vsel %vm401, %v805, 0.0
    %810 = vadd.xlane.f32.xlu0 %v809
    %v811 = vpop.xlane.xlu0 %810
    %v812 = vrcp.pop %v808
    %v813 = vrcp.pop %v811
    %v814 = vmul.f32 %v803, %v812
    %v815 = vmul.f32 %v805, %v813
    %v816 = vpack.c.bf16 %v814, %v814
    %v817 = vpack.c.bf16 %v815, %v815
    %818 = vrot.lane.b32.xlu0 %v398, 40
    %v819 = vpop.permute.xlu0 %818
    %v821 = vsel %vm401, %v816, 0
    %v824 = vsel %vm474, %v819, 0
    %826 = vmatpush.bf16.msra.mxu0 0
    %827 = vmatpush.bf16.msra.mxu0 0
    %828 = vmatpush.bf16.msra.mxu0 0
    %829 = vmatpush.bf16.msra.mxu0 0
    %830 = vmatpush.bf16.msra.mxu0 0
    %831 = vmatpush.bf16.msra.mxu0 0
    %832 = vmatpush.bf16.msra.mxu0 0
    %833 = vmatpush.bf16.msra.mxu0 %v824
    %834 = vmatmul.bf16.gmra.mxu0 %v821
    %v835 = vpop.f32.mrf.mxu0
    %v836 = vadd.f32 0.0, %v835
    %v837 = vpop.f32.mrf.mxu0
    %838 = vdwg.mxu0
    %839 = vrot.lane.b32.xlu0 %v423, 40
    %v840 = vpop.permute.xlu0 %839
    %v842 = vsel %vm401, %v817, 0
    %v845 = vsel %vm474, %v840, 0
    %847 = vmatpush.bf16.msra.mxu0 0
    %848 = vmatpush.bf16.msra.mxu0 0
    %849 = vmatpush.bf16.msra.mxu0 0
    %850 = vmatpush.bf16.msra.mxu0 0
    %851 = vmatpush.bf16.msra.mxu0 0
    %852 = vmatpush.bf16.msra.mxu0 0
    %853 = vmatpush.bf16.msra.mxu0 0
    %854 = vmatpush.bf16.msra.mxu0 %v845
    %855 = vmatmul.bf16.gmra.mxu0 %v842
    %v856 = vpop.f32.mrf.mxu0
    %v857 = vadd.f32 0.0, %v856
    %v858 = vpop.f32.mrf.mxu0
    %859 = vdwg.mxu0
    %v860 = vpack.c.bf16 %v836, %v836
    %v861 = vpack.c.bf16 %v857, %v857
    %v864 = vunpack.c.l.b16 %v632
    %v865 = vunpack.c.l.b16 %v633
    %v866 = vpack.c.b16 %v864, %v864
    %v867 = vpack.c.b16 %v865, %v865
    %868 = vrot.lane.b32.xlu0 %v866, 8
    %v869 = vpop.permute.xlu0 %868
    %870 = vrot.lane.b32.xlu0 %v867, 8
    %v871 = vpop.permute.xlu0 %870
    %v874 = vunpack.c.l.b16 %v746
    %v875 = vunpack.c.l.b16 %v747
    %v876 = vpack.c.b16 %v874, %v874
    %v877 = vpack.c.b16 %v875, %v875
    %878 = vrot.lane.b32.xlu0 %v876, 16
    %v879 = vpop.permute.xlu0 %878
    %880 = vrot.lane.b32.xlu0 %v877, 16
    %v881 = vpop.permute.xlu0 %880
    %v884 = vunpack.c.l.b16 %v860
    %v885 = vunpack.c.l.b16 %v861
    %v886 = vpack.c.b16 %v884, %v884
    %v887 = vpack.c.b16 %v885, %v885
    %888 = vrot.lane.b32.xlu0 %v886, 24
    %v889 = vpop.permute.xlu0 %888
    %890 = vrot.lane.b32.xlu0 %v887, 24
    %v891 = vpop.permute.xlu0 %890
    %v894 = vsel %vm401, %v512, %v869
    %v897 = vsel %vm401, %v513, %v871
    %vm898 = vcmask 130048
    %v900 = vsel %vm898, %v894, %v879
    %v902 = vsel %vm898, %v897, %v881
    %vm903 = vcmask 195584
    %v905 = vsel %vm903, %v900, %v889
    %v907 = vsel %vm903, %v902, %v891
    %v909 = vperm.slane %v389, 0
    %v913 = vunpack.c.l.b16 %v905
    %v914 = vunpack.c.l.b16 %v907
    %v915 = vpack.c.b16 %v914, %v913
    %v920 = vunpack.c.l.b16 %v385
    %v921 = vunpack.c.l.b16 %v386
    %v922 = vunpack.c.l.b16 %v387
    %v923 = vunpack.c.l.b16 %v388
    %v924 = vpack.c.b16 %v921, %v920
    %v925 = vpack.c.b16 %v923, %v922
    %v929 = vsel %vm283, %v915, 0
    %931 = vmatpush.bf16.msra.mxu0 0
    %932 = vmatpush.bf16.msra.mxu0 0
    %933 = vmatpush.bf16.msra.mxu0 0
    %934 = vmatpush.bf16.msra.mxu0 0
    %935 = vmatpush.bf16.msra.mxu0 0
    %936 = vmatpush.bf16.msra.mxu0 0
    %937 = vmatpush.bf16.msra.mxu0 %v925
    %938 = vmatpush.bf16.msra.mxu0 %v924
    %939 = vmatmul.bf16.gmra.mxu0 %v929
    %v940 = vpop.f32.mrf.mxu0
    %v941 = vadd.f32 %v909, %v940
    %v942 = vpop.f32.mrf.mxu0
    %v943 = vadd.f32 %v909, %v942
    %944 = vdwg.mxu0
    %v945 = vadd.f32 %v267, %v941
    %v946 = vadd.f32 %v268, %v943
    %v947 = vld [vmem:[%s10] sm:$0x1]
    %v948 = vld [vmem:[#allocation8] sm:$0x1]
    %v949 = vsel %vm283, %v945, 0.0
    %950 = vadd.xlane.f32.xlu0 %v949
    %v951 = vpop.xlane.xlu0 %950
    %v952 = vsel %vm283, %v946, 0.0
    %953 = vadd.xlane.f32.xlu0 %v952
    %v954 = vpop.xlane.xlu0 %953
    %v955 = vmul.f32 %v951, %v296
    %v956 = vmul.f32 %v954, %v296
    %v957 = vsub.f32 %v945, %v955
    %v958 = vsub.f32 %v946, %v956
    %v959 = vmul.f32 %v957, %v957
    %v960 = vmul.f32 %v958, %v958
    %v961 = vsel %vm283, %v959, 0.0
    %962 = vadd.xlane.f32.xlu0 %v961
    %v963 = vpop.xlane.xlu0 %962
    %v964 = vsel %vm283, %v960, 0.0
    %965 = vadd.xlane.f32.xlu0 %v964
    %v966 = vpop.xlane.xlu0 %965
    %v967 = vmul.f32 %v963, %v296
    %v968 = vmul.f32 %v966, %v296
    %v969 = vadd.f32 %v967, 1e-05
    %v970 = vadd.f32 %v968, 1e-05
    %v971 = vrsqrt.pop %v969
    %v972 = vmul.f32 %v971, %v969
    %v973 = vmul.f32 %v972, %v971
    %v974 = vmul.f32 0.5, %v973
    %v975 = vsub.f32 1.5, %v974
    %v976 = vmul.f32 %v971, %v975
    %vm977 = vweird.f32 %v969
    %vm978 = vweird.f32 %v971
    %vm979 = vmor %vm977, %vm978
    %v980 = vsel %vm979, %v971, %v976
    %v981 = vrsqrt.pop %v970
    %v982 = vmul.f32 %v981, %v970
    %v983 = vmul.f32 %v982, %v981
    %v984 = vmul.f32 0.5, %v983
    %v985 = vsub.f32 1.5, %v984
    %v986 = vmul.f32 %v981, %v985
    %vm987 = vweird.f32 %v970
    %vm988 = vweird.f32 %v981
    %vm989 = vmor %vm987, %vm988
    %v990 = vsel %vm989, %v981, %v986
    %v991 = vmul.f32 %v957, %v980
    %v992 = vmul.f32 %v958, %v990
    %v994 = vperm.slane %v947, 0
    %v996 = vmul.f32 %v991, %v994
    %v997 = vmul.f32 %v992, %v994
    %v999 = vperm.slane %v948, 0
    %v1001 = vadd.f32 %v996, %v999
    %v1002 = vadd.f32 %v997, %v999
    %v1003 = vpack.c.bf16 %v1002, %v1001
    %v1004 = vld [vmem:[%s12] sm:$0xf]
    %v1005 = vld [vmem:[%s12 + $0x4] sm:$0xf]
    %v1006 = vld [vmem:[%s12 + $0x8] sm:$0xf]
    %v1007 = vld [vmem:[%s12 + $0xc] sm:$0xf]
    %v1008 = vld [vmem:[#allocation10] sm:$0x1]
    %v1010 = vperm.slane %v1008, 0
    %v1016 = vunpack.c.l.b16 %v1004
    %v1017 = vunpack.c.l.b16 %v1005
    %v1018 = vunpack.c.l.b16 %v1006
    %v1019 = vunpack.c.l.b16 %v1007
    %v1020 = vpack.c.b16 %v1017, %v1016
    %v1021 = vpack.c.b16 %v1019, %v1018
    %v1025 = vsel %vm283, %v1003, 0
    %1027 = vmatpush.bf16.msra.mxu0 0
    %1028 = vmatpush.bf16.msra.mxu0 0
    %1029 = vmatpush.bf16.msra.mxu0 0
    %1030 = vmatpush.bf16.msra.mxu0 0
    %1031 = vmatpush.bf16.msra.mxu0 0
    %1032 = vmatpush.bf16.msra.mxu0 0
    %1033 = vmatpush.bf16.msra.mxu0 %v1021
    %1034 = vmatpush.bf16.msra.mxu0 %v1020
    %1035 = vmatmul.bf16.gmra.mxu0 %v1025
    %v1036 = vpop.f32.mrf.mxu0
    %v1037 = vadd.f32 %v1010, %v1036
    %v1038 = vpop.f32.mrf.mxu0
    %v1039 = vadd.f32 %v1010, %v1038
    %1040 = vdwg.mxu0
    %v1041 = vld [vmem:[%s13] sm:$0xf]
    %v1042 = vld [vmem:[%s13 + $0x4] sm:$0xf]
    %v1043 = vld [vmem:[%s13 + $0x8] sm:$0xf]
    %v1044 = vld [vmem:[%s13 + $0xc] sm:$0xf]
    %v1049 = vunpack.c.l.b16 %v269
    %v1050 = vunpack.c.l.b16 %v270
    %v1051 = vunpack.c.l.b16 %v271
    %v1052 = vunpack.c.l.b16 %v272
    %v1053 = vpack.c.b16 %v1050, %v1049
    %v1054 = vpack.c.b16 %v1052, %v1051
    %v1059 = vunpack.c.l.b16 %v1041
    %v1060 = vunpack.c.l.b16 %v1042
    %v1061 = vunpack.c.l.b16 %v1043
    %v1062 = vunpack.c.l.b16 %v1044
    %v1063 = vpack.c.b16 %v1060, %v1059
    %v1064 = vpack.c.b16 %v1062, %v1061
    %v1068 = vsel %vm283, %v1053, 0
    %v1071 = vsel %vm283, %v1054, 0
    %1073 = vmatpush.bf16.msra.mxu0 0
    %1074 = vmatpush.bf16.msra.mxu0 0
    %1075 = vmatpush.bf16.msra.mxu0 0
    %1076 = vmatpush.bf16.msra.mxu0 0
    %1077 = vmatpush.bf16.msra.mxu0 0
    %1078 = vmatpush.bf16.msra.mxu0 0
    %1079 = vmatpush.bf16.msra.mxu0 %v1064
    %1080 = vmatpush.bf16.msra.mxu0 %v1063
    %1081 = vmatmul.bf16.gmra.mxu0 %v1068
    %v1082 = vpop.f32.mrf.mxu0
    %v1083 = vadd.f32 0.0, %v1082
    %v1084 = vpop.f32.mrf.mxu0
    %v1085 = vadd.f32 0.0, %v1084
    %1086 = vmatmul.bf16.gmra.mxu0 %v1071
    %v1087 = vpop.f32.mrf.mxu0
    %v1088 = vadd.f32 0.0, %v1087
    %v1089 = vpop.f32.mrf.mxu0
    %v1090 = vadd.f32 0.0, %v1089
    %1091 = vdwg.mxu0
    %v1092 = vld [vmem:[#allocation11] sm:$0x1]
    %v1094 = vperm.slane %v1092, 0
    %v1096 = vadd.f32 %v1083, %v1094
    %v1097 = vadd.f32 %v1085, %v1094
    %v1098 = vadd.f32 %v1088, %v1094
    %v1099 = vadd.f32 %v1090, %v1094
    %v1100 = vld [vmem:[#allocation13] sm:$0xf]
    %v1101 = vld [vmem:[#allocation13 + $0x4] sm:$0xf]
    %v1102 = vld [vmem:[#allocation13 + $0x8] sm:$0xf]
    %v1103 = vld [vmem:[#allocation13 + $0xc] sm:$0xf]
    %v1104 = vld [vmem:[#allocation14] sm:$0x1]
    %v1105 = vmul.f32 %v1037, 0.35355338
    %v1106 = vmul.f32 %v1039, 0.35355338
    %v1107 = vpack.c.bf16 %v1105, %v1105
    %v1108 = vpack.c.bf16 %v1106, %v1106
    %v1109 = vpack.c.bf16 %v1096, %v1096
    %v1110 = vpack.c.bf16 %v1097, %v1097
    %v1111 = vpack.c.bf16 %v1098, %v1098
    %v1112 = vpack.c.bf16 %v1099, %v1099
    %v1115 = vunpack.c.l.b16 %v1109
    %v1116 = vunpack.c.l.b16 %v1110
    %v1117 = vpack.c.b16 %v1116, %v1115
    %v1119 = vsel %vm401, %v1107, 0
    %v1122 = vsel %vm401, %v1117, 0
    %1124 = vmatpush.bf16.xpose.msra.mxu0 0
    %1125 = vmatpush.bf16.xpose.msra.mxu0 0
    %1126 = vmatpush.bf16.xpose.msra.mxu0 0
    %1127 = vmatpush.bf16.xpose.msra.mxu0 0
    %1128 = vmatpush.bf16.xpose.msra.mxu0 0
    %1129 = vmatpush.bf16.xpose.msra.mxu0 0
    %1130 = vmatpush.bf16.xpose.msra.mxu0 0
    %1131 = vmatpush.bf16.xpose.msra.mxu0 %v1122
    %1132 = vmatmul.bf16.gmra.mxu0 %v1119
    %v1133 = vpop.f32.mrf.mxu0
    %v1134 = vadd.f32 %v279, %v1133
    %v1135 = vpop.f32.mrf.mxu0
    %1136 = vdwg.mxu0
    %v1139 = vunpack.c.l.b16 %v1111
    %v1140 = vunpack.c.l.b16 %v1112
    %v1141 = vpack.c.b16 %v1140, %v1139
    %v1143 = vsel %vm401, %v1108, 0
    %v1146 = vsel %vm401, %v1141, 0
    %1148 = vmatpush.bf16.xpose.msra.mxu0 0
    %1149 = vmatpush.bf16.xpose.msra.mxu0 0
    %1150 = vmatpush.bf16.xpose.msra.mxu0 0
    %1151 = vmatpush.bf16.xpose.msra.mxu0 0
    %1152 = vmatpush.bf16.xpose.msra.mxu0 0
    %1153 = vmatpush.bf16.xpose.msra.mxu0 0
    %1154 = vmatpush.bf16.xpose.msra.mxu0 0
    %1155 = vmatpush.bf16.xpose.msra.mxu0 %v1146
    %1156 = vmatmul.bf16.gmra.mxu0 %v1143
    %v1157 = vpop.f32.mrf.mxu0
    %v1158 = vadd.f32 %v280, %v1157
    %v1159 = vpop.f32.mrf.mxu0
    %1160 = vdwg.mxu0
    %v1161 = vsel %vm898, %v1134, -inf
    %1162 = vmax.xlane.f32.xlu0 %v1161
    %v1163 = vpop.xlane.xlu0 %1162
    %v1164 = vsel %vm898, %v1158, -inf
    %1165 = vmax.xlane.f32.xlu0 %v1164
    %v1166 = vpop.xlane.xlu0 %1165
    %v1167 = vsub.f32 %v1134, %v1163
    %v1168 = vsub.f32 %v1158, %v1166
    %v1169 = vmul.f32 %v1167, 1.442695
    %v1170 = vpow.pop %v1169
    %v1171 = vmul.f32 %v1168, 1.442695
    %v1172 = vpow.pop %v1171
    %v1173 = vsel %vm898, %v1170, 0.0
    %1174 = vadd.xlane.f32.xlu0 %v1173
    %v1175 = vpop.xlane.xlu0 %1174
    %v1176 = vsel %vm898, %v1172, 0.0
    %1177 = vadd.xlane.f32.xlu0 %v1176
    %v1178 = vpop.xlane.xlu0 %1177
    %v1179 = vrcp.pop %v1175
    %v1180 = vrcp.pop %v1178
    %v1181 = vmul.f32 %v1170, %v1179
    %v1182 = vmul.f32 %v1172, %v1180
    %v1183 = vpack.c.bf16 %v1181, %v1181
    %v1184 = vpack.c.bf16 %v1182, %v1182
    %1185 = vrot.lane.b32.xlu0 %v1117, 96
    %v1186 = vpop.permute.xlu0 %1185
    %v1189 = vsel %vm898, %v1183, 0
    %1191 = vmatpush.bf16.msra.mxu0 0
    %1192 = vmatpush.bf16.msra.mxu0 0
    %1193 = vmatpush.bf16.msra.mxu0 0
    %1194 = vmatpush.bf16.msra.mxu0 0
    %1195 = vmatpush.bf16.msra.mxu0 0
    %1196 = vmatpush.bf16.msra.mxu0 0
    %1197 = vmatpush.bf16.msra.mxu0 0
    %1198 = vmatpush.bf16.msra.mxu0 %v1186
    %1199 = vmatmul.bf16.gmra.mxu0 %v1189
    %v1200 = vpop.f32.mrf.mxu0
    %v1201 = vadd.f32 0.0, %v1200
    %v1202 = vpop.f32.mrf.mxu0
    %1203 = vdwg.mxu0
    %1204 = vrot.lane.b32.xlu0 %v1141, 96
    %v1205 = vpop.permute.xlu0 %1204
    %v1208 = vsel %vm898, %v1184, 0
    %1210 = vmatpush.bf16.msra.mxu0 0
    %1211 = vmatpush.bf16.msra.mxu0 0
    %1212 = vmatpush.bf16.msra.mxu0 0
    %1213 = vmatpush.bf16.msra.mxu0 0
    %1214 = vmatpush.bf16.msra.mxu0 0
    %1215 = vmatpush.bf16.msra.mxu0 0
    %1216 = vmatpush.bf16.msra.mxu0 0
    %1217 = vmatpush.bf16.msra.mxu0 %v1205
    %1218 = vmatmul.bf16.gmra.mxu0 %v1208
    %v1219 = vpop.f32.mrf.mxu0
    %v1220 = vadd.f32 0.0, %v1219
    %v1221 = vpop.f32.mrf.mxu0
    %1222 = vdwg.mxu0
    %v1223 = vpack.c.bf16 %v1201, %v1201
    %v1224 = vpack.c.bf16 %v1220, %v1220
    %v1226 = vunpack.c.l.b16 %v1107
    %v1227 = vpack.c.b16 %v1226, %v1226
    %1228 = vrot.lane.b32.xlu0 %v1227, 120
    %v1229 = vpop.permute.xlu0 %1228
    %1230 = vrot.lane.b32.xlu0 %v1117, 120
    %v1231 = vpop.permute.xlu0 %1230
    %v1233 = vsel %vm401, %v1229, 0
    %v1236 = vsel %vm401, %v1231, 0
    %1238 = vmatpush.bf16.xpose.msra.mxu0 0
    %1239 = vmatpush.bf16.xpose.msra.mxu0 0
    %1240 = vmatpush.bf16.xpose.msra.mxu0 0
    %1241 = vmatpush.bf16.xpose.msra.mxu0 0
    %1242 = vmatpush.bf16.xpose.msra.mxu0 0
    %1243 = vmatpush.bf16.xpose.msra.mxu0 0
    %1244 = vmatpush.bf16.xpose.msra.mxu0 0
    %1245 = vmatpush.bf16.xpose.msra.mxu0 %v1236
    %1246 = vmatmul.bf16.gmra.mxu0 %v1233
    %v1247 = vpop.f32.mrf.mxu0
    %v1248 = vadd.f32 %v279, %v1247
    %v1249 = vpop.f32.mrf.mxu0
    %1250 = vdwg.mxu0
    %v1252 = vunpack.c.l.b16 %v1108
    %v1253 = vpack.c.b16 %v1252, %v1252
    %1254 = vrot.lane.b32.xlu0 %v1253, 120
    %v1255 = vpop.permute.xlu0 %1254
    %1256 = vrot.lane.b32.xlu0 %v1141, 120
    %v1257 = vpop.permute.xlu0 %1256
    %v1259 = vsel %vm401, %v1255, 0
    %v1262 = vsel %vm401, %v1257, 0
    %1264 = vmatpush.bf16.xpose.msra.mxu0 0
    %1265 = vmatpush.bf16.xpose.msra.mxu0 0
    %1266 = vmatpush.bf16.xpose.msra.mxu0 0
    %1267 = vmatpush.bf16.xpose.msra.mxu0 0
    %1268 = vmatpush.bf16.xpose.msra.mxu0 0
    %1269 = vmatpush.bf16.xpose.msra.mxu0 0
    %1270 = vmatpush.bf16.xpose.msra.mxu0 0
    %1271 = vmatpush.bf16.xpose.msra.mxu0 %v1262
    %1272 = vmatmul.bf16.gmra.mxu0 %v1259
    %v1273 = vpop.f32.mrf.mxu0
    %v1274 = vadd.f32 %v280, %v1273
    %v1275 = vpop.f32.mrf.mxu0
    %1276 = vdwg.mxu0
    %v1277 = vsel %vm898, %v1248, -inf
    %1278 = vmax.xlane.f32.xlu0 %v1277
    %v1279 = vpop.xlane.xlu0 %1278
    %v1280 = vsel %vm898, %v1274, -inf
    %1281 = vmax.xlane.f32.xlu0 %v1280
    %v1282 = vpop.xlane.xlu0 %1281
    %v1283 = vsub.f32 %v1248, %v1279
    %v1284 = vsub.f32 %v1274, %v1282
    %v1285 = vmul.f32 %v1283, 1.442695
    %v1286 = vpow.pop %v1285
    %v1287 = vmul.f32 %v1284, 1.442695
    %v1288 = vpow.pop %v1287
    %v1289 = vsel %vm898, %v1286, 0.0
    %1290 = vadd.xlane.f32.xlu0 %v1289
    %v1291 = vpop.xlane.xlu0 %1290
    %v1292 = vsel %vm898, %v1288, 0.0
    %1293 = vadd.xlane.f32.xlu0 %v1292
    %v1294 = vpop.xlane.xlu0 %1293
    %v1295 = vrcp.pop %v1291
    %v1296 = vrcp.pop %v1294
    %v1297 = vmul.f32 %v1286, %v1295
    %v1298 = vmul.f32 %v1288, %v1296
    %v1299 = vpack.c.bf16 %v1297, %v1297
    %v1300 = vpack.c.bf16 %v1298, %v1298
    %1301 = vrot.lane.b32.xlu0 %v1117, 88
    %v1302 = vpop.permute.xlu0 %1301
    %v1305 = vsel %vm898, %v1299, 0
    %1307 = vmatpush.bf16.msra.mxu0 0
    %1308 = vmatpush.bf16.msra.mxu0 0
    %1309 = vmatpush.bf16.msra.mxu0 0
    %1310 = vmatpush.bf16.msra.mxu0 0
    %1311 = vmatpush.bf16.msra.mxu0 0
    %1312 = vmatpush.bf16.msra.mxu0 0
    %1313 = vmatpush.bf16.msra.mxu0 0
    %1314 = vmatpush.bf16.msra.mxu0 %v1302
    %1315 = vmatmul.bf16.gmra.mxu0 %v1305
    %v1316 = vpop.f32.mrf.mxu0
    %v1317 = vadd.f32 0.0, %v1316
    %v1318 = vpop.f32.mrf.mxu0
    %1319 = vdwg.mxu0
    %1320 = vrot.lane.b32.xlu0 %v1141, 88
    %v1321 = vpop.permute.xlu0 %1320
    %v1324 = vsel %vm898, %v1300, 0
    %1326 = vmatpush.bf16.msra.mxu0 0
    %1327 = vmatpush.bf16.msra.mxu0 0
    %1328 = vmatpush.bf16.msra.mxu0 0
    %1329 = vmatpush.bf16.msra.mxu0 0
    %1330 = vmatpush.bf16.msra.mxu0 0
    %1331 = vmatpush.bf16.msra.mxu0 0
    %1332 = vmatpush.bf16.msra.mxu0 0
    %1333 = vmatpush.bf16.msra.mxu0 %v1321
    %1334 = vmatmul.bf16.gmra.mxu0 %v1324
    %v1335 = vpop.f32.mrf.mxu0
    %v1336 = vadd.f32 0.0, %v1335
    %v1337 = vpop.f32.mrf.mxu0
    %1338 = vdwg.mxu0
    %v1339 = vpack.c.bf16 %v1317, %v1317
    %v1340 = vpack.c.bf16 %v1336, %v1336
    %1341 = vrot.lane.b32.xlu0 %v1227, 112
    %v1342 = vpop.permute.xlu0 %1341
    %1343 = vrot.lane.b32.xlu0 %v1117, 112
    %v1344 = vpop.permute.xlu0 %1343
    %v1346 = vsel %vm401, %v1342, 0
    %v1349 = vsel %vm401, %v1344, 0
    %1351 = vmatpush.bf16.xpose.msra.mxu0 0
    %1352 = vmatpush.bf16.xpose.msra.mxu0 0
    %1353 = vmatpush.bf16.xpose.msra.mxu0 0
    %1354 = vmatpush.bf16.xpose.msra.mxu0 0
    %1355 = vmatpush.bf16.xpose.msra.mxu0 0
    %1356 = vmatpush.bf16.xpose.msra.mxu0 0
    %1357 = vmatpush.bf16.xpose.msra.mxu0 0
    %1358 = vmatpush.bf16.xpose.msra.mxu0 %v1349
    %1359 = vmatmul.bf16.gmra.mxu0 %v1346
    %v1360 = vpop.f32.mrf.mxu0
    %v1361 = vadd.f32 %v279, %v1360
    %v1362 = vpop.f32.mrf.mxu0
    %1363 = vdwg.mxu0
    %1364 = vrot.lane.b32.xlu0 %v1253, 112
    %v1365 = vpop.permute.xlu0 %1364
    %1366 = vrot.lane.b32.xlu0 %v1141, 112
    %v1367 = vpop.permute.xlu0 %1366
    %v1369 = vsel %vm401, %v1365, 0
    %v1372 = vsel %vm401, %v1367, 0
    %1374 = vmatpush.bf16.xpose.msra.mxu0 0
    %1375 = vmatpush.bf16.xpose.msra.mxu0 0
    %1376 = vmatpush.bf16.xpose.msra.mxu0 0
    %1377 = vmatpush.bf16.xpose.msra.mxu0 0
    %1378 = vmatpush.bf16.xpose.msra.mxu0 0
    %1379 = vmatpush.bf16.xpose.msra.mxu0 0
    %1380 = vmatpush.bf16.xpose.msra.mxu0 0
    %1381 = vmatpush.bf16.xpose.msra.mxu0 %v1372
    %1382 = vmatmul.bf16.gmra.mxu0 %v1369
    %v1383 = vpop.f32.mrf.mxu0
    %v1384 = vadd.f32 %v280, %v1383
    %v1385 = vpop.f32.mrf.mxu0
    %1386 = vdwg.mxu0
    %v1387 = vsel %vm898, %v1361, -inf
    %1388 = vmax.xlane.f32.xlu0 %v1387
    %v1389 = vpop.xlane.xlu0 %1388
    %v1390 = vsel %vm898, %v1384, -inf
    %1391 = vmax.xlane.f32.xlu0 %v1390
    %v1392 = vpop.xlane.xlu0 %1391
    %v1393 = vsub.f32 %v1361, %v1389
    %v1394 = vsub.f32 %v1384, %v1392
    %v1395 = vmul.f32 %v1393, 1.442695
    %v1396 = vpow.pop %v1395
    %v1397 = vmul.f32 %v1394, 1.442695
    %v1398 = vpow.pop %v1397
    %v1399 = vsel %vm898, %v1396, 0.0
    %1400 = vadd.xlane.f32.xlu0 %v1399
    %v1401 = vpop.xlane.xlu0 %1400
    %v1402 = vsel %vm898, %v1398, 0.0
    %1403 = vadd.xlane.f32.xlu0 %v1402
    %v1404 = vpop.xlane.xlu0 %1403
    %v1405 = vrcp.pop %v1401
    %v1406 = vrcp.pop %v1404
    %v1407 = vmul.f32 %v1396, %v1405
    %v1408 = vmul.f32 %v1398, %v1406
    %v1409 = vpack.c.bf16 %v1407, %v1407
    %v1410 = vpack.c.bf16 %v1408, %v1408
    %1411 = vrot.lane.b32.xlu0 %v1117, 80
    %v1412 = vpop.permute.xlu0 %1411
    %v1415 = vsel %vm898, %v1409, 0
    %1417 = vmatpush.bf16.msra.mxu0 0
    %1418 = vmatpush.bf16.msra.mxu0 0
    %1419 = vmatpush.bf16.msra.mxu0 0
    %1420 = vmatpush.bf16.msra.mxu0 0
    %1421 = vmatpush.bf16.msra.mxu0 0
    %1422 = vmatpush.bf16.msra.mxu0 0
    %1423 = vmatpush.bf16.msra.mxu0 0
    %1424 = vmatpush.bf16.msra.mxu0 %v1412
    %1425 = vmatmul.bf16.gmra.mxu0 %v1415
    %v1426 = vpop.f32.mrf.mxu0
    %v1427 = vadd.f32 0.0, %v1426
    %v1428 = vpop.f32.mrf.mxu0
    %1429 = vdwg.mxu0
    %1430 = vrot.lane.b32.xlu0 %v1141, 80
    %v1431 = vpop.permute.xlu0 %1430
    %v1434 = vsel %vm898, %v1410, 0
    %1436 = vmatpush.bf16.msra.mxu0 0
    %1437 = vmatpush.bf16.msra.mxu0 0
    %1438 = vmatpush.bf16.msra.mxu0 0
    %1439 = vmatpush.bf16.msra.mxu0 0
    %1440 = vmatpush.bf16.msra.mxu0 0
    %1441 = vmatpush.bf16.msra.mxu0 0
    %1442 = vmatpush.bf16.msra.mxu0 0
    %1443 = vmatpush.bf16.msra.mxu0 %v1431
    %1444 = vmatmul.bf16.gmra.mxu0 %v1434
    %v1445 = vpop.f32.mrf.mxu0
    %v1446 = vadd.f32 0.0, %v1445
    %v1447 = vpop.f32.mrf.mxu0
    %1448 = vdwg.mxu0
    %v1449 = vpack.c.bf16 %v1427, %v1427
    %v1450 = vpack.c.bf16 %v1446, %v1446
    %1451 = vrot.lane.b32.xlu0 %v1227, 104
    %v1452 = vpop.permute.xlu0 %1451
    %1453 = vrot.lane.b32.xlu0 %v1117, 104
    %v1454 = vpop.permute.xlu0 %1453
    %v1456 = vsel %vm401, %v1452, 0
    %v1459 = vsel %vm401, %v1454, 0
    %1461 = vmatpush.bf16.xpose.msra.mxu0 0
    %1462 = vmatpush.bf16.xpose.msra.mxu0 0
    %1463 = vmatpush.bf16.xpose.msra.mxu0 0
    %1464 = vmatpush.bf16.xpose.msra.mxu0 0
    %1465 = vmatpush.bf16.xpose.msra.mxu0 0
    %1466 = vmatpush.bf16.xpose.msra.mxu0 0
    %1467 = vmatpush.bf16.xpose.msra.mxu0 0
    %1468 = vmatpush.bf16.xpose.msra.mxu0 %v1459
    %1469 = vmatmul.bf16.gmra.mxu0 %v1456
    %v1470 = vpop.f32.mrf.mxu0
    %v1471 = vadd.f32 %v279, %v1470
    %v1472 = vpop.f32.mrf.mxu0
    %1473 = vdwg.mxu0
    %1474 = vrot.lane.b32.xlu0 %v1253, 104
    %v1475 = vpop.permute.xlu0 %1474
    %1476 = vrot.lane.b32.xlu0 %v1141, 104
    %v1477 = vpop.permute.xlu0 %1476
    %v1479 = vsel %vm401, %v1475, 0
    %v1482 = vsel %vm401, %v1477, 0
    %1484 = vmatpush.bf16.xpose.msra.mxu0 0
    %1485 = vmatpush.bf16.xpose.msra.mxu0 0
    %1486 = vmatpush.bf16.xpose.msra.mxu0 0
    %1487 = vmatpush.bf16.xpose.msra.mxu0 0
    %1488 = vmatpush.bf16.xpose.msra.mxu0 0
    %1489 = vmatpush.bf16.xpose.msra.mxu0 0
    %1490 = vmatpush.bf16.xpose.msra.mxu0 0
    %1491 = vmatpush.bf16.xpose.msra.mxu0 %v1482
    %1492 = vmatmul.bf16.gmra.mxu0 %v1479
    %v1493 = vpop.f32.mrf.mxu0
    %v1494 = vadd.f32 %v280, %v1493
    %v1495 = vpop.f32.mrf.mxu0
    %1496 = vdwg.mxu0
    %v1497 = vsel %vm898, %v1471, -inf
    %1498 = vmax.xlane.f32.xlu0 %v1497
    %v1499 = vpop.xlane.xlu0 %1498
    %v1500 = vsel %vm898, %v1494, -inf
    %1501 = vmax.xlane.f32.xlu0 %v1500
    %v1502 = vpop.xlane.xlu0 %1501
    %v1503 = vsub.f32 %v1471, %v1499
    %v1504 = vsub.f32 %v1494, %v1502
    %v1505 = vmul.f32 %v1503, 1.442695
    %v1506 = vpow.pop %v1505
    %v1507 = vmul.f32 %v1504, 1.442695
    %v1508 = vpow.pop %v1507
    %v1509 = vsel %vm898, %v1506, 0.0
    %1510 = vadd.xlane.f32.xlu0 %v1509
    %v1511 = vpop.xlane.xlu0 %1510
    %v1512 = vsel %vm898, %v1508, 0.0
    %1513 = vadd.xlane.f32.xlu0 %v1512
    %v1514 = vpop.xlane.xlu0 %1513
    %v1515 = vrcp.pop %v1511
    %v1516 = vrcp.pop %v1514
    %v1517 = vmul.f32 %v1506, %v1515
    %v1518 = vmul.f32 %v1508, %v1516
    %v1519 = vpack.c.bf16 %v1517, %v1517
    %v1520 = vpack.c.bf16 %v1518, %v1518
    %1521 = vrot.lane.b32.xlu0 %v1117, 72
    %v1522 = vpop.permute.xlu0 %1521
    %v1525 = vsel %vm898, %v1519, 0
    %1527 = vmatpush.bf16.msra.mxu0 0
    %1528 = vmatpush.bf16.msra.mxu0 0
    %1529 = vmatpush.bf16.msra.mxu0 0
    %1530 = vmatpush.bf16.msra.mxu0 0
    %1531 = vmatpush.bf16.msra.mxu0 0
    %1532 = vmatpush.bf16.msra.mxu0 0
    %1533 = vmatpush.bf16.msra.mxu0 0
    %1534 = vmatpush.bf16.msra.mxu0 %v1522
    %1535 = vmatmul.bf16.gmra.mxu0 %v1525
    %v1536 = vpop.f32.mrf.mxu0
    %v1537 = vadd.f32 0.0, %v1536
    %v1538 = vpop.f32.mrf.mxu0
    %1539 = vdwg.mxu0
    %1540 = vrot.lane.b32.xlu0 %v1141, 72
    %v1541 = vpop.permute.xlu0 %1540
    %v1544 = vsel %vm898, %v1520, 0
    %1546 = vmatpush.bf16.msra.mxu0 0
    %1547 = vmatpush.bf16.msra.mxu0 0
    %1548 = vmatpush.bf16.msra.mxu0 0
    %1549 = vmatpush.bf16.msra.mxu0 0
    %1550 = vmatpush.bf16.msra.mxu0 0
    %1551 = vmatpush.bf16.msra.mxu0 0
    %1552 = vmatpush.bf16.msra.mxu0 0
    %1553 = vmatpush.bf16.msra.mxu0 %v1541
    %1554 = vmatmul.bf16.gmra.mxu0 %v1544
    %v1555 = vpop.f32.mrf.mxu0
    %v1556 = vadd.f32 0.0, %v1555
    %v1557 = vpop.f32.mrf.mxu0
    %1558 = vdwg.mxu0
    %v1559 = vpack.c.bf16 %v1537, %v1537
    %v1560 = vpack.c.bf16 %v1556, %v1556
    %v1563 = vunpack.c.l.b16 %v1339
    %v1564 = vunpack.c.l.b16 %v1340
    %v1565 = vpack.c.b16 %v1563, %v1563
    %v1566 = vpack.c.b16 %v1564, %v1564
    %1567 = vrot.lane.b32.xlu0 %v1565, 8
    %v1568 = vpop.permute.xlu0 %1567
    %1569 = vrot.lane.b32.xlu0 %v1566, 8
    %v1570 = vpop.permute.xlu0 %1569
    %v1573 = vunpack.c.l.b16 %v1449
    %v1574 = vunpack.c.l.b16 %v1450
    %v1575 = vpack.c.b16 %v1573, %v1573
    %v1576 = vpack.c.b16 %v1574, %v1574
    %1577 = vrot.lane.b32.xlu0 %v1575, 16
    %v1578 = vpop.permute.xlu0 %1577
    %1579 = vrot.lane.b32.xlu0 %v1576, 16
    %v1580 = vpop.permute.xlu0 %1579
    %v1583 = vunpack.c.l.b16 %v1559
    %v1584 = vunpack.c.l.b16 %v1560
    %v1585 = vpack.c.b16 %v1583, %v1583
    %v1586 = vpack.c.b16 %v1584, %v1584
    %1587 = vrot.lane.b32.xlu0 %v1585, 24
    %v1588 = vpop.permute.xlu0 %1587
    %1589 = vrot.lane.b32.xlu0 %v1586, 24
    %v1590 = vpop.permute.xlu0 %1589
    %v1593 = vsel %vm401, %v1223, %v1568
    %v1596 = vsel %vm401, %v1224, %v1570
    %v1598 = vsel %vm898, %v1593, %v1578
    %v1600 = vsel %vm898, %v1596, %v1580
    %v1602 = vsel %vm903, %v1598, %v1588
    %v1604 = vsel %vm903, %v1600, %v1590
    %v1606 = vperm.slane %v1104, 0
    %v1610 = vunpack.c.l.b16 %v1602
    %v1611 = vunpack.c.l.b16 %v1604
    %v1612 = vpack.c.b16 %v1611, %v1610
    %v1617 = vunpack.c.l.b16 %v1100
    %v1618 = vunpack.c.l.b16 %v1101
    %v1619 = vunpack.c.l.b16 %v1102
    %v1620 = vunpack.c.l.b16 %v1103
    %v1621 = vpack.c.b16 %v1618, %v1617
    %v1622 = vpack.c.b16 %v1620, %v1619
    %v1626 = vsel %vm283, %v1612, 0
    %1628 = vmatpush.bf16.msra.mxu0 0
    %1629 = vmatpush.bf16.msra.mxu0 0
    %1630 = vmatpush.bf16.msra.mxu0 0
    %1631 = vmatpush.bf16.msra.mxu0 0
    %1632 = vmatpush.bf16.msra.mxu0 0
    %1633 = vmatpush.bf16.msra.mxu0 0
    %1634 = vmatpush.bf16.msra.mxu0 %v1622
    %1635 = vmatpush.bf16.msra.mxu0 %v1621
    %1636 = vmatmul.bf16.gmra.mxu0 %v1626
    %v1637 = vpop.f32.mrf.mxu0
    %v1638 = vadd.f32 %v1606, %v1637
    %v1639 = vpop.f32.mrf.mxu0
    %v1640 = vadd.f32 %v1606, %v1639
    %1641 = vdwg.mxu0
    %v1642 = vadd.f32 %v945, %v1638
    %v1643 = vadd.f32 %v946, %v1640
    %v1644 = vld [vmem:[#allocation16] sm:$0x1]
    %v1645 = vld [vmem:[#allocation17] sm:$0x1]
    %v1646 = vsel %vm283, %v1642, 0.0
    %1647 = vadd.xlane.f32.xlu0 %v1646
    %v1648 = vpop.xlane.xlu0 %1647
    %v1649 = vsel %vm283, %v1643, 0.0
    %1650 = vadd.xlane.f32.xlu0 %v1649
    %v1651 = vpop.xlane.xlu0 %1650
    %v1652 = vmul.f32 %v1648, %v296
    %v1653 = vmul.f32 %v1651, %v296
    %v1654 = vsub.f32 %v1642, %v1652
    %v1655 = vsub.f32 %v1643, %v1653
    %v1656 = vmul.f32 %v1654, %v1654
    %v1657 = vmul.f32 %v1655, %v1655
    %v1658 = vsel %vm283, %v1656, 0.0
    %1659 = vadd.xlane.f32.xlu0 %v1658
    %v1660 = vpop.xlane.xlu0 %1659
    %v1661 = vsel %vm283, %v1657, 0.0
    %1662 = vadd.xlane.f32.xlu0 %v1661
    %v1663 = vpop.xlane.xlu0 %1662
    %v1664 = vmul.f32 %v1660, %v296
    %v1665 = vmul.f32 %v1663, %v296
    %v1666 = vadd.f32 %v1664, 1e-05
    %v1667 = vadd.f32 %v1665, 1e-05
    %v1668 = vrsqrt.pop %v1666
    %v1669 = vmul.f32 %v1668, %v1666
    %v1670 = vmul.f32 %v1669, %v1668
    %v1671 = vmul.f32 0.5, %v1670
    %v1672 = vsub.f32 1.5, %v1671
    %v1673 = vmul.f32 %v1668, %v1672
    %vm1674 = vweird.f32 %v1666
    %vm1675 = vweird.f32 %v1668
    %vm1676 = vmor %vm1674, %vm1675
    %v1677 = vsel %vm1676, %v1668, %v1673
    %v1678 = vrsqrt.pop %v1667
    %v1679 = vmul.f32 %v1678, %v1667
    %v1680 = vmul.f32 %v1679, %v1678
    %v1681 = vmul.f32 0.5, %v1680
    %v1682 = vsub.f32 1.5, %v1681
    %v1683 = vmul.f32 %v1678, %v1682
    %vm1684 = vweird.f32 %v1667
    %vm1685 = vweird.f32 %v1678
    %vm1686 = vmor %vm1684, %vm1685
    %v1687 = vsel %vm1686, %v1678, %v1683
    %v1688 = vmul.f32 %v1654, %v1677
    %v1689 = vmul.f32 %v1655, %v1687
    %v1691 = vperm.slane %v1644, 0
    %v1693 = vmul.f32 %v1688, %v1691
    %v1694 = vmul.f32 %v1689, %v1691
    %v1696 = vperm.slane %v1645, 0
    %v1698 = vadd.f32 %v1693, %v1696
    %v1699 = vadd.f32 %v1694, %v1696
    %v1700 = vpack.c.bf16 %v1699, %v1698
    %v1701 = vld [vmem:[#allocation19] sm:$0xf]
    %v1702 = vld [vmem:[#allocation19 + $0x4] sm:$0xf]
    %v1703 = vld [vmem:[#allocation19 + $0x8] sm:$0xf]
    %v1704 = vld [vmem:[#allocation19 + $0xc] sm:$0xf]
    %v1705 = vld [vmem:[#allocation20] sm:$0x1]
    %v1707 = vperm.slane %v1705, 0
    %v1713 = vunpack.c.l.b16 %v1701
    %v1714 = vunpack.c.l.b16 %v1702
    %v1715 = vunpack.c.l.b16 %v1703
    %v1716 = vunpack.c.l.b16 %v1704
    %v1717 = vpack.c.b16 %v1714, %v1713
    %v1718 = vpack.c.b16 %v1716, %v1715
    %v1722 = vsel %vm283, %v1700, 0
    %1724 = vmatpush.bf16.msra.mxu0 0
    %1725 = vmatpush.bf16.msra.mxu0 0
    %1726 = vmatpush.bf16.msra.mxu0 0
    %1727 = vmatpush.bf16.msra.mxu0 0
    %1728 = vmatpush.bf16.msra.mxu0 0
    %1729 = vmatpush.bf16.msra.mxu0 0
    %1730 = vmatpush.bf16.msra.mxu0 %v1718
    %1731 = vmatpush.bf16.msra.mxu0 %v1717
    %1732 = vmatmul.bf16.gmra.mxu0 %v1722
    %v1733 = vpop.f32.mrf.mxu0
    %v1734 = vadd.f32 %v1707, %v1733
    %v1735 = vpop.f32.mrf.mxu0
    %v1736 = vadd.f32 %v1707, %v1735
    %1737 = vdwg.mxu0
    %v1738 = vmul.f32 %v1734, 1.702
    %v1739 = vmul.f32 %v1736, 1.702
    %v1740 = vxor.u32 %v1738, 2147483648
    %v1741 = vxor.u32 %v1739, 2147483648
    %v1742 = vmul.f32 %v1740, 1.442695
    %v1743 = vpow.pop %v1742
    %v1744 = vmul.f32 %v1741, 1.442695
    %v1745 = vpow.pop %v1744
    %v1746 = vadd.f32 %v1743, 1.0
    %v1747 = vadd.f32 %v1745, 1.0
    %v1748 = vrcp.pop %v1746
    %v1749 = vmul.f32 %v1746, %v1748
    %v1750 = vsub.f32 1.0, %v1749
    %v1751 = vmul.f32 %v1748, %v1750
    %v1752 = vadd.f32 %v1748, %v1751
    %vm1753 = vweird.f32 %v1746
    %vm1754 = vweird.f32 %v1748
    %vm1755 = vmor %vm1753, %vm1754
    %v1756 = vsel %vm1755, %v1748, %v1752
    %v1757 = vand.u32 2147483647, %v1746
    %vm1758 = vcmp.eq.f32.partialorder %v1757, 8.507059e+37
    %v1759 = vand.u32 %v1746, 2147483648
    %v1760 = vor.u32 1.1754944e-38, %v1759
    %v1761 = vsel %vm1758, %v1760, %v1756
    %v1762 = vmul.f32 1.0, %v1761
    %v1763 = vrcp.pop %v1747
    %v1764 = vmul.f32 %v1747, %v1763
    %v1765 = vsub.f32 1.0, %v1764
    %v1766 = vmul.f32 %v1763, %v1765
    %v1767 = vadd.f32 %v1763, %v1766
    %vm1768 = vweird.f32 %v1747
    %vm1769 = vweird.f32 %v1763
    %vm1770 = vmor %vm1768, %vm1769
    %v1771 = vsel %vm1770, %v1763, %v1767
    %v1772 = vand.u32 2147483647, %v1747
    %vm1773 = vcmp.eq.f32.partialorder %v1772, 8.507059e+37
    %v1774 = vand.u32 %v1747, 2147483648
    %v1775 = vor.u32 1.1754944e-38, %v1774
    %v1776 = vsel %vm1773, %v1775, %v1771
    %v1777 = vmul.f32 1.0, %v1776
    %v1778 = vmul.f32 %v1734, %v1762
    %v1779 = vmul.f32 %v1736, %v1777
    %v1780 = vpack.c.bf16 %v1779, %v1778
    %v1781 = vld [vmem:[%s22] sm:$0xf]
    %v1782 = vld [vmem:[%s22 + $0x4] sm:$0xf]
    %v1783 = vld [vmem:[%s22 + $0x8] sm:$0xf]
    %v1784 = vld [vmem:[%s22 + $0xc] sm:$0xf]
    %v1785 = vld [vmem:[%s22 + $0x10] sm:$0xf]
    %v1786 = vld [vmem:[%s22 + $0x14] sm:$0xf]
    %v1787 = vld [vmem:[%s22 + $0x18] sm:$0xf]
    %v1788 = vld [vmem:[%s22 + $0x1c] sm:$0xf]
    %v1789 = vld [vmem:[%s22 + $0x20] sm:$0xf]
    %v1790 = vld [vmem:[%s22 + $0x24] sm:$0xf]
    %v1791 = vld [vmem:[%s22 + $0x28] sm:$0xf]
    %v1792 = vld [vmem:[%s22 + $0x2c] sm:$0xf]
    %v1793 = vld [vmem:[%s22 + $0x30] sm:$0xf]
    %v1794 = vld [vmem:[%s22 + $0x34] sm:$0xf]
    %v1795 = vld [vmem:[%s22 + $0x38] sm:$0xf]
    %v1796 = vld [vmem:[%s22 + $0x3c] sm:$0xf]
    %v1797 = vld [vmem:[#allocation22] sm:$0x1]
    %v1799 = vperm.slane %v1797, 0
    %v1817 = vunpack.c.l.b16 %v1781
    %v1818 = vunpack.c.l.b16 %v1782
    %v1819 = vunpack.c.l.b16 %v1783
    %v1820 = vunpack.c.l.b16 %v1784
    %v1821 = vunpack.c.l.b16 %v1785
    %v1822 = vunpack.c.l.b16 %v1786
    %v1823 = vunpack.c.l.b16 %v1787
    %v1824 = vunpack.c.l.b16 %v1788
    %v1825 = vunpack.c.l.b16 %v1789
    %v1826 = vunpack.c.l.b16 %v1790
    %v1827 = vunpack.c.l.b16 %v1791
    %v1828 = vunpack.c.l.b16 %v1792
    %v1829 = vunpack.c.l.b16 %v1793
    %v1830 = vunpack.c.l.b16 %v1794
    %v1831 = vunpack.c.l.b16 %v1795
    %v1832 = vunpack.c.l.b16 %v1796
    %v1833 = vpack.c.b16 %v1818, %v1817
    %v1834 = vpack.c.b16 %v1820, %v1819
    %v1835 = vpack.c.b16 %v1822, %v1821
    %v1836 = vpack.c.b16 %v1824, %v1823
    %v1837 = vpack.c.b16 %v1826, %v1825
    %v1838 = vpack.c.b16 %v1828, %v1827
    %v1839 = vpack.c.b16 %v1830, %v1829
    %v1840 = vpack.c.b16 %v1832, %v1831
    %1849 = vmatpush.bf16.msra.mxu0 %v1840
    %1850 = vmatpush.bf16.msra.mxu0 %v1839
    %1851 = vmatpush.bf16.msra.mxu0 %v1838
    %1852 = vmatpush.bf16.msra.mxu0 %v1837
    %1853 = vmatpush.bf16.msra.mxu0 %v1836
    %1854 = vmatpush.bf16.msra.mxu0 %v1835
    %1855 = vmatpush.bf16.msra.mxu0 %v1834
    %1856 = vmatpush.bf16.msra.mxu0 %v1833
    %1857 = vmatmul.bf16.gmra.mxu0 %v1780
    %v1858 = vpop.f32.mrf.mxu0
    %v1859 = vadd.f32 %v1799, %v1858
    %v1860 = vpop.f32.mrf.mxu0
    %v1861 = vadd.f32 %v1799, %v1860
    %1862 = vdwg.mxu0
    %v1863 = vadd.f32 %v1642, %v1859
    %v1864 = vadd.f32 %v1643, %v1861
    %1865 = vst.msk [vmem:[#allocation23] sm:$0xff] %vm283, %v1863
    %1866 = vst.msk [vmem:[#allocation23 + $0x8] sm:$0xff] %vm283, %v1864
    // Predicated region
    $region150: #{tpu_custom_call.1} parent=1 // pred_check
      _
    $region151: #{tpu_custom_call.1} parent=1 // pred_check_branch
      %1868 = sbr.rel (0) target = $region153
    $region152: #{tpu_custom_call.1} parent=1 // pred_region
      %1870 = vsyncadd [#allocation4], 0
      %s1871 = sshll.u32 [#allocation23], 4
      %s1872 = int_to_ptr.vmem [resolvable:$true] %s1871
      %s1873 = sshll.u32 %s24, 4
      %s1874 = int_to_ptr.hbm [resolvable:$true] %s1873
      %1879 = dma.vmem_to_hbm [thread:$0]  %s1872, 256, %s1874, [#allocation4], 128, 128, 8
    $region153: #{tpu_custom_call.1} parent=1 // pred_fallthru
      _
    // Predicated region
    $region154: #{tpu_custom_call.1} parent=1 // pred_check
      _
    $region155: #{tpu_custom_call.1} parent=1 // pred_check_branch
      %1881 = sbr.rel (0) target = $region157
    $region156: #{tpu_custom_call.1} parent=1 // pred_region
      %1883 = dma.done [#allocation4], 256
    $region157: #{tpu_custom_call.1} parent=1 // pred_fallthru
      _
    %1884 = vsyncpa [#allocation3], 1
    %1885 = vsyncpa [#allocation6], 1
    %1886 = vsyncpa [#allocation9], 1
    %1887 = vsyncpa [#allocation12], 1
    %1888 = vsyncpa [#allocation15], 1
    %1889 = vsyncpa [#allocation18], 1
    %1890 = vsyncpa [#allocation21], 1
    %1891 = vsyncpa [#allocation4], 1

// kernel: tpu_custom_call.1
$region0: #{tpu_custom_call.1}
  #allocation0 [shape = 'u32[]', space=smem, size = 0x4, offset = 0x4, fixed_abs, tag = 'smem constant byte address 0x4 - core index']
  #allocation1 [shape = 'u32[72,128]{1,0:T(1,128)}', space=vmem, size = 0x9000, scoped, tag = 'internal scratch']
  %s0 = inlined_call_operand.hbm [shape: bf16[2,8,32], index: 0, kind: input, shape index: {}]
  %s1 = inlined_call_operand.vmem [shape: bf16[2,16,32], index: 1, kind: input, shape index: {}]
  %s2 = inlined_call_operand.hbm [shape: bf16[2,8,8], index: 2, kind: input, shape index: {}]
  %s3 = inlined_call_operand.hbm [shape: bf16[2,8,16], index: 3, kind: input, shape index: {}]
  %s4 = inlined_call_operand.vmem [shape: f32[1,32], index: 4, kind: input, shape index: {}]
  %s5 = inlined_call_operand.vmem [shape: f32[1,32], index: 5, kind: input, shape index: {}]
  %s6 = inlined_call_operand.vmem [shape: bf16[32,96], index: 6, kind: input, shape index: {}]
  %s7 = inlined_call_operand.vmem [shape: f32[1,96], index: 7, kind: input, shape index: {}]
  %s8 = inlined_call_operand.vmem [shape: bf16[32,32], index: 8, kind: input, shape index: {}]
  %s9 = inlined_call_operand.vmem [shape: f32[1,32], index: 9, kind: input, shape index: {}]
  %s10 = inlined_call_operand.vmem [shape: f32[1,32], index: 10, kind: input, shape index: {}]
  %s11 = inlined_call_operand.hbm [shape: f32[1,32], index: 11, kind: input, shape index: {}]
  %s12 = inlined_call_operand.vmem [shape: bf16[32,32], index: 12, kind: input, shape index: {}]
  %s13 = inlined_call_operand.vmem [shape: bf16[32,64], index: 13, kind: input, shape index: {}]
  %s14 = inlined_call_operand.hbm [shape: f32[1,32], index: 14, kind: input, shape index: {}]
  %s15 = inlined_call_operand.hbm [shape: f32[1,64], index: 15, kind: input, shape index: {}]
  %s16 = inlined_call_operand.hbm [shape: bf16[32,32], index: 16, kind: input, shape index: {}]
  %s17 = inlined_call_operand.hbm [shape: f32[1,32], index: 17, kind: input, shape index: {}]
  %s18 = inlined_call_operand.hbm [shape: f32[1,32], index: 18, kind: input, shape index: {}]
  %s19 = inlined_call_operand.hbm [shape: f32[1,32], index: 19, kind: input, shape index: {}]
  %s20 = inlined_call_operand.hbm [shape: bf16[32,128], index: 20, kind: input, shape index: {}]
  %s21 = inlined_call_operand.hbm [shape: f32[1,128], index: 21, kind: input, shape index: {}]
  %s22 = inlined_call_operand.vmem [shape: bf16[128,32], index: 22, kind: input, shape index: {}]
  %s23 = inlined_call_operand.hbm [shape: f32[1,32], index: 23, kind: input, shape index: {}]
  %s24 = inlined_call_operand.hbm [shape: f32[2,8,32], index: 24, kind: output, shape index: {}]
  %s25 = sld [smem:[#allocation0]]
  $region158: #{tpu_custom_call.1} parent=0
    _
  %s27 = ssub.s32 1, %s25
  %s28 = scalar_select 0, %s27, %s25
  $region1: #{tpu_custom_call.1} parent=0
    #allocation2 [shape = 'u8[4096]{0}', space=vmem, size = 0x1000, scoped, tag = 'input window, operand 0, single buffered']
    #allocation3 [shape = 's32[1]{0}', space=sflag, size = 0x4, scoped, tag = 'scoped memory for tpu_custom_call.1']
    #allocation4 [shape = 's32[1]{0}', space=sflag, size = 0x4, scoped, tag = 'scoped memory for tpu_custom_call.1']
    #allocation5 [shape = 'u8[4096]{0}', space=vmem, size = 0x1000, scoped, tag = 'input window, operand 2, single buffered']
    #allocation6 [shape = 's32[1]{0}', space=sflag, size = 0x4, scoped, tag = 'scoped memory for tpu_custom_call.1']
    #allocation7 [shape = 'u8[4096]{0}', space=vmem, size = 0x1000, scoped, tag = 'input window, operand 3, single buffered']
    #allocation8 [shape = 'u8[512]{0}', space=vmem, size = 0x400, scoped, tag = 'input window, operand 11, single buffered']
    #allocation9 [shape = 's32[1]{0}', space=sflag, size = 0x4, scoped, tag = 'scoped memory for tpu_custom_call.1']
    #allocation10 [shape = 'u8[512]{0}', space=vmem, size = 0x400, scoped, tag = 'input window, operand 14, single buffered']
    #allocation11 [shape = 'u8[512]{0}', space=vmem, size = 0x400, scoped, tag = 'input window, operand 15, single buffered']
    #allocation12 [shape = 's32[1]{0}', space=sflag, size = 0x4, scoped, tag = 'scoped memory for tpu_custom_call.1']
    #allocation13 [shape = 'u8[8192]{0}', space=vmem, size = 0x2000, scoped, tag = 'input window, operand 16, single buffered']
    #allocation14 [shape = 'u8[512]{0}', space=vmem, size = 0x400, scoped, tag = 'input window, operand 17, single buffered']
    #allocation15 [shape = 's32[1]{0}', space=sflag, size = 0x4, scoped, tag = 'scoped memory for tpu_custom_call.1']
    #allocation16 [shape = 'u8[512]{0}', space=vmem, size = 0x400, scoped, tag = 'input window, operand 18, single buffered']
    #allocation17 [shape = 'u8[512]{0}', space=vmem, size = 0x400, scoped, tag = 'input window, operand 19, single buffered']
    #allocation18 [shape = 's32[1]{0}', space=sflag, size = 0x4, scoped, tag = 'scoped memory for tpu_custom_call.1']
    #allocation19 [shape = 'u8[8192]{0}', space=vmem, size = 0x2000, scoped, tag = 'input window, operand 20, single buffered']
    #allocation20 [shape = 'u8[512]{0}', space=vmem, size = 0x400, scoped, tag = 'input window, operand 21, single buffered']
    #allocation21 [shape = 's32[1]{0}', space=sflag, size = 0x4, scoped, tag = 'scoped memory for tpu_custom_call.1']
    #allocation22 [shape = 'u8[512]{0}', space=vmem, size = 0x400, scoped, tag = 'input window, operand 23, single buffered']
    #allocation23 [shape = 'u8[8192]{0}', space=vmem, size = 0x2000, scoped, tag = 'output window, operand 0, single buffered']
    %29 = vsyncpa [#allocation3], 0
    %30 = vsyncpa [#allocation6], 0
    %31 = vsyncpa [#allocation9], 0
    %32 = vsyncpa [#allocation12], 0
    %33 = vsyncpa [#allocation15], 0
    %34 = vsyncpa [#allocation18], 0
    %35 = vsyncpa [#allocation21], 0
    %36 = vsyncpa [#allocation4], 0
    // Predicated region
    $region2: #{tpu_custom_call.1} parent=1 // pred_check
      _
    $region3: #{tpu_custom_call.1} parent=1 // pred_check_branch
      %38 = sbr.rel (0) target = $region5
    $region4: #{tpu_custom_call.1} parent=1 // pred_region
      %40 = vsyncadd [#allocation3], 0
      %s41 = sshll.u32 %s0, 4
      %s42 = int_to_ptr.hbm [resolvable:$true] %s41
      %s43 = sshll.u32 [#allocation2], 4
      %s44 = int_to_ptr.vmem [resolvable:$true] %s43
      %49 = dma.hbm_to_vmem [thread:$0]  %s42, 128, %s44, [#allocation3], 64, 64, 4
    $region5: #{tpu_custom_call.1} parent=1 // pred_fallthru
      _
    // Predicated region
    $region6: #{tpu_custom_call.1} parent=1 // pred_check
      _
    $region7: #{tpu_custom_call.1} parent=1 // pred_check_branch
      %51 = sbr.rel (0) target = $region9
    $region8: #{tpu_custom_call.1} parent=1 // pred_region
      _
    $region9: #{tpu_custom_call.1} parent=1 // pred_fallthru
      _
    // Predicated region
    $region10: #{tpu_custom_call.1} parent=1 // pred_check
      _
    $region11: #{tpu_custom_call.1} parent=1 // pred_check_branch
      %53 = sbr.rel (0) target = $region13
    $region12: #{tpu_custom_call.1} parent=1 // pred_region
      %55 = vsyncadd [#allocation6], 0
      %s56 = sshll.u32 %s2, 4
      %s57 = int_to_ptr.hbm [resolvable:$true] %s56
      %s58 = sshll.u32 [#allocation5], 4
      %s59 = int_to_ptr.vmem [resolvable:$true] %s58
      %64 = dma.hbm_to_vmem [thread:$0]  %s57, 128, %s59, [#allocation6], 64, 64, 4
    $region13: #{tpu_custom_call.1} parent=1 // pred_fallthru
      _
    // Predicated region
    $region14: #{tpu_custom_call.1} parent=1 // pred_check
      _
    $region15: #{tpu_custom_call.1} parent=1 // pred_check_branch
      %66 = sbr.rel (0) target = $region17
    $region16: #{tpu_custom_call.1} parent=1 // pred_region
      %68 = vsyncadd [#allocation6], 0
      %s69 = sshll.u32 %s3, 4
      %s70 = int_to_ptr.hbm [resolvable:$true] %s69
      %s71 = sshll.u32 [#allocation7], 4
      %s72 = int_to_ptr.vmem [resolvable:$true] %s71
      %77 = dma.hbm_to_vmem [thread:$0]  %s70, 128, %s72, [#allocation6], 64, 64, 4
    $region17: #{tpu_custom_call.1} parent=1 // pred_fallthru
      _
    // Predicated region
    $region18: #{tpu_custom_call.1} parent=1 // pred_check
      _
    $region19: #{tpu_custom_call.1} parent=1 // pred_check_branch
      %79 = sbr.rel (0) target = $region21
    $region20: #{tpu_custom_call.1} parent=1 // pred_region
      _
    $region21: #{tpu_custom_call.1} parent=1 // pred_fallthru
      _
    // Predicated region
    $region22: #{tpu_custom_call.1} parent=1 // pred_check
      _
    $region23: #{tpu_custom_call.1} parent=1 // pred_check_branch
      %81 = sbr.rel (0) target = $region25
    $region24: #{tpu_custom_call.1} parent=1 // pred_region
      _
    $region25: #{tpu_custom_call.1} parent=1 // pred_fallthru
      _
    // Predicated region
    $region26: #{tpu_custom_call.1} parent=1 // pred_check
      _
    $region27: #{tpu_custom_call.1} parent=1 // pred_check_branch
      %83 = sbr.rel (0) target = $region29
    $region28: #{tpu_custom_call.1} parent=1 // pred_region
      _
    $region29: #{tpu_custom_call.1} parent=1 // pred_fallthru
      _
    // Predicated region
    $region30: #{tpu_custom_call.1} parent=1 // pred_check
      _
    $region31: #{tpu_custom_call.1} parent=1 // pred_check_branch
      %85 = sbr.rel (0) target = $region33
    $region32: #{tpu_custom_call.1} parent=1 // pred_region
      _
    $region33: #{tpu_custom_call.1} parent=1 // pred_fallthru
      _
    // Predicated region
    $region34: #{tpu_custom_call.1} parent=1 // pred_check
      _
    $region35: #{tpu_custom_call.1} parent=1 // pred_check_branch
      %87 = sbr.rel (0) target = $region37
    $region36: #{tpu_custom_call.1} parent=1 // pred_region
      _
    $region37: #{tpu_custom_call.1} parent=1 // pred_fallthru
      _
    // Predicated region
    $region38: #{tpu_custom_call.1} parent=1 // pred_check
      _
    $region39: #{tpu_custom_call.1} parent=1 // pred_check_branch
      %89 = sbr.rel (0) target = $region41
    $region40: #{tpu_custom_call.1} parent=1 // pred_region
      _
    $region41: #{tpu_custom_call.1} parent=1 // pred_fallthru
      _
    // Predicated region
    $region42: #{tpu_custom_call.1} parent=1 // pred_check
      _
    $region43: #{tpu_custom_call.1} parent=1 // pred_check_branch
      %91 = sbr.rel (0) target = $region45
    $region44: #{tpu_custom_call.1} parent=1 // pred_region
      _
    $region45: #{tpu_custom_call.1} parent=1 // pred_fallthru
      _
    // Predicated region
    $region46: #{tpu_custom_call.1} parent=1 // pred_check
      _
    $region47: #{tpu_custom_call.1} parent=1 // pred_check_branch
      %93 = sbr.rel (0) target = $region49
    $region48: #{tpu_custom_call.1} parent=1 // pred_region
      %95 = vsyncadd [#allocation9], 0
      %s97 = sshll.u32 %s11, 4
      %s98 = int_to_ptr.hbm [resolvable:$true] %s97
      %s99 = sshll.u32 [#allocation8], 4
      %s100 = int_to_ptr.vmem [resolvable:$true] %s99
      %102 = dma.hbm_to_vmem [thread:$0]  %s98, 16, %s100, [#allocation9]
    $region49: #{tpu_custom_call.1} parent=1 // pred_fallthru
      _
    // Predicated region
    $region50: #{tpu_custom_call.1} parent=1 // pred_check
      _
    $region51: #{tpu_custom_call.1} parent=1 // pred_check_branch
      %104 = sbr.rel (0) target = $region53
    $region52: #{tpu_custom_call.1} parent=1 // pred_region
      _
    $region53: #{tpu_custom_call.1} parent=1 // pred_fallthru
      _
    // Predicated region
    $region54: #{tpu_custom_call.1} parent=1 // pred_check
      _
    $region55: #{tpu_custom_call.1} parent=1 // pred_check_branch
      %106 = sbr.rel (0) target = $region57
    $region56: #{tpu_custom_call.1} parent=1 // pred_region
      _
    $region57: #{tpu_custom_call.1} parent=1 // pred_fallthru
      _
    // Predicated region
    $region58: #{tpu_custom_call.1} parent=1 // pred_check
      _
    $region59: #{tpu_custom_call.1} parent=1 // pred_check_branch
      %108 = sbr.rel (0) target = $region61
    $region60: #{tpu_custom_call.1} parent=1 // pred_region
      %110 = vsyncadd [#allocation9], 0
      %s112 = sshll.u32 %s14, 4
      %s113 = int_to_ptr.hbm [resolvable:$true] %s112
      %s114 = sshll.u32 [#allocation10], 4
      %s115 = int_to_ptr.vmem [resolvable:$true] %s114
      %117 = dma.hbm_to_vmem [thread:$0]  %s113, 16, %s115, [#allocation9]
    $region61: #{tpu_custom_call.1} parent=1 // pred_fallthru
      _
    // Predicated region
    $region62: #{tpu_custom_call.1} parent=1 // pred_check
      _
    $region63: #{tpu_custom_call.1} parent=1 // pred_check_branch
      %119 = sbr.rel (0) target = $region65
    $region64: #{tpu_custom_call.1} parent=1 // pred_region
      %121 = vsyncadd [#allocation12], 0
      %s123 = sshll.u32 %s15, 4
      %s124 = int_to_ptr.hbm [resolvable:$true] %s123
      %s125 = sshll.u32 [#allocation11], 4
      %s126 = int_to_ptr.vmem [resolvable:$true] %s125
      %128 = dma.hbm_to_vmem [thread:$0]  %s124, 16, %s126, [#allocation12]
    $region65: #{tpu_custom_call.1} parent=1 // pred_fallthru
      _
    // Predicated region
    $region66: #{tpu_custom_call.1} parent=1 // pred_check
      _
    $region67: #{tpu_custom_call.1} parent=1 // pred_check_branch
      %130 = sbr.rel (0) target = $region69
    $region68: #{tpu_custom_call.1} parent=1 // pred_region
      %132 = vsyncadd [#allocation12], 0
      %s133 = sshll.u32 %s16, 4
      %s134 = int_to_ptr.hbm [resolvable:$true] %s133
      %s135 = sshll.u32 [#allocation13], 4
      %s136 = int_to_ptr.vmem [resolvable:$true] %s135
      %141 = dma.hbm_to_vmem [thread:$0]  %s134, 256, %s136, [#allocation12], 64, 64, 4
    $region69: #{tpu_custom_call.1} parent=1 // pred_fallthru
      _
    // Predicated region
    $region70: #{tpu_custom_call.1} parent=1 // pred_check
      _
    $region71: #{tpu_custom_call.1} parent=1 // pred_check_branch
      %143 = sbr.rel (0) target = $region73
    $region72: #{tpu_custom_call.1} parent=1 // pred_region
      %145 = vsyncadd [#allocation15], 0
      %s147 = sshll.u32 %s17, 4
      %s148 = int_to_ptr.hbm [resolvable:$true] %s147
      %s149 = sshll.u32 [#allocation14], 4
      %s150 = int_to_ptr.vmem [resolvable:$true] %s149
      %152 = dma.hbm_to_vmem [thread:$0]  %s148, 16, %s150, [#allocation15]
    $region73: #{tpu_custom_call.1} parent=1 // pred_fallthru
      _
    // Predicated region
    $region74: #{tpu_custom_call.1} parent=1 // pred_check
      _
    $region75: #{tpu_custom_call.1} parent=1 // pred_check_branch
      %154 = sbr.rel (0) target = $region77
    $region76: #{tpu_custom_call.1} parent=1 // pred_region
      %156 = vsyncadd [#allocation15], 0
      %s158 = sshll.u32 %s18, 4
      %s159 = int_to_ptr.hbm [resolvable:$true] %s158
      %s160 = sshll.u32 [#allocation16], 4
      %s161 = int_to_ptr.vmem [resolvable:$true] %s160
      %163 = dma.hbm_to_vmem [thread:$0]  %s159, 16, %s161, [#allocation15]
    $region77: #{tpu_custom_call.1} parent=1 // pred_fallthru
      _
    // Predicated region
    $region78: #{tpu_custom_call.1} parent=1 // pred_check
      _
    $region79: #{tpu_custom_call.1} parent=1 // pred_check_branch
      %165 = sbr.rel (0) target = $region81
    $region80: #{tpu_custom_call.1} parent=1 // pred_region
      %167 = vsyncadd [#allocation18], 0
      %s169 = sshll.u32 %s19, 4
      %s170 = int_to_ptr.hbm [resolvable:$true] %s169
      %s171 = sshll.u32 [#allocation17], 4
      %s172 = int_to_ptr.vmem [resolvable:$true] %s171
      %174 = dma.hbm_to_vmem [thread:$0]  %s170, 16, %s172, [#allocation18]
    $region81: #{tpu_custom_call.1} parent=1 // pred_fallthru
      _
    // Predicated region
    $region82: #{tpu_custom_call.1} parent=1 // pred_check
      _
    $region83: #{tpu_custom_call.1} parent=1 // pred_check_branch
      %176 = sbr.rel (0) target = $region85
    $region84: #{tpu_custom_call.1} parent=1 // pred_region
      %178 = vsyncadd [#allocation18], 0
      %s179 = sshll.u32 %s20, 4
      %s180 = int_to_ptr.hbm [resolvable:$true] %s179
      %s181 = sshll.u32 [#allocation19], 4
      %s182 = int_to_ptr.vmem [resolvable:$true] %s181
      %187 = dma.hbm_to_vmem [thread:$0]  %s180, 256, %s182, [#allocation18], 64, 64, 4
    $region85: #{tpu_custom_call.1} parent=1 // pred_fallthru
      _
    // Predicated region
    $region86: #{tpu_custom_call.1} parent=1 // pred_check
      _
    $region87: #{tpu_custom_call.1} parent=1 // pred_check_branch
      %189 = sbr.rel (0) target = $region89
    $region88: #{tpu_custom_call.1} parent=1 // pred_region
      %191 = vsyncadd [#allocation21], 0
      %s193 = sshll.u32 %s21, 4
      %s194 = int_to_ptr.hbm [resolvable:$true] %s193
      %s195 = sshll.u32 [#allocation20], 4
      %s196 = int_to_ptr.vmem [resolvable:$true] %s195
      %198 = dma.hbm_to_vmem [thread:$0]  %s194, 16, %s196, [#allocation21]
    $region89: #{tpu_custom_call.1} parent=1 // pred_fallthru
      _
    // Predicated region
    $region90: #{tpu_custom_call.1} parent=1 // pred_check
      _
    $region91: #{tpu_custom_call.1} parent=1 // pred_check_branch
      %200 = sbr.rel (0) target = $region93
    $region92: #{tpu_custom_call.1} parent=1 // pred_region
      _
    $region93: #{tpu_custom_call.1} parent=1 // pred_fallthru
      _
    // Predicated region
    $region94: #{tpu_custom_call.1} parent=1 // pred_check
      _
    $region95: #{tpu_custom_call.1} parent=1 // pred_check_branch
      %202 = sbr.rel (0) target = $region97
    $region96: #{tpu_custom_call.1} parent=1 // pred_region
      %204 = vsyncadd [#allocation21], 0
      %s206 = sshll.u32 %s23, 4
      %s207 = int_to_ptr.hbm [resolvable:$true] %s206
      %s208 = sshll.u32 [#allocation22], 4
      %s209 = int_to_ptr.vmem [resolvable:$true] %s208
      %211 = dma.hbm_to_vmem [thread:$0]  %s207, 16, %s209, [#allocation21]
    $region97: #{tpu_custom_call.1} parent=1 // pred_fallthru
      _
    // Predicated region
    $region98: #{tpu_custom_call.1} parent=1 // pred_check
      _
    $region99: #{tpu_custom_call.1} parent=1 // pred_check_branch
      %213 = sbr.rel (0) target = $region101
    $region100: #{tpu_custom_call.1} parent=1 // pred_region
      %215 = dma.done [#allocation3], 128
    $region101: #{tpu_custom_call.1} parent=1 // pred_fallthru
      _
    // Predicated region
    $region102: #{tpu_custom_call.1} parent=1 // pred_check
      _
    $region103: #{tpu_custom_call.1} parent=1 // pred_check_branch
      %217 = sbr.rel (0) target = $region105
    $region104: #{tpu_custom_call.1} parent=1 // pred_region
      %219 = dma.done [#allocation6], 128
    $region105: #{tpu_custom_call.1} parent=1 // pred_fallthru
      _
    // Predicated region
    $region106: #{tpu_custom_call.1} parent=1 // pred_check
      _
    $region107: #{tpu_custom_call.1} parent=1 // pred_check_branch
      %221 = sbr.rel (0) target = $region109
    $region108: #{tpu_custom_call.1} parent=1 // pred_region
      %223 = dma.done [#allocation6], 128
    $region109: #{tpu_custom_call.1} parent=1 // pred_fallthru
      _
    // Predicated region
    $region110: #{tpu_custom_call.1} parent=1 // pred_check
      _
    $region111: #{tpu_custom_call.1} parent=1 // pred_check_branch
      %225 = sbr.rel (0) target = $region113
    $region112: #{tpu_custom_call.1} parent=1 // pred_region
      %227 = dma.done [#allocation9], 16
    $region113: #{tpu_custom_call.1} parent=1 // pred_fallthru
      _
    // Predicated region
    $region114: #{tpu_custom_call.1} parent=1 // pred_check
      _
    $region115: #{tpu_custom_call.1} parent=1 // pred_check_branch
      %229 = sbr.rel (0) target = $region117
    $region116: #{tpu_custom_call.1} parent=1 // pred_region
      %231 = dma.done [#allocation9], 16
    $region117: #{tpu_custom_call.1} parent=1 // pred_fallthru
      _
    // Predicated region
    $region118: #{tpu_custom_call.1} parent=1 // pred_check
      _
    $region119: #{tpu_custom_call.1} parent=1 // pred_check_branch
      %233 = sbr.rel (0) target = $region121
    $region120: #{tpu_custom_call.1} parent=1 // pred_region
      %235 = dma.done [#allocation12], 16
    $region121: #{tpu_custom_call.1} parent=1 // pred_fallthru
      _
    // Predicated region
    $region122: #{tpu_custom_call.1} parent=1 // pred_check
      _
    $region123: #{tpu_custom_call.1} parent=1 // pred_check_branch
      %237 = sbr.rel (0) target = $region125
    $region124: #{tpu_custom_call.1} parent=1 // pred_region
      %239 = dma.done [#allocation12], 256
    $region125: #{tpu_custom_call.1} parent=1 // pred_fallthru
      _
    // Predicated region
    $region126: #{tpu_custom_call.1} parent=1 // pred_check
      _
    $region127: #{tpu_custom_call.1} parent=1 // pred_check_branch
      %241 = sbr.rel (0) target = $region129
    $region128: #{tpu_custom_call.1} parent=1 // pred_region
      %243 = dma.done [#allocation15], 16
    $region129: #{tpu_custom_call.1} parent=1 // pred_fallthru
      _
    // Predicated region
    $region130: #{tpu_custom_call.1} parent=1 // pred_check
      _
    $region131: #{tpu_custom_call.1} parent=1 // pred_check_branch
      %245 = sbr.rel (0) target = $region133
    $region132: #{tpu_custom_call.1} parent=1 // pred_region
      %247 = dma.done [#allocation15], 16
    $region133: #{tpu_custom_call.1} parent=1 // pred_fallthru
      _
    // Predicated region
    $region134: #{tpu_custom_call.1} parent=1 // pred_check
      _
    $region135: #{tpu_custom_call.1} parent=1 // pred_check_branch
      %249 = sbr.rel (0) target = $region137
    $region136: #{tpu_custom_call.1} parent=1 // pred_region
      %251 = dma.done [#allocation18], 16
    $region137: #{tpu_custom_call.1} parent=1 // pred_fallthru
      _
    // Predicated region
    $region138: #{tpu_custom_call.1} parent=1 // pred_check
      _
    $region139: #{tpu_custom_call.1} parent=1 // pred_check_branch
      %253 = sbr.rel (0) target = $region141
    $region140: #{tpu_custom_call.1} parent=1 // pred_region
      %255 = dma.done [#allocation18], 256
    $region141: #{tpu_custom_call.1} parent=1 // pred_fallthru
      _
    // Predicated region
    $region142: #{tpu_custom_call.1} parent=1 // pred_check
      _
    $region143: #{tpu_custom_call.1} parent=1 // pred_check_branch
      %257 = sbr.rel (0) target = $region145
    $region144: #{tpu_custom_call.1} parent=1 // pred_region
      %259 = dma.done [#allocation21], 16
    $region145: #{tpu_custom_call.1} parent=1 // pred_fallthru
      _
    // Predicated region
    $region146: #{tpu_custom_call.1} parent=1 // pred_check
      _
    $region147: #{tpu_custom_call.1} parent=1 // pred_check_branch
      %261 = sbr.rel (0) target = $region149
    $region148: #{tpu_custom_call.1} parent=1 // pred_region
      %263 = dma.done [#allocation21], 16
    $region149: #{tpu_custom_call.1} parent=1 // pred_fallthru
      _
    %v265 = vld [vmem:[#allocation2] sm:$0xf]
    %v266 = vld [vmem:[#allocation2 + $0x4] sm:$0xf]
    %v267 = vunpack.c.l.bf16 %v265
    %v268 = vunpack.c.l.bf16 %v266
    %v269 = vld [vmem:[%s1] sm:$0xf]
    %v270 = vld [vmem:[%s1 + $0x4] sm:$0xf]
    %v271 = vld [vmem:[%s1 + $0x8] sm:$0xf]
    %v272 = vld [vmem:[%s1 + $0xc] sm:$0xf]
    %v273 = vld [vmem:[#allocation5] sm:$0xf]
    %v274 = vld [vmem:[#allocation5 + $0x4] sm:$0xf]
    %v275 = vunpack.c.l.bf16 %v273
    %v276 = vunpack.c.l.bf16 %v274
    %v277 = vld [vmem:[#allocation7] sm:$0xf]
    %v278 = vld [vmem:[#allocation7 + $0x4] sm:$0xf]
    %v279 = vunpack.c.l.bf16 %v277
    %v280 = vunpack.c.l.bf16 %v278
    %v281 = vld [vmem:[%s4] sm:$0x1]
    %v282 = vld [vmem:[%s5] sm:$0x1]
    %vm283 = vcmask 261120
    %v284 = vsel %vm283, %v267, 0.0
    %285 = vadd.xlane.f32.xlu0 %v284
    %v286 = vpop.xlane.xlu0 %285
    %v287 = vsel %vm283, %v268, 0.0
    %288 = vadd.xlane.f32.xlu0 %v287
    %v289 = vpop.xlane.xlu0 %288
    %v290 = vrcp.pop 32.0
    %v291 = vmul.f32 32.0, %v290
    %v292 = vsub.f32 1.0, %v291
    %v293 = vmul.f32 %v290, %v292
    %v294 = vadd.f32 %v290, %v293
    %vm295 = vweird.f32 %v290
    %v296 = vsel %vm295, %v290, %v294
    %v297 = vmul.f32 %v286, %v296
    %v298 = vmul.f32 %v289, %v296
    %v299 = vsub.f32 %v267, %v297
    %v300 = vsub.f32 %v268, %v298
    %v301 = vmul.f32 %v299, %v299
    %v302 = vmul.f32 %v300, %v300
    %v303 = vsel %vm283, %v301, 0.0
    %304 = vadd.xlane.f32.xlu0 %v303
    %v305 = vpop.xlane.xlu0 %304
    %v306 = vsel %vm283, %v302, 0.0
    %307 = vadd.xlane.f32.xlu0 %v306
    %v308 = vpop.xlane.xlu0 %307
    %v309 = vmul.f32 %v305, %v296
    %v310 = vmul.f32 %v308, %v296
    %v311 = vadd.f32 %v309, 1e-05
    %v312 = vadd.f32 %v310, 1e-05
    %v313 = vrsqrt.pop %v311
    %v314 = vmul.f32 %v313, %v311
    %v315 = vmul.f32 %v314, %v313
    %v316 = vmul.f32 0.5, %v315
    %v317 = vsub.f32 1.5, %v316
    %v318 = vmul.f32 %v313, %v317
    %vm319 = vweird.f32 %v311
    %vm320 = vweird.f32 %v313
    %vm321 = vmor %vm319, %vm320
    %v322 = vsel %vm321, %v313, %v318
    %v323 = vrsqrt.pop %v312
    %v324 = vmul.f32 %v323, %v312
    %v325 = vmul.f32 %v324, %v323
    %v326 = vmul.f32 0.5, %v325
    %v327 = vsub.f32 1.5, %v326
    %v328 = vmul.f32 %v323, %v327
    %vm329 = vweird.f32 %v312
    %vm330 = vweird.f32 %v323
    %vm331 = vmor %vm329, %vm330
    %v332 = vsel %vm331, %v323, %v328
    %v333 = vmul.f32 %v299, %v322
    %v334 = vmul.f32 %v300, %v332
    %v336 = vperm.slane %v281, 0
    %v338 = vmul.f32 %v333, %v336
    %v339 = vmul.f32 %v334, %v336
    %v341 = vperm.slane %v282, 0
    %v343 = vadd.f32 %v338, %v341
    %v344 = vadd.f32 %v339, %v341
    %v345 = vpack.c.bf16 %v344, %v343
    %v346 = vld [vmem:[%s6] sm:$0xf]
    %v347 = vld [vmem:[%s6 + $0x4] sm:$0xf]
    %v348 = vld [vmem:[%s6 + $0x8] sm:$0xf]
    %v349 = vld [vmem:[%s6 + $0xc] sm:$0xf]
    %v354 = vunpack.c.l.b16 %v346
    %v355 = vunpack.c.l.b16 %v347
    %v356 = vunpack.c.l.b16 %v348
    %v357 = vunpack.c.l.b16 %v349
    %v358 = vpack.c.b16 %v355, %v354
    %v359 = vpack.c.b16 %v357, %v356
    %v363 = vsel %vm283, %v345, 0
    %365 = vmatpush.bf16.msra.mxu0 0
    %366 = vmatpush.bf16.msra.mxu0 0
    %367 = vmatpush.bf16.msra.mxu0 0
    %368 = vmatpush.bf16.msra.mxu0 0
    %369 = vmatpush.bf16.msra.mxu0 0
    %370 = vmatpush.bf16.msra.mxu0 0
    %371 = vmatpush.bf16.msra.mxu0 %v359
    %372 = vmatpush.bf16.msra.mxu0 %v358
    %373 = vmatmul.bf16.gmra.mxu0 %v363
    %v374 = vpop.f32.mrf.mxu0
    %v375 = vadd.f32 0.0, %v374
    %v376 = vpop.f32.mrf.mxu0
    %v377 = vadd.f32 0.0, %v376
    %378 = vdwg.mxu0
    %v379 = vld [vmem:[%s7] sm:$0x1]
    %v381 = vperm.slane %v379, 0
    %v383 = vadd.f32 %v375, %v381
    %v384 = vadd.f32 %v377, %v381
    %v385 = vld [vmem:[%s8] sm:$0xf]
    %v386 = vld [vmem:[%s8 + $0x4] sm:$0xf]
    %v387 = vld [vmem:[%s8 + $0x8] sm:$0xf]
    %v388 = vld [vmem:[%s8 + $0xc] sm:$0xf]
    %v389 = vld [vmem:[%s9] sm:$0x1]
    %v390 = vmul.f32 %v383, 0.35355338
    %v391 = vmul.f32 %v384, 0.35355338
    %v392 = vpack.c.bf16 %v390, %v390
    %v393 = vpack.c.bf16 %v391, %v391
    %v394 = vpack.c.bf16 %v383, %v383
    %v395 = vpack.c.bf16 %v384, %v384
    %v397 = vunpack.c.l.b16 %v394
    %v398 = vpack.c.b16 %v397, %v397
    %399 = vrot.lane.b32.xlu0 %v398, 96
    %v400 = vpop.permute.xlu0 %399
    %vm401 = vcmask 64512
    %v403 = vsel %vm401, %v392, 0
    %v406 = vsel %vm401, %v400, 0
    %408 = vmatpush.bf16.xpose.msra.mxu0 0
    %409 = vmatpush.bf16.xpose.msra.mxu0 0
    %410 = vmatpush.bf16.xpose.msra.mxu0 0
    %411 = vmatpush.bf16.xpose.msra.mxu0 0
    %412 = vmatpush.bf16.xpose.msra.mxu0 0
    %413 = vmatpush.bf16.xpose.msra.mxu0 0
    %414 = vmatpush.bf16.xpose.msra.mxu0 0
    %415 = vmatpush.bf16.xpose.msra.mxu0 %v406
    %416 = vmatmul.bf16.gmra.mxu0 %v403
    %v417 = vpop.f32.mrf.mxu0
    %v418 = vadd.f32 %v275, %v417
    %v419 = vpop.f32.mrf.mxu0
    %420 = vdwg.mxu0
    %v422 = vunpack.c.l.b16 %v395
    %v423 = vpack.c.b16 %v422, %v422
    %424 = vrot.lane.b32.xlu0 %v423, 96
    %v425 = vpop.permute.xlu0 %424
    %v427 = vsel %vm401, %v393, 0
    %v430 = vsel %vm401, %v425, 0
    %432 = vmatpush.bf16.xpose.msra.mxu0 0
    %433 = vmatpush.bf16.xpose.msra.mxu0 0
    %434 = vmatpush.bf16.xpose.msra.mxu0 0
    %435 = vmatpush.bf16.xpose.msra.mxu0 0
    %436 = vmatpush.bf16.xpose.msra.mxu0 0
    %437 = vmatpush.bf16.xpose.msra.mxu0 0
    %438 = vmatpush.bf16.xpose.msra.mxu0 0
    %439 = vmatpush.bf16.xpose.msra.mxu0 %v430
    %440 = vmatmul.bf16.gmra.mxu0 %v427
    %v441 = vpop.f32.mrf.mxu0
    %v442 = vadd.f32 %v276, %v441
    %v443 = vpop.f32.mrf.mxu0
    %444 = vdwg.mxu0
    %v445 = vsel %vm401, %v418, -inf
    %446 = vmax.xlane.f32.xlu0 %v445
    %v447 = vpop.xlane.xlu0 %446
    %v448 = vsel %vm401, %v442, -inf
    %449 = vmax.xlane.f32.xlu0 %v448
    %v450 = vpop.xlane.xlu0 %449
    %v451 = vsub.f32 %v418, %v447
    %v452 = vsub.f32 %v442, %v450
    %v453 = vmul.f32 %v451, 1.442695
    %v454 = vpow.pop %v453
    %v455 = vmul.f32 %v452, 1.442695
    %v456 = vpow.pop %v455
    %v457 = vsel %vm401, %v454, 0.0
    %458 = vadd.xlane.f32.xlu0 %v457
    %v459 = vpop.xlane.xlu0 %458
    %v460 = vsel %vm401, %v456, 0.0
    %461 = vadd.xlane.f32.xlu0 %v460
    %v462 = vpop.xlane.xlu0 %461
    %v463 = vrcp.pop %v459
    %v464 = vrcp.pop %v462
    %v465 = vmul.f32 %v454, %v463
    %v466 = vmul.f32 %v456, %v464
    %v467 = vpack.c.bf16 %v465, %v465
    %v468 = vpack.c.bf16 %v466, %v466
    %469 = vrot.lane.b32.xlu0 %v398, 64
    %v470 = vpop.permute.xlu0 %469
    %v472 = vsel %vm401, %v467, 0
    %vm474 = vcmask 1043456
    %v476 = vsel %vm474, %v470, 0
    %478 = vmatpush.bf16.msra.mxu0 0
    %479 = vmatpush.bf16.msra.mxu0 0
    %480 = vmatpush.bf16.msra.mxu0 0
    %481 = vmatpush.bf16.msra.mxu0 0
    %482 = vmatpush.bf16.msra.mxu0 0
    %483 = vmatpush.bf16.msra.mxu0 0
    %484 = vmatpush.bf16.msra.mxu0 0
    %485 = vmatpush.bf16.msra.mxu0 %v476
    %486 = vmatmul.bf16.gmra.mxu0 %v472
    %v487 = vpop.f32.mrf.mxu0
    %v488 = vadd.f32 0.0, %v487
    %v489 = vpop.f32.mrf.mxu0
    %490 = vdwg.mxu0
    %491 = vrot.lane.b32.xlu0 %v423, 64
    %v492 = vpop.permute.xlu0 %491
    %v494 = vsel %vm401, %v468, 0
    %v497 = vsel %vm474, %v492, 0
    %499 = vmatpush.bf16.msra.mxu0 0
    %500 = vmatpush.bf16.msra.mxu0 0
    %501 = vmatpush.bf16.msra.mxu0 0
    %502 = vmatpush.bf16.msra.mxu0 0
    %503 = vmatpush.bf16.msra.mxu0 0
    %504 = vmatpush.bf16.msra.mxu0 0
    %505 = vmatpush.bf16.msra.mxu0 0
    %506 = vmatpush.bf16.msra.mxu0 %v497
    %507 = vmatmul.bf16.gmra.mxu0 %v494
    %v508 = vpop.f32.mrf.mxu0
    %v509 = vadd.f32 0.0, %v508
    %v510 = vpop.f32.mrf.mxu0
    %511 = vdwg.mxu0
    %v512 = vpack.c.bf16 %v488, %v488
    %v513 = vpack.c.bf16 %v509, %v509
    %v515 = vunpack.c.l.b16 %v392
    %v516 = vpack.c.b16 %v515, %v515
    %517 = vrot.lane.b32.xlu0 %v516, 120
    %v518 = vpop.permute.xlu0 %517
    %519 = vrot.lane.b32.xlu0 %v398, 88
    %v520 = vpop.permute.xlu0 %519
    %v522 = vsel %vm401, %v518, 0
    %v525 = vsel %vm401, %v520, 0
    %527 = vmatpush.bf16.xpose.msra.mxu0 0
    %528 = vmatpush.bf16.xpose.msra.mxu0 0
    %529 = vmatpush.bf16.xpose.msra.mxu0 0
    %530 = vmatpush.bf16.xpose.msra.mxu0 0
    %531 = vmatpush.bf16.xpose.msra.mxu0 0
    %532 = vmatpush.bf16.xpose.msra.mxu0 0
    %533 = vmatpush.bf16.xpose.msra.mxu0 0
    %534 = vmatpush.bf16.xpose.msra.mxu0 %v525
    %535 = vmatmul.bf16.gmra.mxu0 %v522
    %v536 = vpop.f32.mrf.mxu0
    %v537 = vadd.f32 %v275, %v536
    %v538 = vpop.f32.mrf.mxu0
    %539 = vdwg.mxu0
    %v541 = vunpack.c.l.b16 %v393
    %v542 = vpack.c.b16 %v541, %v541
    %543 = vrot.lane.b32.xlu0 %v542, 120
    %v544 = vpop.permute.xlu0 %543
    %545 = vrot.lane.b32.xlu0 %v423, 88
    %v546 = vpop.permute.xlu0 %545
    %v548 = vsel %vm401, %v544, 0
    %v551 = vsel %vm401, %v546, 0
    %553 = vmatpush.bf16.xpose.msra.mxu0 0
    %554 = vmatpush.bf16.xpose.msra.mxu0 0
    %555 = vmatpush.bf16.xpose.msra.mxu0 0
    %556 = vmatpush.bf16.xpose.msra.mxu0 0
    %557 = vmatpush.bf16.xpose.msra.mxu0 0
    %558 = vmatpush.bf16.xpose.msra.mxu0 0
    %559 = vmatpush.bf16.xpose.msra.mxu0 0
    %560 = vmatpush.bf16.xpose.msra.mxu0 %v551
    %561 = vmatmul.bf16.gmra.mxu0 %v548
    %v562 = vpop.f32.mrf.mxu0
    %v563 = vadd.f32 %v276, %v562
    %v564 = vpop.f32.mrf.mxu0
    %565 = vdwg.mxu0
    %v566 = vsel %vm401, %v537, -inf
    %567 = vmax.xlane.f32.xlu0 %v566
    %v568 = vpop.xlane.xlu0 %567
    %v569 = vsel %vm401, %v563, -inf
    %570 = vmax.xlane.f32.xlu0 %v569
    %v571 = vpop.xlane.xlu0 %570
    %v572 = vsub.f32 %v537, %v568
    %v573 = vsub.f32 %v563, %v571
    %v574 = vmul.f32 %v572, 1.442695
    %v575 = vpow.pop %v574
    %v576 = vmul.f32 %v573, 1.442695
    %v577 = vpow.pop %v576
    %v578 = vsel %vm401, %v575, 0.0
    %579 = vadd.xlane.f32.xlu0 %v578
    %v580 = vpop.xlane.xlu0 %579
    %v581 = vsel %vm401, %v577, 0.0
    %582 = vadd.xlane.f32.xlu0 %v581
    %v583 = vpop.xlane.xlu0 %582
    %v584 = vrcp.pop %v580
    %v585 = vrcp.pop %v583
    %v586 = vmul.f32 %v575, %v584
    %v587 = vmul.f32 %v577, %v585
    %v588 = vpack.c.bf16 %v586, %v586
    %v589 = vpack.c.bf16 %v587, %v587
    %590 = vrot.lane.b32.xlu0 %v398, 56
    %v591 = vpop.permute.xlu0 %590
    %v593 = vsel %vm401, %v588, 0
    %v596 = vsel %vm474, %v591, 0
    %598 = vmatpush.bf16.msra.mxu0 0
    %599 = vmatpush.bf16.msra.mxu0 0
    %600 = vmatpush.bf16.msra.mxu0 0
    %601 = vmatpush.bf16.msra.mxu0 0
    %602 = vmatpush.bf16.msra.mxu0 0
    %603 = vmatpush.bf16.msra.mxu0 0
    %604 = vmatpush.bf16.msra.mxu0 0
    %605 = vmatpush.bf16.msra.mxu0 %v596
    %606 = vmatmul.bf16.gmra.mxu0 %v593
    %v607 = vpop.f32.mrf.mxu0
    %v608 = vadd.f32 0.0, %v607
    %v609 = vpop.f32.mrf.mxu0
    %610 = vdwg.mxu0
    %611 = vrot.lane.b32.xlu0 %v423, 56
    %v612 = vpop.permute.xlu0 %611
    %v614 = vsel %vm401, %v589, 0
    %v617 = vsel %vm474, %v612, 0
    %619 = vmatpush.bf16.msra.mxu0 0
    %620 = vmatpush.bf16.msra.mxu0 0
    %621 = vmatpush.bf16.msra.mxu0 0
    %622 = vmatpush.bf16.msra.mxu0 0
    %623 = vmatpush.bf16.msra.mxu0 0
    %624 = vmatpush.bf16.msra.mxu0 0
    %625 = vmatpush.bf16.msra.mxu0 0
    %626 = vmatpush.bf16.msra.mxu0 %v617
    %627 = vmatmul.bf16.gmra.mxu0 %v614
    %v628 = vpop.f32.mrf.mxu0
    %v629 = vadd.f32 0.0, %v628
    %v630 = vpop.f32.mrf.mxu0
    %631 = vdwg.mxu0
    %v632 = vpack.c.bf16 %v608, %v608
    %v633 = vpack.c.bf16 %v629, %v629
    %634 = vrot.lane.b32.xlu0 %v516, 112
    %v635 = vpop.permute.xlu0 %634
    %636 = vrot.lane.b32.xlu0 %v398, 80
    %v637 = vpop.permute.xlu0 %636
    %v639 = vsel %vm401, %v635, 0
    %v642 = vsel %vm401, %v637, 0
    %644 = vmatpush.bf16.xpose.msra.mxu0 0
    %645 = vmatpush.bf16.xpose.msra.mxu0 0
    %646 = vmatpush.bf16.xpose.msra.mxu0 0
    %647 = vmatpush.bf16.xpose.msra.mxu0 0
    %648 = vmatpush.bf16.xpose.msra.mxu0 0
    %649 = vmatpush.bf16.xpose.msra.mxu0 0
    %650 = vmatpush.bf16.xpose.msra.mxu0 0
    %651 = vmatpush.bf16.xpose.msra.mxu0 %v642
    %652 = vmatmul.bf16.gmra.mxu0 %v639
    %v653 = vpop.f32.mrf.mxu0
    %v654 = vadd.f32 %v275, %v653
    %v655 = vpop.f32.mrf.mxu0
    %656 = vdwg.mxu0
    %657 = vrot.lane.b32.xlu0 %v542, 112
    %v658 = vpop.permute.xlu0 %657
    %659 = vrot.lane.b32.xlu0 %v423, 80
    %v660 = vpop.permute.xlu0 %659
    %v662 = vsel %vm401, %v658, 0
    %v665 = vsel %vm401, %v660, 0
    %667 = vmatpush.bf16.xpose.msra.mxu0 0
    %668 = vmatpush.bf16.xpose.msra.mxu0 0
    %669 = vmatpush.bf16.xpose.msra.mxu0 0
    %670 = vmatpush.bf16.xpose.msra.mxu0 0
    %671 = vmatpush.bf16.xpose.msra.mxu0 0
    %672 = vmatpush.bf16.xpose.msra.mxu0 0
    %673 = vmatpush.bf16.xpose.msra.mxu0 0
    %674 = vmatpush.bf16.xpose.msra.mxu0 %v665
    %675 = vmatmul.bf16.gmra.mxu0 %v662
    %v676 = vpop.f32.mrf.mxu0
    %v677 = vadd.f32 %v276, %v676
    %v678 = vpop.f32.mrf.mxu0
    %679 = vdwg.mxu0
    %v680 = vsel %vm401, %v654, -inf
    %681 = vmax.xlane.f32.xlu0 %v680
    %v682 = vpop.xlane.xlu0 %681
    %v683 = vsel %vm401, %v677, -inf
    %684 = vmax.xlane.f32.xlu0 %v683
    %v685 = vpop.xlane.xlu0 %684
    %v686 = vsub.f32 %v654, %v682
    %v687 = vsub.f32 %v677, %v685
    %v688 = vmul.f32 %v686, 1.442695
    %v689 = vpow.pop %v688
    %v690 = vmul.f32 %v687, 1.442695
    %v691 = vpow.pop %v690
    %v692 = vsel %vm401, %v689, 0.0
    %693 = vadd.xlane.f32.xlu0 %v692
    %v694 = vpop.xlane.xlu0 %693
    %v695 = vsel %vm401, %v691, 0.0
    %696 = vadd.xlane.f32.xlu0 %v695
    %v697 = vpop.xlane.xlu0 %696
    %v698 = vrcp.pop %v694
    %v699 = vrcp.pop %v697
    %v700 = vmul.f32 %v689, %v698
    %v701 = vmul.f32 %v691, %v699
    %v702 = vpack.c.bf16 %v700, %v700
    %v703 = vpack.c.bf16 %v701, %v701
    %704 = vrot.lane.b32.xlu0 %v398, 48
    %v705 = vpop.permute.xlu0 %704
    %v707 = vsel %vm401, %v702, 0
    %v710 = vsel %vm474, %v705, 0
    %712 = vmatpush.bf16.msra.mxu0 0
    %713 = vmatpush.bf16.msra.mxu0 0
    %714 = vmatpush.bf16.msra.mxu0 0
    %715 = vmatpush.bf16.msra.mxu0 0
    %716 = vmatpush.bf16.msra.mxu0 0
    %717 = vmatpush.bf16.msra.mxu0 0
    %718 = vmatpush.bf16.msra.mxu0 0
    %719 = vmatpush.bf16.msra.mxu0 %v710
    %720 = vmatmul.bf16.gmra.mxu0 %v707
    %v721 = vpop.f32.mrf.mxu0
    %v722 = vadd.f32 0.0, %v721
    %v723 = vpop.f32.mrf.mxu0
    %724 = vdwg.mxu0
    %725 = vrot.lane.b32.xlu0 %v423, 48
    %v726 = vpop.permute.xlu0 %725
    %v728 = vsel %vm401, %v703, 0
    %v731 = vsel %vm474, %v726, 0
    %733 = vmatpush.bf16.msra.mxu0 0
    %734 = vmatpush.bf16.msra.mxu0 0
    %735 = vmatpush.bf16.msra.mxu0 0
    %736 = vmatpush.bf16.msra.mxu0 0
    %737 = vmatpush.bf16.msra.mxu0 0
    %738 = vmatpush.bf16.msra.mxu0 0
    %739 = vmatpush.bf16.msra.mxu0 0
    %740 = vmatpush.bf16.msra.mxu0 %v731
    %741 = vmatmul.bf16.gmra.mxu0 %v728
    %v742 = vpop.f32.mrf.mxu0
    %v743 = vadd.f32 0.0, %v742
    %v744 = vpop.f32.mrf.mxu0
    %745 = vdwg.mxu0
    %v746 = vpack.c.bf16 %v722, %v722
    %v747 = vpack.c.bf16 %v743, %v743
    %748 = vrot.lane.b32.xlu0 %v516, 104
    %v749 = vpop.permute.xlu0 %748
    %750 = vrot.lane.b32.xlu0 %v398, 72
    %v751 = vpop.permute.xlu0 %750
    %v753 = vsel %vm401, %v749, 0
    %v756 = vsel %vm401, %v751, 0
    %758 = vmatpush.bf16.xpose.msra.mxu0 0
    %759 = vmatpush.bf16.xpose.msra.mxu0 0
    %760 = vmatpush.bf16.xpose.msra.mxu0 0
    %761 = vmatpush.bf16.xpose.msra.mxu0 0
    %762 = vmatpush.bf16.xpose.msra.mxu0 0
    %763 = vmatpush.bf16.xpose.msra.mxu0 0
    %764 = vmatpush.bf16.xpose.msra.mxu0 0
    %765 = vmatpush.bf16.xpose.msra.mxu0 %v756
    %766 = vmatmul.bf16.gmra.mxu0 %v753
    %v767 = vpop.f32.mrf.mxu0
    %v768 = vadd.f32 %v275, %v767
    %v769 = vpop.f32.mrf.mxu0
    %770 = vdwg.mxu0
    %771 = vrot.lane.b32.xlu0 %v542, 104
    %v772 = vpop.permute.xlu0 %771
    %773 = vrot.lane.b32.xlu0 %v423, 72
    %v774 = vpop.permute.xlu0 %773
    %v776 = vsel %vm401, %v772, 0
    %v779 = vsel %vm401, %v774, 0
    %781 = vmatpush.bf16.xpose.msra.mxu0 0
    %782 = vmatpush.bf16.xpose.msra.mxu0 0
    %783 = vmatpush.bf16.xpose.msra.mxu0 0
    %784 = vmatpush.bf16.xpose.msra.mxu0 0
    %785 = vmatpush.bf16.xpose.msra.mxu0 0
    %786 = vmatpush.bf16.xpose.msra.mxu0 0
    %787 = vmatpush.bf16.xpose.msra.mxu0 0
    %788 = vmatpush.bf16.xpose.msra.mxu0 %v779
    %789 = vmatmul.bf16.gmra.mxu0 %v776
    %v790 = vpop.f32.mrf.mxu0
    %v791 = vadd.f32 %v276, %v790
    %v792 = vpop.f32.mrf.mxu0
    %793 = vdwg.mxu0
    %v794 = vsel %vm401, %v768, -inf
    %795 = vmax.xlane.f32.xlu0 %v794
    %v796 = vpop.xlane.xlu0 %795
    %v797 = vsel %vm401, %v791, -inf
    %798 = vmax.xlane.f32.xlu0 %v797
    %v799 = vpop.xlane.xlu0 %798
    %v800 = vsub.f32 %v768, %v796
    %v801 = vsub.f32 %v791, %v799
    %v802 = vmul.f32 %v800, 1.442695
    %v803 = vpow.pop %v802
    %v804 = vmul.f32 %v801, 1.442695
    %v805 = vpow.pop %v804
    %v806 = vsel %vm401, %v803, 0.0
    %807 = vadd.xlane.f32.xlu0 %v806
    %v808 = vpop.xlane.xlu0 %807
    %v809 = vsel %vm401, %v805, 0.0
    %810 = vadd.xlane.f32.xlu0 %v809
    %v811 = vpop.xlane.xlu0 %810
    %v812 = vrcp.pop %v808
    %v813 = vrcp.pop %v811
    %v814 = vmul.f32 %v803, %v812
    %v815 = vmul.f32 %v805, %v813
    %v816 = vpack.c.bf16 %v814, %v814
    %v817 = vpack.c.bf16 %v815, %v815
    %818 = vrot.lane.b32.xlu0 %v398, 40
    %v819 = vpop.permute.xlu0 %818
    %v821 = vsel %vm401, %v816, 0
    %v824 = vsel %vm474, %v819, 0
    %826 = vmatpush.bf16.msra.mxu0 0
    %827 = vmatpush.bf16.msra.mxu0 0
    %828 = vmatpush.bf16.msra.mxu0 0
    %829 = vmatpush.bf16.msra.mxu0 0
    %830 = vmatpush.bf16.msra.mxu0 0
    %831 = vmatpush.bf16.msra.mxu0 0
    %832 = vmatpush.bf16.msra.mxu0 0
    %833 = vmatpush.bf16.msra.mxu0 %v824
    %834 = vmatmul.bf16.gmra.mxu0 %v821
    %v835 = vpop.f32.mrf.mxu0
    %v836 = vadd.f32 0.0, %v835
    %v837 = vpop.f32.mrf.mxu0
    %838 = vdwg.mxu0
    %839 = vrot.lane.b32.xlu0 %v423, 40
    %v840 = vpop.permute.xlu0 %839
    %v842 = vsel %vm401, %v817, 0
    %v845 = vsel %vm474, %v840, 0
    %847 = vmatpush.bf16.msra.mxu0 0
    %848 = vmatpush.bf16.msra.mxu0 0
    %849 = vmatpush.bf16.msra.mxu0 0
    %850 = vmatpush.bf16.msra.mxu0 0
    %851 = vmatpush.bf16.msra.mxu0 0
    %852 = vmatpush.bf16.msra.mxu0 0
    %853 = vmatpush.bf16.msra.mxu0 0
    %854 = vmatpush.bf16.msra.mxu0 %v845
    %855 = vmatmul.bf16.gmra.mxu0 %v842
    %v856 = vpop.f32.mrf.mxu0
    %v857 = vadd.f32 0.0, %v856
    %v858 = vpop.f32.mrf.mxu0
    %859 = vdwg.mxu0
    %v860 = vpack.c.bf16 %v836, %v836
    %v861 = vpack.c.bf16 %v857, %v857
    %v864 = vunpack.c.l.b16 %v632
    %v865 = vunpack.c.l.b16 %v633
    %v866 = vpack.c.b16 %v864, %v864
    %v867 = vpack.c.b16 %v865, %v865
    %868 = vrot.lane.b32.xlu0 %v866, 8
    %v869 = vpop.permute.xlu0 %868
    %870 = vrot.lane.b32.xlu0 %v867, 8
    %v871 = vpop.permute.xlu0 %870
    %v874 = vunpack.c.l.b16 %v746
    %v875 = vunpack.c.l.b16 %v747
    %v876 = vpack.c.b16 %v874, %v874
    %v877 = vpack.c.b16 %v875, %v875
    %878 = vrot.lane.b32.xlu0 %v876, 16
    %v879 = vpop.permute.xlu0 %878
    %880 = vrot.lane.b32.xlu0 %v877, 16
    %v881 = vpop.permute.xlu0 %880
    %v884 = vunpack.c.l.b16 %v860
    %v885 = vunpack.c.l.b16 %v861
    %v886 = vpack.c.b16 %v884, %v884
    %v887 = vpack.c.b16 %v885, %v885
    %888 = vrot.lane.b32.xlu0 %v886, 24
    %v889 = vpop.permute.xlu0 %888
    %890 = vrot.lane.b32.xlu0 %v887, 24
    %v891 = vpop.permute.xlu0 %890
    %v894 = vsel %vm401, %v512, %v869
    %v897 = vsel %vm401, %v513, %v871
    %vm898 = vcmask 130048
    %v900 = vsel %vm898, %v894, %v879
    %v902 = vsel %vm898, %v897, %v881
    %vm903 = vcmask 195584
    %v905 = vsel %vm903, %v900, %v889
    %v907 = vsel %vm903, %v902, %v891
    %v909 = vperm.slane %v389, 0
    %v913 = vunpack.c.l.b16 %v905
    %v914 = vunpack.c.l.b16 %v907
    %v915 = vpack.c.b16 %v914, %v913
    %v920 = vunpack.c.l.b16 %v385
    %v921 = vunpack.c.l.b16 %v386
    %v922 = vunpack.c.l.b16 %v387
    %v923 = vunpack.c.l.b16 %v388
    %v924 = vpack.c.b16 %v921, %v920
    %v925 = vpack.c.b16 %v923, %v922
    %v929 = vsel %vm283, %v915, 0
    %931 = vmatpush.bf16.msra.mxu0 0
    %932 = vmatpush.bf16.msra.mxu0 0
    %933 = vmatpush.bf16.msra.mxu0 0
    %934 = vmatpush.bf16.msra.mxu0 0
    %935 = vmatpush.bf16.msra.mxu0 0
    %936 = vmatpush.bf16.msra.mxu0 0
    %937 = vmatpush.bf16.msra.mxu0 %v925
    %938 = vmatpush.bf16.msra.mxu0 %v924
    %939 = vmatmul.bf16.gmra.mxu0 %v929
    %v940 = vpop.f32.mrf.mxu0
    %v941 = vadd.f32 %v909, %v940
    %v942 = vpop.f32.mrf.mxu0
    %v943 = vadd.f32 %v909, %v942
    %944 = vdwg.mxu0
    %v945 = vadd.f32 %v267, %v941
    %v946 = vadd.f32 %v268, %v943
    %v947 = vld [vmem:[%s10] sm:$0x1]
    %v948 = vld [vmem:[#allocation8] sm:$0x1]
    %v949 = vsel %vm283, %v945, 0.0
    %950 = vadd.xlane.f32.xlu0 %v949
    %v951 = vpop.xlane.xlu0 %950
    %v952 = vsel %vm283, %v946, 0.0
    %953 = vadd.xlane.f32.xlu0 %v952
    %v954 = vpop.xlane.xlu0 %953
    %v955 = vmul.f32 %v951, %v296
    %v956 = vmul.f32 %v954, %v296
    %v957 = vsub.f32 %v945, %v955
    %v958 = vsub.f32 %v946, %v956
    %v959 = vmul.f32 %v957, %v957
    %v960 = vmul.f32 %v958, %v958
    %v961 = vsel %vm283, %v959, 0.0
    %962 = vadd.xlane.f32.xlu0 %v961
    %v963 = vpop.xlane.xlu0 %962
    %v964 = vsel %vm283, %v960, 0.0
    %965 = vadd.xlane.f32.xlu0 %v964
    %v966 = vpop.xlane.xlu0 %965
    %v967 = vmul.f32 %v963, %v296
    %v968 = vmul.f32 %v966, %v296
    %v969 = vadd.f32 %v967, 1e-05
    %v970 = vadd.f32 %v968, 1e-05
    %v971 = vrsqrt.pop %v969
    %v972 = vmul.f32 %v971, %v969
    %v973 = vmul.f32 %v972, %v971
    %v974 = vmul.f32 0.5, %v973
    %v975 = vsub.f32 1.5, %v974
    %v976 = vmul.f32 %v971, %v975
    %vm977 = vweird.f32 %v969
    %vm978 = vweird.f32 %v971
    %vm979 = vmor %vm977, %vm978
    %v980 = vsel %vm979, %v971, %v976
    %v981 = vrsqrt.pop %v970
    %v982 = vmul.f32 %v981, %v970
    %v983 = vmul.f32 %v982, %v981
    %v984 = vmul.f32 0.5, %v983
    %v985 = vsub.f32 1.5, %v984
    %v986 = vmul.f32 %v981, %v985
    %vm987 = vweird.f32 %v970
    %vm988 = vweird.f32 %v981
    %vm989 = vmor %vm987, %vm988
    %v990 = vsel %vm989, %v981, %v986
    %v991 = vmul.f32 %v957, %v980
    %v992 = vmul.f32 %v958, %v990
    %v994 = vperm.slane %v947, 0
    %v996 = vmul.f32 %v991, %v994
    %v997 = vmul.f32 %v992, %v994
    %v999 = vperm.slane %v948, 0
    %v1001 = vadd.f32 %v996, %v999
    %v1002 = vadd.f32 %v997, %v999
    %v1003 = vpack.c.bf16 %v1002, %v1001
    %v1004 = vld [vmem:[%s12] sm:$0xf]
    %v1005 = vld [vmem:[%s12 + $0x4] sm:$0xf]
    %v1006 = vld [vmem:[%s12 + $0x8] sm:$0xf]
    %v1007 = vld [vmem:[%s12 + $0xc] sm:$0xf]
    %v1008 = vld [vmem:[#allocation10] sm:$0x1]
    %v1010 = vperm.slane %v1008, 0
    %v1016 = vunpack.c.l.b16 %v1004
    %v1017 = vunpack.c.l.b16 %v1005
    %v1018 = vunpack.c.l.b16 %v1006
    %v1019 = vunpack.c.l.b16 %v1007
    %v1020 = vpack.c.b16 %v1017, %v1016
    %v1021 = vpack.c.b16 %v1019, %v1018
    %v1025 = vsel %vm283, %v1003, 0
    %1027 = vmatpush.bf16.msra.mxu0 0
    %1028 = vmatpush.bf16.msra.mxu0 0
    %1029 = vmatpush.bf16.msra.mxu0 0
    %1030 = vmatpush.bf16.msra.mxu0 0
    %1031 = vmatpush.bf16.msra.mxu0 0
    %1032 = vmatpush.bf16.msra.mxu0 0
    %1033 = vmatpush.bf16.msra.mxu0 %v1021
    %1034 = vmatpush.bf16.msra.mxu0 %v1020
    %1035 = vmatmul.bf16.gmra.mxu0 %v1025
    %v1036 = vpop.f32.mrf.mxu0
    %v1037 = vadd.f32 %v1010, %v1036
    %v1038 = vpop.f32.mrf.mxu0
    %v1039 = vadd.f32 %v1010, %v1038
    %1040 = vdwg.mxu0
    %v1041 = vld [vmem:[%s13] sm:$0xf]
    %v1042 = vld [vmem:[%s13 + $0x4] sm:$0xf]
    %v1043 = vld [vmem:[%s13 + $0x8] sm:$0xf]
    %v1044 = vld [vmem:[%s13 + $0xc] sm:$0xf]
    %v1049 = vunpack.c.l.b16 %v269
    %v1050 = vunpack.c.l.b16 %v270
    %v1051 = vunpack.c.l.b16 %v271
    %v1052 = vunpack.c.l.b16 %v272
    %v1053 = vpack.c.b16 %v1050, %v1049
    %v1054 = vpack.c.b16 %v1052, %v1051
    %v1059 = vunpack.c.l.b16 %v1041
    %v1060 = vunpack.c.l.b16 %v1042
    %v1061 = vunpack.c.l.b16 %v1043
    %v1062 = vunpack.c.l.b16 %v1044
    %v1063 = vpack.c.b16 %v1060, %v1059
    %v1064 = vpack.c.b16 %v1062, %v1061
    %v1068 = vsel %vm283, %v1053, 0
    %v1071 = vsel %vm283, %v1054, 0
    %1073 = vmatpush.bf16.msra.mxu0 0
    %1074 = vmatpush.bf16.msra.mxu0 0
    %1075 = vmatpush.bf16.msra.mxu0 0
    %1076 = vmatpush.bf16.msra.mxu0 0
    %1077 = vmatpush.bf16.msra.mxu0 0
    %1078 = vmatpush.bf16.msra.mxu0 0
    %1079 = vmatpush.bf16.msra.mxu0 %v1064
    %1080 = vmatpush.bf16.msra.mxu0 %v1063
    %1081 = vmatmul.bf16.gmra.mxu0 %v1068
    %v1082 = vpop.f32.mrf.mxu0
    %v1083 = vadd.f32 0.0, %v1082
    %v1084 = vpop.f32.mrf.mxu0
    %v1085 = vadd.f32 0.0, %v1084
    %1086 = vmatmul.bf16.gmra.mxu0 %v1071
    %v1087 = vpop.f32.mrf.mxu0
    %v1088 = vadd.f32 0.0, %v1087
    %v1089 = vpop.f32.mrf.mxu0
    %v1090 = vadd.f32 0.0, %v1089
    %1091 = vdwg.mxu0
    %v1092 = vld [vmem:[#allocation11] sm:$0x1]
    %v1094 = vperm.slane %v1092, 0
    %v1096 = vadd.f32 %v1083, %v1094
    %v1097 = vadd.f32 %v1085, %v1094
    %v1098 = vadd.f32 %v1088, %v1094
    %v1099 = vadd.f32 %v1090, %v1094
    %v1100 = vld [vmem:[#allocation13] sm:$0xf]
    %v1101 = vld [vmem:[#allocation13 + $0x4] sm:$0xf]
    %v1102 = vld [vmem:[#allocation13 + $0x8] sm:$0xf]
    %v1103 = vld [vmem:[#allocation13 + $0xc] sm:$0xf]
    %v1104 = vld [vmem:[#allocation14] sm:$0x1]
    %v1105 = vmul.f32 %v1037, 0.35355338
    %v1106 = vmul.f32 %v1039, 0.35355338
    %v1107 = vpack.c.bf16 %v1105, %v1105
    %v1108 = vpack.c.bf16 %v1106, %v1106
    %v1109 = vpack.c.bf16 %v1096, %v1096
    %v1110 = vpack.c.bf16 %v1097, %v1097
    %v1111 = vpack.c.bf16 %v1098, %v1098
    %v1112 = vpack.c.bf16 %v1099, %v1099
    %v1115 = vunpack.c.l.b16 %v1109
    %v1116 = vunpack.c.l.b16 %v1110
    %v1117 = vpack.c.b16 %v1116, %v1115
    %v1119 = vsel %vm401, %v1107, 0
    %v1122 = vsel %vm401, %v1117, 0
    %1124 = vmatpush.bf16.xpose.msra.mxu0 0
    %1125 = vmatpush.bf16.xpose.msra.mxu0 0
    %1126 = vmatpush.bf16.xpose.msra.mxu0 0
    %1127 = vmatpush.bf16.xpose.msra.mxu0 0
    %1128 = vmatpush.bf16.xpose.msra.mxu0 0
    %1129 = vmatpush.bf16.xpose.msra.mxu0 0
    %1130 = vmatpush.bf16.xpose.msra.mxu0 0
    %1131 = vmatpush.bf16.xpose.msra.mxu0 %v1122
    %1132 = vmatmul.bf16.gmra.mxu0 %v1119
    %v1133 = vpop.f32.mrf.mxu0
    %v1134 = vadd.f32 %v279, %v1133
    %v1135 = vpop.f32.mrf.mxu0
    %1136 = vdwg.mxu0
    %v1139 = vunpack.c.l.b16 %v1111
    %v1140 = vunpack.c.l.b16 %v1112
    %v1141 = vpack.c.b16 %v1140, %v1139
    %v1143 = vsel %vm401, %v1108, 0
    %v1146 = vsel %vm401, %v1141, 0
    %1148 = vmatpush.bf16.xpose.msra.mxu0 0
    %1149 = vmatpush.bf16.xpose.msra.mxu0 0
    %1150 = vmatpush.bf16.xpose.msra.mxu0 0
    %1151 = vmatpush.bf16.xpose.msra.mxu0 0
    %1152 = vmatpush.bf16.xpose.msra.mxu0 0
    %1153 = vmatpush.bf16.xpose.msra.mxu0 0
    %1154 = vmatpush.bf16.xpose.msra.mxu0 0
    %1155 = vmatpush.bf16.xpose.msra.mxu0 %v1146
    %1156 = vmatmul.bf16.gmra.mxu0 %v1143
    %v1157 = vpop.f32.mrf.mxu0
    %v1158 = vadd.f32 %v280, %v1157
    %v1159 = vpop.f32.mrf.mxu0
    %1160 = vdwg.mxu0
    %v1161 = vsel %vm898, %v1134, -inf
    %1162 = vmax.xlane.f32.xlu0 %v1161
    %v1163 = vpop.xlane.xlu0 %1162
    %v1164 = vsel %vm898, %v1158, -inf
    %1165 = vmax.xlane.f32.xlu0 %v1164
    %v1166 = vpop.xlane.xlu0 %1165
    %v1167 = vsub.f32 %v1134, %v1163
    %v1168 = vsub.f32 %v1158, %v1166
    %v1169 = vmul.f32 %v1167, 1.442695
    %v1170 = vpow.pop %v1169
    %v1171 = vmul.f32 %v1168, 1.442695
    %v1172 = vpow.pop %v1171
    %v1173 = vsel %vm898, %v1170, 0.0
    %1174 = vadd.xlane.f32.xlu0 %v1173
    %v1175 = vpop.xlane.xlu0 %1174
    %v1176 = vsel %vm898, %v1172, 0.0
    %1177 = vadd.xlane.f32.xlu0 %v1176
    %v1178 = vpop.xlane.xlu0 %1177
    %v1179 = vrcp.pop %v1175
    %v1180 = vrcp.pop %v1178
    %v1181 = vmul.f32 %v1170, %v1179
    %v1182 = vmul.f32 %v1172, %v1180
    %v1183 = vpack.c.bf16 %v1181, %v1181
    %v1184 = vpack.c.bf16 %v1182, %v1182
    %1185 = vrot.lane.b32.xlu0 %v1117, 96
    %v1186 = vpop.permute.xlu0 %1185
    %v1189 = vsel %vm898, %v1183, 0
    %1191 = vmatpush.bf16.msra.mxu0 0
    %1192 = vmatpush.bf16.msra.mxu0 0
    %1193 = vmatpush.bf16.msra.mxu0 0
    %1194 = vmatpush.bf16.msra.mxu0 0
    %1195 = vmatpush.bf16.msra.mxu0 0
    %1196 = vmatpush.bf16.msra.mxu0 0
    %1197 = vmatpush.bf16.msra.mxu0 0
    %1198 = vmatpush.bf16.msra.mxu0 %v1186
    %1199 = vmatmul.bf16.gmra.mxu0 %v1189
    %v1200 = vpop.f32.mrf.mxu0
    %v1201 = vadd.f32 0.0, %v1200
    %v1202 = vpop.f32.mrf.mxu0
    %1203 = vdwg.mxu0
    %1204 = vrot.lane.b32.xlu0 %v1141, 96
    %v1205 = vpop.permute.xlu0 %1204
    %v1208 = vsel %vm898, %v1184, 0
    %1210 = vmatpush.bf16.msra.mxu0 0
    %1211 = vmatpush.bf16.msra.mxu0 0
    %1212 = vmatpush.bf16.msra.mxu0 0
    %1213 = vmatpush.bf16.msra.mxu0 0
    %1214 = vmatpush.bf16.msra.mxu0 0
    %1215 = vmatpush.bf16.msra.mxu0 0
    %1216 = vmatpush.bf16.msra.mxu0 0
    %1217 = vmatpush.bf16.msra.mxu0 %v1205
    %1218 = vmatmul.bf16.gmra.mxu0 %v1208
    %v1219 = vpop.f32.mrf.mxu0
    %v1220 = vadd.f32 0.0, %v1219
    %v1221 = vpop.f32.mrf.mxu0
    %1222 = vdwg.mxu0
    %v1223 = vpack.c.bf16 %v1201, %v1201
    %v1224 = vpack.c.bf16 %v1220, %v1220
    %v1226 = vunpack.c.l.b16 %v1107
    %v1227 = vpack.c.b16 %v1226, %v1226
    %1228 = vrot.lane.b32.xlu0 %v1227, 120
    %v1229 = vpop.permute.xlu0 %1228
    %1230 = vrot.lane.b32.xlu0 %v1117, 120
    %v1231 = vpop.permute.xlu0 %1230
    %v1233 = vsel %vm401, %v1229, 0
    %v1236 = vsel %vm401, %v1231, 0
    %1238 = vmatpush.bf16.xpose.msra.mxu0 0
    %1239 = vmatpush.bf16.xpose.msra.mxu0 0
    %1240 = vmatpush.bf16.xpose.msra.mxu0 0
    %1241 = vmatpush.bf16.xpose.msra.mxu0 0
    %1242 = vmatpush.bf16.xpose.msra.mxu0 0
    %1243 = vmatpush.bf16.xpose.msra.mxu0 0
    %1244 = vmatpush.bf16.xpose.msra.mxu0 0
    %1245 = vmatpush.bf16.xpose.msra.mxu0 %v1236
    %1246 = vmatmul.bf16.gmra.mxu0 %v1233
    %v1247 = vpop.f32.mrf.mxu0
    %v1248 = vadd.f32 %v279, %v1247
    %v1249 = vpop.f32.mrf.mxu0
    %1250 = vdwg.mxu0
    %v1252 = vunpack.c.l.b16 %v1108
    %v1253 = vpack.c.b16 %v1252, %v1252
    %1254 = vrot.lane.b32.xlu0 %v1253, 120
    %v1255 = vpop.permute.xlu0 %1254
    %1256 = vrot.lane.b32.xlu0 %v1141, 120
    %v1257 = vpop.permute.xlu0 %1256
    %v1259 = vsel %vm401, %v1255, 0
    %v1262 = vsel %vm401, %v1257, 0
    %1264 = vmatpush.bf16.xpose.msra.mxu0 0
    %1265 = vmatpush.bf16.xpose.msra.mxu0 0
    %1266 = vmatpush.bf16.xpose.msra.mxu0 0
    %1267 = vmatpush.bf16.xpose.msra.mxu0 0
    %1268 = vmatpush.bf16.xpose.msra.mxu0 0
    %1269 = vmatpush.bf16.xpose.msra.mxu0 0
    %1270 = vmatpush.bf16.xpose.msra.mxu0 0
    %1271 = vmatpush.bf16.xpose.msra.mxu0 %v1262
    %1272 = vmatmul.bf16.gmra.mxu0 %v1259
    %v1273 = vpop.f32.mrf.mxu0
    %v1274 = vadd.f32 %v280, %v1273
    %v1275 = vpop.f32.mrf.mxu0
    %1276 = vdwg.mxu0
    %v1277 = vsel %vm898, %v1248, -inf
    %1278 = vmax.xlane.f32.xlu0 %v1277
    %v1279 = vpop.xlane.xlu0 %1278
    %v1280 = vsel %vm898, %v1274, -inf
    %1281 = vmax.xlane.f32.xlu0 %v1280
    %v1282 = vpop.xlane.xlu0 %1281
    %v1283 = vsub.f32 %v1248, %v1279
    %v1284 = vsub.f32 %v1274, %v1282
    %v1285 = vmul.f32 %v1283, 1.442695
    %v1286 = vpow.pop %v1285
    %v1287 = vmul.f32 %v1284, 1.442695
    %v1288 = vpow.pop %v1287
    %v1289 = vsel %vm898, %v1286, 0.0
    %1290 = vadd.xlane.f32.xlu0 %v1289
    %v1291 = vpop.xlane.xlu0 %1290
    %v1292 = vsel %vm898, %v1288, 0.0
    %1293 = vadd.xlane.f32.xlu0 %v1292
    %v1294 = vpop.xlane.xlu0 %1293
    %v1295 = vrcp.pop %v1291
    %v1296 = vrcp.pop %v1294
    %v1297 = vmul.f32 %v1286, %v1295
    %v1298 = vmul.f32 %v1288, %v1296
    %v1299 = vpack.c.bf16 %v1297, %v1297
    %v1300 = vpack.c.bf16 %v1298, %v1298
    %1301 = vrot.lane.b32.xlu0 %v1117, 88
    %v1302 = vpop.permute.xlu0 %1301
    %v1305 = vsel %vm898, %v1299, 0
    %1307 = vmatpush.bf16.msra.mxu0 0
    %1308 = vmatpush.bf16.msra.mxu0 0
    %1309 = vmatpush.bf16.msra.mxu0 0
    %1310 = vmatpush.bf16.msra.mxu0 0
    %1311 = vmatpush.bf16.msra.mxu0 0
    %1312 = vmatpush.bf16.msra.mxu0 0
    %1313 = vmatpush.bf16.msra.mxu0 0
    %1314 = vmatpush.bf16.msra.mxu0 %v1302
    %1315 = vmatmul.bf16.gmra.mxu0 %v1305
    %v1316 = vpop.f32.mrf.mxu0
    %v1317 = vadd.f32 0.0, %v1316
    %v1318 = vpop.f32.mrf.mxu0
    %1319 = vdwg.mxu0
    %1320 = vrot.lane.b32.xlu0 %v1141, 88
    %v1321 = vpop.permute.xlu0 %1320
    %v1324 = vsel %vm898, %v1300, 0
    %1326 = vmatpush.bf16.msra.mxu0 0
    %1327 = vmatpush.bf16.msra.mxu0 0
    %1328 = vmatpush.bf16.msra.mxu0 0
    %1329 = vmatpush.bf16.msra.mxu0 0
    %1330 = vmatpush.bf16.msra.mxu0 0
    %1331 = vmatpush.bf16.msra.mxu0 0
    %1332 = vmatpush.bf16.msra.mxu0 0
    %1333 = vmatpush.bf16.msra.mxu0 %v1321
    %1334 = vmatmul.bf16.gmra.mxu0 %v1324
    %v1335 = vpop.f32.mrf.mxu0
    %v1336 = vadd.f32 0.0, %v1335
    %v1337 = vpop.f32.mrf.mxu0
    %1338 = vdwg.mxu0
    %v1339 = vpack.c.bf16 %v1317, %v1317
    %v1340 = vpack.c.bf16 %v1336, %v1336
    %1341 = vrot.lane.b32.xlu0 %v1227, 112
    %v1342 = vpop.permute.xlu0 %1341
    %1343 = vrot.lane.b32.xlu0 %v1117, 112
    %v1344 = vpop.permute.xlu0 %1343
    %v1346 = vsel %vm401, %v1342, 0
    %v1349 = vsel %vm401, %v1344, 0
    %1351 = vmatpush.bf16.xpose.msra.mxu0 0
    %1352 = vmatpush.bf16.xpose.msra.mxu0 0
    %1353 = vmatpush.bf16.xpose.msra.mxu0 0
    %1354 = vmatpush.bf16.xpose.msra.mxu0 0
    %1355 = vmatpush.bf16.xpose.msra.mxu0 0
    %1356 = vmatpush.bf16.xpose.msra.mxu0 0
    %1357 = vmatpush.bf16.xpose.msra.mxu0 0
    %1358 = vmatpush.bf16.xpose.msra.mxu0 %v1349
    %1359 = vmatmul.bf16.gmra.mxu0 %v1346
    %v1360 = vpop.f32.mrf.mxu0
    %v1361 = vadd.f32 %v279, %v1360
    %v1362 = vpop.f32.mrf.mxu0
    %1363 = vdwg.mxu0
    %1364 = vrot.lane.b32.xlu0 %v1253, 112
    %v1365 = vpop.permute.xlu0 %1364
    %1366 = vrot.lane.b32.xlu0 %v1141, 112
    %v1367 = vpop.permute.xlu0 %1366
    %v1369 = vsel %vm401, %v1365, 0
    %v1372 = vsel %vm401, %v1367, 0
    %1374 = vmatpush.bf16.xpose.msra.mxu0 0
    %1375 = vmatpush.bf16.xpose.msra.mxu0 0
    %1376 = vmatpush.bf16.xpose.msra.mxu0 0
    %1377 = vmatpush.bf16.xpose.msra.mxu0 0
    %1378 = vmatpush.bf16.xpose.msra.mxu0 0
    %1379 = vmatpush.bf16.xpose.msra.mxu0 0
    %1380 = vmatpush.bf16.xpose.msra.mxu0 0
    %1381 = vmatpush.bf16.xpose.msra.mxu0 %v1372
    %1382 = vmatmul.bf16.gmra.mxu0 %v1369
    %v1383 = vpop.f32.mrf.mxu0
    %v1384 = vadd.f32 %v280, %v1383
    %v1385 = vpop.f32.mrf.mxu0
    %1386 = vdwg.mxu0
    %v1387 = vsel %vm898, %v1361, -inf
    %1388 = vmax.xlane.f32.xlu0 %v1387
    %v1389 = vpop.xlane.xlu0 %1388
    %v1390 = vsel %vm898, %v1384, -inf
    %1391 = vmax.xlane.f32.xlu0 %v1390
    %v1392 = vpop.xlane.xlu0 %1391
    %v1393 = vsub.f32 %v1361, %v1389
    %v1394 = vsub.f32 %v1384, %v1392
    %v1395 = vmul.f32 %v1393, 1.442695
    %v1396 = vpow.pop %v1395
    %v1397 = vmul.f32 %v1394, 1.442695
    %v1398 = vpow.pop %v1397
    %v1399 = vsel %vm898, %v1396, 0.0
    %1400 = vadd.xlane.f32.xlu0 %v1399
    %v1401 = vpop.xlane.xlu0 %1400
    %v1402 = vsel %vm898, %v1398, 0.0
    %1403 = vadd.xlane.f32.xlu0 %v1402
    %v1404 = vpop.xlane.xlu0 %1403
    %v1405 = vrcp.pop %v1401
    %v1406 = vrcp.pop %v1404
    %v1407 = vmul.f32 %v1396, %v1405
    %v1408 = vmul.f32 %v1398, %v1406
    %v1409 = vpack.c.bf16 %v1407, %v1407
    %v1410 = vpack.c.bf16 %v1408, %v1408
    %1411 = vrot.lane.b32.xlu0 %v1117, 80
    %v1412 = vpop.permute.xlu0 %1411
    %v1415 = vsel %vm898, %v1409, 0
    %1417 = vmatpush.bf16.msra.mxu0 0
    %1418 = vmatpush.bf16.msra.mxu0 0
    %1419 = vmatpush.bf16.msra.mxu0 0
    %1420 = vmatpush.bf16.msra.mxu0 0
    %1421 = vmatpush.bf16.msra.mxu0 0
    %1422 = vmatpush.bf16.msra.mxu0 0
    %1423 = vmatpush.bf16.msra.mxu0 0
    %1424 = vmatpush.bf16.msra.mxu0 %v1412
    %1425 = vmatmul.bf16.gmra.mxu0 %v1415
    %v1426 = vpop.f32.mrf.mxu0
    %v1427 = vadd.f32 0.0, %v1426
    %v1428 = vpop.f32.mrf.mxu0
    %1429 = vdwg.mxu0
    %1430 = vrot.lane.b32.xlu0 %v1141, 80
    %v1431 = vpop.permute.xlu0 %1430
    %v1434 = vsel %vm898, %v1410, 0
    %1436 = vmatpush.bf16.msra.mxu0 0
    %1437 = vmatpush.bf16.msra.mxu0 0
    %1438 = vmatpush.bf16.msra.mxu0 0
    %1439 = vmatpush.bf16.msra.mxu0 0
    %1440 = vmatpush.bf16.msra.mxu0 0
    %1441 = vmatpush.bf16.msra.mxu0 0
    %1442 = vmatpush.bf16.msra.mxu0 0
    %1443 = vmatpush.bf16.msra.mxu0 %v1431
    %1444 = vmatmul.bf16.gmra.mxu0 %v1434
    %v1445 = vpop.f32.mrf.mxu0
    %v1446 = vadd.f32 0.0, %v1445
    %v1447 = vpop.f32.mrf.mxu0
    %1448 = vdwg.mxu0
    %v1449 = vpack.c.bf16 %v1427, %v1427
    %v1450 = vpack.c.bf16 %v1446, %v1446
    %1451 = vrot.lane.b32.xlu0 %v1227, 104
    %v1452 = vpop.permute.xlu0 %1451
    %1453 = vrot.lane.b32.xlu0 %v1117, 104
    %v1454 = vpop.permute.xlu0 %1453
    %v1456 = vsel %vm401, %v1452, 0
    %v1459 = vsel %vm401, %v1454, 0
    %1461 = vmatpush.bf16.xpose.msra.mxu0 0
    %1462 = vmatpush.bf16.xpose.msra.mxu0 0
    %1463 = vmatpush.bf16.xpose.msra.mxu0 0
    %1464 = vmatpush.bf16.xpose.msra.mxu0 0
    %1465 = vmatpush.bf16.xpose.msra.mxu0 0
    %1466 = vmatpush.bf16.xpose.msra.mxu0 0
    %1467 = vmatpush.bf16.xpose.msra.mxu0 0
    %1468 = vmatpush.bf16.xpose.msra.mxu0 %v1459
    %1469 = vmatmul.bf16.gmra.mxu0 %v1456
    %v1470 = vpop.f32.mrf.mxu0
    %v1471 = vadd.f32 %v279, %v1470
    %v1472 = vpop.f32.mrf.mxu0
    %1473 = vdwg.mxu0
    %1474 = vrot.lane.b32.xlu0 %v1253, 104
    %v1475 = vpop.permute.xlu0 %1474
    %1476 = vrot.lane.b32.xlu0 %v1141, 104
    %v1477 = vpop.permute.xlu0 %1476
    %v1479 = vsel %vm401, %v1475, 0
    %v1482 = vsel %vm401, %v1477, 0
    %1484 = vmatpush.bf16.xpose.msra.mxu0 0
    %1485 = vmatpush.bf16.xpose.msra.mxu0 0
    %1486 = vmatpush.bf16.xpose.msra.mxu0 0
    %1487 = vmatpush.bf16.xpose.msra.mxu0 0
    %1488 = vmatpush.bf16.xpose.msra.mxu0 0
    %1489 = vmatpush.bf16.xpose.msra.mxu0 0
    %1490 = vmatpush.bf16.xpose.msra.mxu0 0
    %1491 = vmatpush.bf16.xpose.msra.mxu0 %v1482
    %1492 = vmatmul.bf16.gmra.mxu0 %v1479
    %v1493 = vpop.f32.mrf.mxu0
    %v1494 = vadd.f32 %v280, %v1493
    %v1495 = vpop.f32.mrf.mxu0
    %1496 = vdwg.mxu0
    %v1497 = vsel %vm898, %v1471, -inf
    %1498 = vmax.xlane.f32.xlu0 %v1497
    %v1499 = vpop.xlane.xlu0 %1498
    %v1500 = vsel %vm898, %v1494, -inf
    %1501 = vmax.xlane.f32.xlu0 %v1500
    %v1502 = vpop.xlane.xlu0 %1501
    %v1503 = vsub.f32 %v1471, %v1499
    %v1504 = vsub.f32 %v1494, %v1502
    %v1505 = vmul.f32 %v1503, 1.442695
    %v1506 = vpow.pop %v1505
    %v1507 = vmul.f32 %v1504, 1.442695
    %v1508 = vpow.pop %v1507
    %v1509 = vsel %vm898, %v1506, 0.0
    %1510 = vadd.xlane.f32.xlu0 %v1509
    %v1511 = vpop.xlane.xlu0 %1510
    %v1512 = vsel %vm898, %v1508, 0.0
    %1513 = vadd.xlane.f32.xlu0 %v1512
    %v1514 = vpop.xlane.xlu0 %1513
    %v1515 = vrcp.pop %v1511
    %v1516 = vrcp.pop %v1514
    %v1517 = vmul.f32 %v1506, %v1515
    %v1518 = vmul.f32 %v1508, %v1516
    %v1519 = vpack.c.bf16 %v1517, %v1517
    %v1520 = vpack.c.bf16 %v1518, %v1518
    %1521 = vrot.lane.b32.xlu0 %v1117, 72
    %v1522 = vpop.permute.xlu0 %1521
    %v1525 = vsel %vm898, %v1519, 0
    %1527 = vmatpush.bf16.msra.mxu0 0
    %1528 = vmatpush.bf16.msra.mxu0 0
    %1529 = vmatpush.bf16.msra.mxu0 0
    %1530 = vmatpush.bf16.msra.mxu0 0
    %1531 = vmatpush.bf16.msra.mxu0 0
    %1532 = vmatpush.bf16.msra.mxu0 0
    %1533 = vmatpush.bf16.msra.mxu0 0
    %1534 = vmatpush.bf16.msra.mxu0 %v1522
    %1535 = vmatmul.bf16.gmra.mxu0 %v1525
    %v1536 = vpop.f32.mrf.mxu0
    %v1537 = vadd.f32 0.0, %v1536
    %v1538 = vpop.f32.mrf.mxu0
    %1539 = vdwg.mxu0
    %1540 = vrot.lane.b32.xlu0 %v1141, 72
    %v1541 = vpop.permute.xlu0 %1540
    %v1544 = vsel %vm898, %v1520, 0
    %1546 = vmatpush.bf16.msra.mxu0 0
    %1547 = vmatpush.bf16.msra.mxu0 0
    %1548 = vmatpush.bf16.msra.mxu0 0
    %1549 = vmatpush.bf16.msra.mxu0 0
    %1550 = vmatpush.bf16.msra.mxu0 0
    %1551 = vmatpush.bf16.msra.mxu0 0
    %1552 = vmatpush.bf16.msra.mxu0 0
    %1553 = vmatpush.bf16.msra.mxu0 %v1541
    %1554 = vmatmul.bf16.gmra.mxu0 %v1544
    %v1555 = vpop.f32.mrf.mxu0
    %v1556 = vadd.f32 0.0, %v1555
    %v1557 = vpop.f32.mrf.mxu0
    %1558 = vdwg.mxu0
    %v1559 = vpack.c.bf16 %v1537, %v1537
    %v1560 = vpack.c.bf16 %v1556, %v1556
    %v1563 = vunpack.c.l.b16 %v1339
    %v1564 = vunpack.c.l.b16 %v1340
    %v1565 = vpack.c.b16 %v1563, %v1563
    %v1566 = vpack.c.b16 %v1564, %v1564
    %1567 = vrot.lane.b32.xlu0 %v1565, 8
    %v1568 = vpop.permute.xlu0 %1567
    %1569 = vrot.lane.b32.xlu0 %v1566, 8
    %v1570 = vpop.permute.xlu0 %1569
    %v1573 = vunpack.c.l.b16 %v1449
    %v1574 = vunpack.c.l.b16 %v1450
    %v1575 = vpack.c.b16 %v1573, %v1573
    %v1576 = vpack.c.b16 %v1574, %v1574
    %1577 = vrot.lane.b32.xlu0 %v1575, 16
    %v1578 = vpop.permute.xlu0 %1577
    %1579 = vrot.lane.b32.xlu0 %v1576, 16
    %v1580 = vpop.permute.xlu0 %1579
    %v1583 = vunpack.c.l.b16 %v1559
    %v1584 = vunpack.c.l.b16 %v1560
    %v1585 = vpack.c.b16 %v1583, %v1583
    %v1586 = vpack.c.b16 %v1584, %v1584
    %1587 = vrot.lane.b32.xlu0 %v1585, 24
    %v1588 = vpop.permute.xlu0 %1587
    %1589 = vrot.lane.b32.xlu0 %v1586, 24
    %v1590 = vpop.permute.xlu0 %1589
    %v1593 = vsel %vm401, %v1223, %v1568
    %v1596 = vsel %vm401, %v1224, %v1570
    %v1598 = vsel %vm898, %v1593, %v1578
    %v1600 = vsel %vm898, %v1596, %v1580
    %v1602 = vsel %vm903, %v1598, %v1588
    %v1604 = vsel %vm903, %v1600, %v1590
    %v1606 = vperm.slane %v1104, 0
    %v1610 = vunpack.c.l.b16 %v1602
    %v1611 = vunpack.c.l.b16 %v1604
    %v1612 = vpack.c.b16 %v1611, %v1610
    %v1617 = vunpack.c.l.b16 %v1100
    %v1618 = vunpack.c.l.b16 %v1101
    %v1619 = vunpack.c.l.b16 %v1102
    %v1620 = vunpack.c.l.b16 %v1103
    %v1621 = vpack.c.b16 %v1618, %v1617
    %v1622 = vpack.c.b16 %v1620, %v1619
    %v1626 = vsel %vm283, %v1612, 0
    %1628 = vmatpush.bf16.msra.mxu0 0
    %1629 = vmatpush.bf16.msra.mxu0 0
    %1630 = vmatpush.bf16.msra.mxu0 0
    %1631 = vmatpush.bf16.msra.mxu0 0
    %1632 = vmatpush.bf16.msra.mxu0 0
    %1633 = vmatpush.bf16.msra.mxu0 0
    %1634 = vmatpush.bf16.msra.mxu0 %v1622
    %1635 = vmatpush.bf16.msra.mxu0 %v1621
    %1636 = vmatmul.bf16.gmra.mxu0 %v1626
    %v1637 = vpop.f32.mrf.mxu0
    %v1638 = vadd.f32 %v1606, %v1637
    %v1639 = vpop.f32.mrf.mxu0
    %v1640 = vadd.f32 %v1606, %v1639
    %1641 = vdwg.mxu0
    %v1642 = vadd.f32 %v945, %v1638
    %v1643 = vadd.f32 %v946, %v1640
    %v1644 = vld [vmem:[#allocation16] sm:$0x1]
    %v1645 = vld [vmem:[#allocation17] sm:$0x1]
    %v1646 = vsel %vm283, %v1642, 0.0
    %1647 = vadd.xlane.f32.xlu0 %v1646
    %v1648 = vpop.xlane.xlu0 %1647
    %v1649 = vsel %vm283, %v1643, 0.0
    %1650 = vadd.xlane.f32.xlu0 %v1649
    %v1651 = vpop.xlane.xlu0 %1650
    %v1652 = vmul.f32 %v1648, %v296
    %v1653 = vmul.f32 %v1651, %v296
    %v1654 = vsub.f32 %v1642, %v1652
    %v1655 = vsub.f32 %v1643, %v1653
    %v1656 = vmul.f32 %v1654, %v1654
    %v1657 = vmul.f32 %v1655, %v1655
    %v1658 = vsel %vm283, %v1656, 0.0
    %1659 = vadd.xlane.f32.xlu0 %v1658
    %v1660 = vpop.xlane.xlu0 %1659
    %v1661 = vsel %vm283, %v1657, 0.0
    %1662 = vadd.xlane.f32.xlu0 %v1661
    %v1663 = vpop.xlane.xlu0 %1662
    %v1664 = vmul.f32 %v1660, %v296
    %v1665 = vmul.f32 %v1663, %v296
    %v1666 = vadd.f32 %v1664, 1e-05
    %v1667 = vadd.f32 %v1665, 1e-05
    %v1668 = vrsqrt.pop %v1666
    %v1669 = vmul.f32 %v1668, %v1666
    %v1670 = vmul.f32 %v1669, %v1668
    %v1671 = vmul.f32 0.5, %v1670
    %v1672 = vsub.f32 1.5, %v1671
    %v1673 = vmul.f32 %v1668, %v1672
    %vm1674 = vweird.f32 %v1666
    %vm1675 = vweird.f32 %v1668
    %vm1676 = vmor %vm1674, %vm1675
    %v1677 = vsel %vm1676, %v1668, %v1673
    %v1678 = vrsqrt.pop %v1667
    %v1679 = vmul.f32 %v1678, %v1667
    %v1680 = vmul.f32 %v1679, %v1678
    %v1681 = vmul.f32 0.5, %v1680
    %v1682 = vsub.f32 1.5, %v1681
    %v1683 = vmul.f32 %v1678, %v1682
    %vm1684 = vweird.f32 %v1667
    %vm1685 = vweird.f32 %v1678
    %vm1686 = vmor %vm1684, %vm1685
    %v1687 = vsel %vm1686, %v1678, %v1683
    %v1688 = vmul.f32 %v1654, %v1677
    %v1689 = vmul.f32 %v1655, %v1687
    %v1691 = vperm.slane %v1644, 0
    %v1693 = vmul.f32 %v1688, %v1691
    %v1694 = vmul.f32 %v1689, %v1691
    %v1696 = vperm.slane %v1645, 0
    %v1698 = vadd.f32 %v1693, %v1696
    %v1699 = vadd.f32 %v1694, %v1696
    %v1700 = vpack.c.bf16 %v1699, %v1698
    %v1701 = vld [vmem:[#allocation19] sm:$0xf]
    %v1702 = vld [vmem:[#allocation19 + $0x4] sm:$0xf]
    %v1703 = vld [vmem:[#allocation19 + $0x8] sm:$0xf]
    %v1704 = vld [vmem:[#allocation19 + $0xc] sm:$0xf]
    %v1705 = vld [vmem:[#allocation20] sm:$0x1]
    %v1707 = vperm.slane %v1705, 0
    %v1713 = vunpack.c.l.b16 %v1701
    %v1714 = vunpack.c.l.b16 %v1702
    %v1715 = vunpack.c.l.b16 %v1703
    %v1716 = vunpack.c.l.b16 %v1704
    %v1717 = vpack.c.b16 %v1714, %v1713
    %v1718 = vpack.c.b16 %v1716, %v1715
    %v1722 = vsel %vm283, %v1700, 0
    %1724 = vmatpush.bf16.msra.mxu0 0
    %1725 = vmatpush.bf16.msra.mxu0 0
    %1726 = vmatpush.bf16.msra.mxu0 0
    %1727 = vmatpush.bf16.msra.mxu0 0
    %1728 = vmatpush.bf16.msra.mxu0 0
    %1729 = vmatpush.bf16.msra.mxu0 0
    %1730 = vmatpush.bf16.msra.mxu0 %v1718
    %1731 = vmatpush.bf16.msra.mxu0 %v1717
    %1732 = vmatmul.bf16.gmra.mxu0 %v1722
    %v1733 = vpop.f32.mrf.mxu0
    %v1734 = vadd.f32 %v1707, %v1733
    %v1735 = vpop.f32.mrf.mxu0
    %v1736 = vadd.f32 %v1707, %v1735
    %1737 = vdwg.mxu0
    %v1738 = vmul.f32 %v1734, 1.702
    %v1739 = vmul.f32 %v1736, 1.702
    %v1740 = vxor.u32 %v1738, 2147483648
    %v1741 = vxor.u32 %v1739, 2147483648
    %v1742 = vmul.f32 %v1740, 1.442695
    %v1743 = vpow.pop %v1742
    %v1744 = vmul.f32 %v1741, 1.442695
    %v1745 = vpow.pop %v1744
    %v1746 = vadd.f32 %v1743, 1.0
    %v1747 = vadd.f32 %v1745, 1.0
    %v1748 = vrcp.pop %v1746
    %v1749 = vmul.f32 %v1746, %v1748
    %v1750 = vsub.f32 1.0, %v1749
    %v1751 = vmul.f32 %v1748, %v1750
    %v1752 = vadd.f32 %v1748, %v1751
    %vm1753 = vweird.f32 %v1746
    %vm1754 = vweird.f32 %v1748
    %vm1755 = vmor %vm1753, %vm1754
    %v1756 = vsel %vm1755, %v1748, %v1752
    %v1757 = vand.u32 2147483647, %v1746
    %vm1758 = vcmp.eq.f32.partialorder %v1757, 8.507059e+37
    %v1759 = vand.u32 %v1746, 2147483648
    %v1760 = vor.u32 1.1754944e-38, %v1759
    %v1761 = vsel %vm1758, %v1760, %v1756
    %v1762 = vmul.f32 1.0, %v1761
    %v1763 = vrcp.pop %v1747
    %v1764 = vmul.f32 %v1747, %v1763
    %v1765 = vsub.f32 1.0, %v1764
    %v1766 = vmul.f32 %v1763, %v1765
    %v1767 = vadd.f32 %v1763, %v1766
    %vm1768 = vweird.f32 %v1747
    %vm1769 = vweird.f32 %v1763
    %vm1770 = vmor %vm1768, %vm1769
    %v1771 = vsel %vm1770, %v1763, %v1767
    %v1772 = vand.u32 2147483647, %v1747
    %vm1773 = vcmp.eq.f32.partialorder %v1772, 8.507059e+37
    %v1774 = vand.u32 %v1747, 2147483648
    %v1775 = vor.u32 1.1754944e-38, %v1774
    %v1776 = vsel %vm1773, %v1775, %v1771
    %v1777 = vmul.f32 1.0, %v1776
    %v1778 = vmul.f32 %v1734, %v1762
    %v1779 = vmul.f32 %v1736, %v1777
    %v1780 = vpack.c.bf16 %v1779, %v1778
    %v1781 = vld [vmem:[%s22] sm:$0xf]
    %v1782 = vld [vmem:[%s22 + $0x4] sm:$0xf]
    %v1783 = vld [vmem:[%s22 + $0x8] sm:$0xf]
    %v1784 = vld [vmem:[%s22 + $0xc] sm:$0xf]
    %v1785 = vld [vmem:[%s22 + $0x10] sm:$0xf]
    %v1786 = vld [vmem:[%s22 + $0x14] sm:$0xf]
    %v1787 = vld [vmem:[%s22 + $0x18] sm:$0xf]
    %v1788 = vld [vmem:[%s22 + $0x1c] sm:$0xf]
    %v1789 = vld [vmem:[%s22 + $0x20] sm:$0xf]
    %v1790 = vld [vmem:[%s22 + $0x24] sm:$0xf]
    %v1791 = vld [vmem:[%s22 + $0x28] sm:$0xf]
    %v1792 = vld [vmem:[%s22 + $0x2c] sm:$0xf]
    %v1793 = vld [vmem:[%s22 + $0x30] sm:$0xf]
    %v1794 = vld [vmem:[%s22 + $0x34] sm:$0xf]
    %v1795 = vld [vmem:[%s22 + $0x38] sm:$0xf]
    %v1796 = vld [vmem:[%s22 + $0x3c] sm:$0xf]
    %v1797 = vld [vmem:[#allocation22] sm:$0x1]
    %v1799 = vperm.slane %v1797, 0
    %v1817 = vunpack.c.l.b16 %v1781
    %v1818 = vunpack.c.l.b16 %v1782
    %v1819 = vunpack.c.l.b16 %v1783
    %v1820 = vunpack.c.l.b16 %v1784
    %v1821 = vunpack.c.l.b16 %v1785
    %v1822 = vunpack.c.l.b16 %v1786
    %v1823 = vunpack.c.l.b16 %v1787
    %v1824 = vunpack.c.l.b16 %v1788
    %v1825 = vunpack.c.l.b16 %v1789
    %v1826 = vunpack.c.l.b16 %v1790
    %v1827 = vunpack.c.l.b16 %v1791
    %v1828 = vunpack.c.l.b16 %v1792
    %v1829 = vunpack.c.l.b16 %v1793
    %v1830 = vunpack.c.l.b16 %v1794
    %v1831 = vunpack.c.l.b16 %v1795
    %v1832 = vunpack.c.l.b16 %v1796
    %v1833 = vpack.c.b16 %v1818, %v1817
    %v1834 = vpack.c.b16 %v1820, %v1819
    %v1835 = vpack.c.b16 %v1822, %v1821
    %v1836 = vpack.c.b16 %v1824, %v1823
    %v1837 = vpack.c.b16 %v1826, %v1825
    %v1838 = vpack.c.b16 %v1828, %v1827
    %v1839 = vpack.c.b16 %v1830, %v1829
    %v1840 = vpack.c.b16 %v1832, %v1831
    %1849 = vmatpush.bf16.msra.mxu0 %v1840
    %1850 = vmatpush.bf16.msra.mxu0 %v1839
    %1851 = vmatpush.bf16.msra.mxu0 %v1838
    %1852 = vmatpush.bf16.msra.mxu0 %v1837
    %1853 = vmatpush.bf16.msra.mxu0 %v1836
    %1854 = vmatpush.bf16.msra.mxu0 %v1835
    %1855 = vmatpush.bf16.msra.mxu0 %v1834
    %1856 = vmatpush.bf16.msra.mxu0 %v1833
    %1857 = vmatmul.bf16.gmra.mxu0 %v1780
    %v1858 = vpop.f32.mrf.mxu0
    %v1859 = vadd.f32 %v1799, %v1858
    %v1860 = vpop.f32.mrf.mxu0
    %v1861 = vadd.f32 %v1799, %v1860
    %1862 = vdwg.mxu0
    %v1863 = vadd.f32 %v1642, %v1859
    %v1864 = vadd.f32 %v1643, %v1861
    %1865 = vst.msk [vmem:[#allocation23] sm:$0xff] %vm283, %v1863
    %1866 = vst.msk [vmem:[#allocation23 + $0x8] sm:$0xff] %vm283, %v1864
    // Predicated region
    $region150: #{tpu_custom_call.1} parent=1 // pred_check
      _
    $region151: #{tpu_custom_call.1} parent=1 // pred_check_branch
      %1868 = sbr.rel (0) target = $region153
    $region152: #{tpu_custom_call.1} parent=1 // pred_region
      %1870 = vsyncadd [#allocation4], 0
      %s1871 = sshll.u32 [#allocation23], 4
      %s1872 = int_to_ptr.vmem [resolvable:$true] %s1871
      %s1873 = sshll.u32 %s24, 4
      %s1874 = int_to_ptr.hbm [resolvable:$true] %s1873
      %1879 = dma.vmem_to_hbm [thread:$0]  %s1872, 256, %s1874, [#allocation4], 128, 128, 8
    $region153: #{tpu_custom_call.1} parent=1 // pred_fallthru
      _
    // Predicated region
    $region154: #{tpu_custom_call.1} parent=1 // pred_check
      _
    $region155: #{tpu_custom_call.1} parent=1 // pred_check_branch
      %1881 = sbr.rel (0) target = $region157
    $region156: #{tpu_custom_call.1} parent=1 // pred_region
      %1883 = dma.done [#allocation4], 256
    $region157: #{tpu_custom_call.1} parent=1 // pred_fallthru
      _
    %1884 = vsyncpa [#allocation3], 1
    %1885 = vsyncpa [#allocation6], 1
    %1886 = vsyncpa [#allocation9], 1
    %1887 = vsyncpa [#allocation12], 1
    %1888 = vsyncpa [#allocation15], 1
    %1889 = vsyncpa [#allocation18], 1
    %1890 = vsyncpa [#allocation21], 1
    %1891 = vsyncpa [#allocation4], 1

</llo_original>
